<compile_context>
chip_gen: v6e
topology: v6e:2x2x1
jax: 0.10.0
libtpu: 0.0.40
codegen_flags: <defaults>
</compile_context>

<pallas_src>
import math

import jax
import jax.numpy as jnp
from jax import lax
from jax.experimental import pallas as pl
from jax.experimental.pallas import tpu as pltpu

SQRT_HALF = 0.7071067811865476
RGLRU_C = 8.0      # the `c` constant of Real_Gated_Linear_Recurrent_Unit


def _gelu_exact(x):
    # nn.GELU(approximate='none'):  0.5 * x * (1 + erf(x / sqrt(2)))
    # (kept exact to preserve module semantics; tanh-GELU would shift work
    #  to the EUP slot if the accuracy budget ever allows it)
    return 0.5 * x * (1.0 + lax.erf(x * SQRT_HALF))


def _round_up(n, m):
    return (n + m - 1) // m * m


def recurrent_block_kernel(x_ref, xh_ref, w12_ref, b12_ref, cw_ref, wax_ref,
                           bax_ref, dec_ref, w3_ref, b3_ref, o_ref,
                           ucar_ref, hcar_ref):
    """Grid = (batch, T-tiles); one (TT, C) sequence tile per grid step."""
    j = pl.program_id(1)
    nt = pl.num_programs(1)
    TT = x_ref.shape[1]
    C = wax_ref.shape[0]

    # New sequence: reset the cross-tile carries (conv left halo + RNN state).
    @pl.when(j == 0)
    def _():
        ucar_ref[...] = jnp.zeros_like(ucar_ref)
        hcar_ref[...] = jnp.zeros_like(hcar_ref)

    x2d = x_ref[0]                                       # (TT, D) matmul dtype

    # ---- fused p1|p2 projection: one MXU matmul, f32 accumulation ----
    p12 = jnp.dot(x2d, w12_ref[...],
                  preferred_element_type=jnp.float32) + b12_ref[...]
    x1 = _gelu_exact(p12[:, :C])                         # GELU gating branch
    u = p12[:, C:]                                       # conv / RGLRU branch (f32)

    # right conv halo u[t0+TT] = p2(x[t0+TT]); zeroed at the right edge
    ph = jnp.dot(xh_ref[0, 0:1, :], w12_ref[...],
                 preferred_element_type=jnp.float32) + b12_ref[...]
    not_last = (j + 1 < nt).astype(jnp.float32)
    u_next = ph[:, C:] * not_last                        # (1, C)

    u_m1 = ucar_ref[7:8, :]                              # u[t0-1] (left halo)
    u_m2 = ucar_ref[6:7, :]                              # u[t0-2]

    # ---- depthwise temporal conv: conv[t] = sum_k w[k] * u[t+k-2] ----
    # Unmasked sublane rolls; only boundary rows (0, 1, TT-1) are blended in
    # from the halo carries (no per-tap full-tile masking).
    cw = cw_ref[...]
    t_idx = lax.broadcasted_iota(jnp.int32, (TT, 1), 0)
    tap_m2 = jnp.where(t_idx >= 2, pltpu.roll(u, 2, 0),
                       jnp.where(t_idx == 0, u_m2, u_m1))           # u[t-2]
    tap_m1 = jnp.where(t_idx >= 1, pltpu.roll(u, 1, 0), u_m1)       # u[t-1]
    tap_p1 = jnp.where(t_idx < TT - 1, pltpu.roll(u, TT - 1, 0), u_next)  # u[t+1]
    conv = (tap_m2 * cw[0:1, :] + tap_m1 * cw[1:2, :]
            + u * cw[2:3, :] + tap_p1 * cw[3:4, :])

    # carry the last rows of u as the next tile's left halo (aligned (8,C) store)
    ucar_ref[...] = u[TT - 8:TT, :]

    # ---- fused RGLRU gate projections (one MXU matmul) ----
    gates = jnp.dot(conv.astype(wax_ref.dtype), wax_ref[...],
                    preferred_element_type=jnp.float32) + bax_ref[...]
    r_g = jax.nn.sigmoid(gates[:, :C])
    i_g = jax.nn.sigmoid(gates[:, C:])
    a = jnp.exp(dec_ref[...] * r_g)                      # dec = -c*softplus(-Lambda)
    g = jnp.sqrt(1.0 - a * a) * (i_g * conv)

    # ---- RG-LRU recurrence h_t = a_t*h_{t-1} + g_t as a parallel prefix scan --
    # Hillis-Steele over the whole (TT, C) tile: log2(TT) levels of full-tile
    # VPU work (rolls on the XLU slot) instead of a TT-long serial (1,C) chain.
    a_sc, g_sc = a, g
    d = 1
    while d < TT:                                        # static unroll
        a_sh = pltpu.roll(a_sc, d, 0)
        g_sh = pltpu.roll(g_sc, d, 0)
        m = t_idx >= d
        g_sc = jnp.where(m, g_sc + a_sc * g_sh, g_sc)
        a_sc = jnp.where(m, a_sc * a_sh, a_sc)
        d *= 2

    # fold in the cross-tile recurrence carry, then update it
    y_rnn = g_sc + a_sc * hcar_ref[...]
    hcar_ref[...] = y_rnn[TT - 1:TT, :]

    # ---- gate with GELU branch and project out (p3) ----
    y = x1 * y_rnn
    out = jnp.dot(y.astype(w3_ref.dtype), w3_ref[...],
                  preferred_element_type=jnp.float32) + b3_ref[...]
    o_ref[0] = out.astype(o_ref.dtype)


def _pick_t_tile(T, t_tile):
    tt = max(8, min(T, t_tile) // 8 * 8)
    while T % tt:
        tt -= 8
    return tt


def recurrent_block(x, params, matmul_dtype=jnp.bfloat16,
                    out_dtype=jnp.float32, t_tile=256):
    """out_dtype=jnp.bfloat16 halves output HBM/VMEM if f32 isn't required."""
    B, T, D = x.shape
    C = params["w1"].shape[1]
    if T % 8 != 0:
        raise ValueError("T must be a multiple of 8 (pad the sequence on host).")
    TT = _pick_t_tile(T, t_tile)
    NT = T // TT

    # lane padding: every matmul / store last-dim becomes a multiple of 128
    Dp = _round_up(D, 128)
    Cp = _round_up(C, 128)
    md = matmul_dtype

    def pad2(w, r, c, fill=0.0):
        return jnp.pad(w, ((0, r - w.shape[0]), (0, c - w.shape[1])),
                       constant_values=fill)

    # Host-side fusion / padding / hoisting (done once, outside the kernel):
    w12 = jnp.concatenate([pad2(params["w1"], Dp, Cp),
                           pad2(params["w2"], Dp, Cp)], axis=1).astype(md)
    b12 = jnp.concatenate([pad2(params["b1"], 1, Cp),
                           pad2(params["b2"], 1, Cp)], axis=1).astype(jnp.float32)
    wax = jnp.concatenate([pad2(params["wa"], Cp, Cp),
                           pad2(params["wx"], Cp, Cp)], axis=1).astype(md)
    bax = jnp.concatenate([pad2(params["ba"], 1, Cp),
                           pad2(params["bx"], 1, Cp)], axis=1).astype(jnp.float32)
    dec = -RGLRU_C * jax.nn.softplus(-params["lam"])
    dec = pad2(dec, 1, Cp, fill=-1.0).astype(jnp.float32)   # padded chans: a<1, no NaN
    w3 = pad2(params["w3"], Cp, Dp).astype(md)
    b3 = pad2(params["b3"], 1, Dp).astype(jnp.float32)
    cw = pad2(params["conv_w"], params["conv_w"].shape[0], Cp).astype(jnp.float32)
    xk = x if D == Dp else jnp.pad(x, ((0, 0), (0, 0), (0, Dp - D)))
    xk = xk.astype(md)

    inputs = (xk, xk, w12, b12, cw, wax, bax, dec, w3, b3)

    cost = pl.CostEstimate(
        flops=int(2 * B * T * (Dp * 2 * Cp + Cp * 2 * Cp + Cp * Dp)),
        transcendentals=int(5 * B * T * Cp),
        bytes_accessed=int(xk.size * xk.dtype.itemsize
                           + B * T * Dp * jnp.dtype(out_dtype).itemsize
                           + sum(int(a.size) * a.dtype.itemsize
                                 for a in inputs[2:])))

    def build(single_buffer_weights):
        def resident(a):   # whole weight, constant index map -> stays in VMEM
            nd = a.ndim
            if single_buffer_weights:
                return pl.BlockSpec(a.shape, lambda *_: (0,) * nd,
                                    pipeline_mode=pl.Buffered(1))
            return pl.BlockSpec(a.shape, lambda *_: (0,) * nd)

        in_specs = [
            pl.BlockSpec((1, TT, Dp), lambda b, j: (b, j, 0)),
            # 1-row right conv halo: first rows of the next T tile (clamped at end)
            pl.BlockSpec((1, 8, Dp),
                         lambda b, j: (b, jnp.minimum((j + 1) * (TT // 8),
                                                      T // 8 - 1), 0)),
        ] + [resident(a) for a in inputs[2:]]

        return pl.pallas_call(
            recurrent_block_kernel,
            out_shape=jax.ShapeDtypeStruct((B, T, Dp), out_dtype),
            grid=(B, NT),
            in_specs=in_specs,
            out_specs=pl.BlockSpec((1, TT, Dp), lambda b, j: (b, j, 0)),
            scratch_shapes=[
                pltpu.VMEM((8, Cp), jnp.float32),   # conv left-halo carry (last u rows)
                pltpu.VMEM((1, Cp), jnp.float32),   # RG-LRU state carry
            ],
            compiler_params=pltpu.CompilerParams(
                dimension_semantics=("parallel", "arbitrary"),
                vmem_limit_bytes=48 * 1024 * 1024),
            cost_estimate=cost,
        )

    try:
        out = build(True)(*inputs)
    except Exception:
        # pl.Buffered(1) single-buffering unsupported on this build; fall back
        # to default double-buffered resident weights (correctness unchanged).
        out = build(False)(*inputs)

    return out if D == Dp else out[..., :D]


def init_params(key, D, D_rnn, K=4):
    C = D_rnn
    ks = jax.random.split(key, 10)

    def nrm(k, shape, scale):
        return scale * jax.random.normal(k, shape, jnp.float32)

    w1 = nrm(ks[0], (D, C), 1.0 / math.sqrt(D))
    b1 = nrm(ks[1], (1, C), 0.02)
    w2 = nrm(ks[2], (D, C), 1.0 / math.sqrt(D))
    b2 = nrm(ks[3], (1, C), 0.02)
    w3 = nrm(ks[4], (C, D), 1.0 / math.sqrt(C))
    b3 = nrm(ks[5], (1, D), 0.02)
    conv_w = nrm(ks[6], (K, C), 1.0 / math.sqrt(K))      # depthwise taps (k, chan)
    wa = nrm(ks[7], (C, C), 1.0 / math.sqrt(C))
    wx = nrm(ks[8], (C, C), 1.0 / math.sqrt(C))
    ba = jnp.zeros((1, C), jnp.float32)
    bx = jnp.zeros((1, C), jnp.float32)
    # Lambda per reset_parameters: u ~ U(0.9, 0.999); Lambda = -log(u^(-1/c) - 1)
    u = jax.random.uniform(ks[9], (1, C), jnp.float32, 0.9, 0.999)
    lam = -jnp.log(u ** (-1.0 / RGLRU_C) - 1.0)
    return dict(w1=w1, b1=b1, w2=w2, b2=b2, w3=w3, b3=b3,
                conv_w=conv_w, wa=wa, wx=wx, ba=ba, bx=bx, lam=lam)


def reference(x, p, matmul_dtype=jnp.float32):
    """Pure-JAX reference with the same matmul-dtype policy (correctness check)."""
    md = matmul_dtype

    def mm(a, w):
        return jnp.dot(a.astype(md), w.astype(md),
                       preferred_element_type=jnp.float32)

    B, T, D = x.shape
    K = p["conv_w"].shape[0]
    C = p["w1"].shape[1]
    x1 = _gelu_exact(mm(x, p["w1"]) + p["b1"])
    u = mm(x, p["w2"]) + p["b2"]
    up = jnp.pad(u, ((0, 0), (2, 1), (0, 0)))
    conv = sum(up[:, k:k + T, :] * p["conv_w"][k][None, None, :] for k in range(K))
    r = jax.nn.sigmoid(mm(conv, p["wa"]) + p["ba"])
    i = jax.nn.sigmoid(mm(conv, p["wx"]) + p["bx"])
    dec = -RGLRU_C * jax.nn.softplus(-p["lam"])
    a = jnp.exp(dec * r)
    g = jnp.sqrt(1.0 - a * a) * (i * conv)

    def step(h, inp):
        a_t, g_t = inp
        h = a_t * h + g_t
        return h, h

    _, ys = lax.scan(step, jnp.zeros((B, C), jnp.float32),
                     (jnp.swapaxes(a, 0, 1), jnp.swapaxes(g, 0, 1)))
    y2 = jnp.swapaxes(ys, 0, 1)
    return mm(x1 * y2, p["w3"]) + p["b3"]


if __name__ == "__main__":
    B, T, D = 2, 32, 32
    D_rnn = D  # see fidelity note at top: D_rnn == D == RGLRU hidden_dim

    key = jax.random.PRNGKey(0)
    kx, kp = jax.random.split(key)
    x = jax.random.normal(kx, (B, T, D), jnp.float32)
    params = init_params(kp, D, D_rnn)

    # t_tile=16 -> 2 sequence tiles: exercises the conv halo and RNN carries.
    out = jax.block_until_ready(recurrent_block(x, params, t_tile=16))
    assert out.shape == (B, T, D) and out.dtype == jnp.float32

    ref = reference(x, params, matmul_dtype=jnp.bfloat16)
    if not jnp.allclose(out, ref, atol=2e-2, rtol=2e-2):
        raise AssertionError(
            f"kernel/reference mismatch, max abs diff = "
            f"{float(jnp.max(jnp.abs(out - ref)))}")

    print("KERNEL_OK")
</pallas_src>

<mosaic_0001>
module attributes {stable_mosaic.version = 11 : i64} {
  func.func @recurrent_block_kernel(%arg0: i32, %arg1: i32, %arg2: memref<1x16x128xbf16, #tpu.memory_space<vmem>>, %arg3: memref<1x8x128xbf16, #tpu.memory_space<vmem>>, %arg4: memref<128x256xbf16, #tpu.memory_space<vmem>>, %arg5: memref<1x256xf32, #tpu.memory_space<vmem>>, %arg6: memref<4x128xf32, #tpu.memory_space<vmem>>, %arg7: memref<128x256xbf16, #tpu.memory_space<vmem>>, %arg8: memref<1x256xf32, #tpu.memory_space<vmem>>, %arg9: memref<1x128xf32, #tpu.memory_space<vmem>>, %arg10: memref<128x128xbf16, #tpu.memory_space<vmem>>, %arg11: memref<1x128xf32, #tpu.memory_space<vmem>>, %arg12: memref<1x16x128xf32, #tpu.memory_space<vmem>>, %arg13: memref<8x128xf32, #tpu.memory_space<vmem>>, %arg14: memref<1x128xf32, #tpu.memory_space<vmem>>) attributes {dimension_semantics = [#tpu.dimension_semantics<parallel>, #tpu.dimension_semantics<arbitrary>], iteration_bounds = array<i64: 2, 2>, scalar_prefetch = 0 : i64, scratch_operands = 2 : i64, tpu.core_type = #tpu.core_type<tc>, window_params = [{transform_indices = @transform_0, window_bounds = array<i64: 1, 16, 128>}, {transform_indices = @transform_1, window_bounds = array<i64: 1, 8, 128>}, {pipeline_mode = #tpu.pipeline_mode<synchronous>, transform_indices = @transform_2, window_bounds = array<i64: 128, 256>}, {pipeline_mode = #tpu.pipeline_mode<synchronous>, transform_indices = @transform_3, window_bounds = array<i64: 1, 256>}, {pipeline_mode = #tpu.pipeline_mode<synchronous>, transform_indices = @transform_4, window_bounds = array<i64: 4, 128>}, {pipeline_mode = #tpu.pipeline_mode<synchronous>, transform_indices = @transform_5, window_bounds = array<i64: 128, 256>}, {pipeline_mode = #tpu.pipeline_mode<synchronous>, transform_indices = @transform_6, window_bounds = array<i64: 1, 256>}, {pipeline_mode = #tpu.pipeline_mode<synchronous>, transform_indices = @transform_7, window_bounds = array<i64: 1, 128>}, {pipeline_mode = #tpu.pipeline_mode<synchronous>, transform_indices = @transform_8, window_bounds = array<i64: 128, 128>}, {pipeline_mode = #tpu.pipeline_mode<synchronous>, transform_indices = @transform_9, window_bounds = array<i64: 1, 128>}, {transform_indices = @transform_10, window_bounds = array<i64: 1, 16, 128>}]} {
    %c0_i32 = arith.constant 0 : i32
    %0 = arith.cmpi eq, %arg1, %c0_i32 : i32
    %1 = arith.extui %0 : i1 to i32
    %c0_i32_0 = arith.constant 0 : i32
    %2 = arith.cmpi ne, %1, %c0_i32_0 : i32
    scf.if %2 {
      %cst_62 = arith.constant 0.000000e+00 : f32
      %181 = vector.broadcast %cst_62 : f32 to vector<8x128xf32>
      %c0_63 = arith.constant 0 : index
      %c0_64 = arith.constant 0 : index
      %182 = vector.load %arg13[%c0_63, %c0_64] : memref<8x128xf32, #tpu.memory_space<vmem>>, vector<8x128xf32>
      tpu.vector_store %arg13[%c0_63, %c0_64], %181 {strides = array<i32>} : memref<8x128xf32, #tpu.memory_space<vmem>>, vector<8x128xf32>,
      %cst_65 = arith.constant 0.000000e+00 : f32
      %183 = vector.broadcast %cst_65 : f32 to vector<1x128xf32>
      %c0_66 = arith.constant 0 : index
      %c0_67 = arith.constant 0 : index
      %184 = vector.load %arg14[%c0_66, %c0_67] : memref<1x128xf32, #tpu.memory_space<vmem>>, vector<1x128xf32>
      tpu.vector_store %arg14[%c0_66, %c0_67], %183 {strides = array<i32>} : memref<1x128xf32, #tpu.memory_space<vmem>>, vector<1x128xf32>,
    } else {
    }
    %c0 = arith.constant 0 : index
    %c0_1 = arith.constant 0 : index
    %c0_2 = arith.constant 0 : index
    %3 = vector.load %arg2[%c0, %c0_1, %c0_2] : memref<1x16x128xbf16, #tpu.memory_space<vmem>>, vector<1x16x128xbf16>
    %4 = vector.shape_cast %3 : vector<1x16x128xbf16> to vector<16x128xbf16>
    %c0_3 = arith.constant 0 : index
    %c0_4 = arith.constant 0 : index
    %5 = vector.load %arg4[%c0_3, %c0_4] : memref<128x256xbf16, #tpu.memory_space<vmem>>, vector<128x256xbf16>
    %cst = arith.constant dense<0.000000e+00> : vector<16x256xf32>
    %6 = tpu.matmul %4, %5, %cst {dimension_numbers = #tpu.dot_dimension_numbers<[1], [0], [0], [1], [0, 0, 1, 1], [], []>} : vector<16x128xbf16>, vector<128x256xbf16>, vector<16x256xf32> -> vector<16x256xf32>
    %c0_5 = arith.constant 0 : index
    %c0_6 = arith.constant 0 : index
    %7 = vector.load %arg5[%c0_5, %c0_6] : memref<1x256xf32, #tpu.memory_space<vmem>>, vector<1x256xf32>
    %8 = vector.broadcast %7 : vector<1x256xf32> to vector<16x256xf32>
    %9 = arith.addf %6, %8 : vector<16x256xf32>
    %10 = vector.extract_strided_slice %9 {offsets = [0, 0], sizes = [16, 128], strides = [1, 1]} : vector<16x256xf32> to vector<16x128xf32>
    %cst_7 = arith.constant 5.000000e-01 : f32
    %11 = vector.broadcast %cst_7 : f32 to vector<16x128xf32>
    %12 = arith.mulf %11, %10 : vector<16x128xf32>
    %cst_8 = arith.constant 0.707106769 : f32
    %13 = vector.broadcast %cst_8 : f32 to vector<16x128xf32>
    %14 = arith.mulf %10, %13 : vector<16x128xf32>
    %15 = math.erf %14 : vector<16x128xf32>
    %cst_9 = arith.constant 1.000000e+00 : f32
    %16 = vector.broadcast %cst_9 : f32 to vector<16x128xf32>
    %17 = arith.addf %16, %15 : vector<16x128xf32>
    %18 = arith.mulf %12, %17 : vector<16x128xf32>
    %19 = vector.extract_strided_slice %9 {offsets = [0, 128], sizes = [16, 128], strides = [1, 1]} : vector<16x256xf32> to vector<16x128xf32>
    %c0_10 = arith.constant 0 : index
    %c0_11 = arith.constant 0 : index
    %c0_12 = arith.constant 0 : index
    %20 = vector.load %arg3[%c0_10, %c0_11, %c0_12] : memref<1x8x128xbf16, #tpu.memory_space<vmem>>, vector<1x1x128xbf16>
    %21 = vector.shape_cast %20 : vector<1x1x128xbf16> to vector<1x128xbf16>
    %c0_13 = arith.constant 0 : index
    %c0_14 = arith.constant 0 : index
    %22 = vector.load %arg4[%c0_13, %c0_14] : memref<128x256xbf16, #tpu.memory_space<vmem>>, vector<128x256xbf16>
    %cst_15 = arith.constant dense<0.000000e+00> : vector<1x256xf32>
    %23 = tpu.matmul %21, %22, %cst_15 {dimension_numbers = #tpu.dot_dimension_numbers<[1], [0], [0], [1], [0, 0, 1, 1], [], []>} : vector<1x128xbf16>, vector<128x256xbf16>, vector<1x256xf32> -> vector<1x256xf32>
    %c0_16 = arith.constant 0 : index
    %c0_17 = arith.constant 0 : index
    %24 = vector.load %arg5[%c0_16, %c0_17] : memref<1x256xf32, #tpu.memory_space<vmem>>, vector<1x256xf32>
    %25 = arith.addf %23, %24 : vector<1x256xf32>
    %c1_i32 = arith.constant 1 : i32
    %26 = arith.addi %arg1, %c1_i32 : i32
    %c2_i32 = arith.constant 2 : i32
    %27 = arith.cmpi slt, %26, %c2_i32 : i32
    %28 = arith.extui %27 : i1 to i32
    %29 = arith.sitofp %28 : i32 to f32
    %30 = vector.extract_strided_slice %25 {offsets = [0, 128], sizes = [1, 128], strides = [1, 1]} : vector<1x256xf32> to vector<1x128xf32>
    %31 = vector.broadcast %29 : f32 to vector<1x128xf32>
    %32 = arith.mulf %30, %31 : vector<1x128xf32>
    %c7 = arith.constant 7 : index
    %c0_18 = arith.constant 0 : index
    %33 = vector.load %arg13[%c7, %c0_18] : memref<8x128xf32, #tpu.memory_space<vmem>>, vector<1x128xf32>
    %c6 = arith.constant 6 : index
    %c0_19 = arith.constant 0 : index
    %34 = vector.load %arg13[%c6, %c0_19] : memref<8x128xf32, #tpu.memory_space<vmem>>, vector<1x128xf32>
    %c0_20 = arith.constant 0 : index
    %c0_21 = arith.constant 0 : index
    %35 = vector.load %arg6[%c0_20, %c0_21] : memref<4x128xf32, #tpu.memory_space<vmem>>, vector<4x128xf32>
    %36 = tpu.iota {dimensions = array<i32: 0>} : vector<16x1xi32>
    %c2_i32_22 = arith.constant 2 : i32
    %37 = vector.broadcast %c2_i32_22 : i32 to vector<16x1xi32>
    %38 = arith.cmpi sge, %36, %37 : vector<16x1xi32>
    %c2_i32_23 = arith.constant 2 : i32
    %39 = tpu.dynamic_rotate %19 by %c2_i32_23 dim 0 : vector<16x128xf32>, i32 -> vector<16x128xf32>
    %c0_i32_24 = arith.constant 0 : i32
    %40 = vector.broadcast %c0_i32_24 : i32 to vector<16x1xi32>
    %41 = arith.cmpi eq, %36, %40 : vector<16x1xi32>
    %42 = vector.shape_cast %41 : vector<16x1xi1> to vector<16x1xi1>
    %43 = vector.broadcast %42 : vector<16x1xi1> to vector<16x128xi1>
    %44 = vector.shape_cast %34 : vector<1x128xf32> to vector<1x128xf32>
    %45 = vector.broadcast %44 : vector<1x128xf32> to vector<16x128xf32>
    %46 = vector.shape_cast %33 : vector<1x128xf32> to vector<1x128xf32>
    %47 = vector.broadcast %46 : vector<1x128xf32> to vector<16x128xf32>
    %48 = arith.select %43, %45, %47 : vector<16x128xi1>, vector<16x128xf32>
    %49 = vector.shape_cast %38 : vector<16x1xi1> to vector<16x1xi1>
    %50 = vector.broadcast %49 : vector<16x1xi1> to vector<16x128xi1>
    %51 = arith.select %50, %39, %48 : vector<16x128xi1>, vector<16x128xf32>
    %c1_i32_25 = arith.constant 1 : i32
    %52 = vector.broadcast %c1_i32_25 : i32 to vector<16x1xi32>
    %53 = arith.cmpi sge, %36, %52 : vector<16x1xi32>
    %c1_i32_26 = arith.constant 1 : i32
    %54 = tpu.dynamic_rotate %19 by %c1_i32_26 dim 0 : vector<16x128xf32>, i32 -> vector<16x128xf32>
    %55 = vector.shape_cast %53 : vector<16x1xi1> to vector<16x1xi1>
    %56 = vector.broadcast %55 : vector<16x1xi1> to vector<16x128xi1>
    %57 = vector.shape_cast %33 : vector<1x128xf32> to vector<1x128xf32>
    %58 = vector.broadcast %57 : vector<1x128xf32> to vector<16x128xf32>
    %59 = arith.select %56, %54, %58 : vector<16x128xi1>, vector<16x128xf32>
    %c15_i32 = arith.constant 15 : i32
    %60 = vector.broadcast %c15_i32 : i32 to vector<16x1xi32>
    %61 = arith.cmpi slt, %36, %60 : vector<16x1xi32>
    %c15_i32_27 = arith.constant 15 : i32
    %62 = tpu.dynamic_rotate %19 by %c15_i32_27 dim 0 : vector<16x128xf32>, i32 -> vector<16x128xf32>
    %63 = vector.shape_cast %61 : vector<16x1xi1> to vector<16x1xi1>
    %64 = vector.broadcast %63 : vector<16x1xi1> to vector<16x128xi1>
    %65 = vector.shape_cast %32 : vector<1x128xf32> to vector<1x128xf32>
    %66 = vector.broadcast %65 : vector<1x128xf32> to vector<16x128xf32>
    %67 = arith.select %64, %62, %66 : vector<16x128xi1>, vector<16x128xf32>
    %68 = vector.extract_strided_slice %35 {offsets = [0, 0], sizes = [1, 128], strides = [1, 1]} : vector<4x128xf32> to vector<1x128xf32>
    %69 = vector.broadcast %68 : vector<1x128xf32> to vector<16x128xf32>
    %70 = arith.mulf %51, %69 : vector<16x128xf32>
    %71 = vector.extract_strided_slice %35 {offsets = [1, 0], sizes = [1, 128], strides = [1, 1]} : vector<4x128xf32> to vector<1x128xf32>
    %72 = vector.broadcast %71 : vector<1x128xf32> to vector<16x128xf32>
    %73 = arith.mulf %59, %72 : vector<16x128xf32>
    %74 = arith.addf %70, %73 : vector<16x128xf32>
    %75 = vector.extract_strided_slice %35 {offsets = [2, 0], sizes = [1, 128], strides = [1, 1]} : vector<4x128xf32> to vector<1x128xf32>
    %76 = vector.broadcast %75 : vector<1x128xf32> to vector<16x128xf32>
    %77 = arith.mulf %19, %76 : vector<16x128xf32>
    %78 = arith.addf %74, %77 : vector<16x128xf32>
    %79 = vector.extract_strided_slice %35 {offsets = [3, 0], sizes = [1, 128], strides = [1, 1]} : vector<4x128xf32> to vector<1x128xf32>
    %80 = vector.broadcast %79 : vector<1x128xf32> to vector<16x128xf32>
    %81 = arith.mulf %67, %80 : vector<16x128xf32>
    %82 = arith.addf %78, %81 : vector<16x128xf32>
    %83 = vector.extract_strided_slice %19 {offsets = [8, 0], sizes = [8, 128], strides = [1, 1]} : vector<16x128xf32> to vector<8x128xf32>
    %c0_28 = arith.constant 0 : index
    %c0_29 = arith.constant 0 : index
    %84 = vector.load %arg13[%c0_28, %c0_29] : memref<8x128xf32, #tpu.memory_space<vmem>>, vector<8x128xf32>
    tpu.vector_store %arg13[%c0_28, %c0_29], %83 {strides = array<i32>} : memref<8x128xf32, #tpu.memory_space<vmem>>, vector<8x128xf32>,
    %85 = arith.truncf %82 : vector<16x128xf32> to vector<16x128xbf16>
    %c0_30 = arith.constant 0 : index
    %c0_31 = arith.constant 0 : index
    %86 = vector.load %arg7[%c0_30, %c0_31] : memref<128x256xbf16, #tpu.memory_space<vmem>>, vector<128x256xbf16>
    %cst_32 = arith.constant dense<0.000000e+00> : vector<16x256xf32>
    %87 = tpu.matmul %85, %86, %cst_32 {dimension_numbers = #tpu.dot_dimension_numbers<[1], [0], [0], [1], [0, 0, 1, 1], [], []>} : vector<16x128xbf16>, vector<128x256xbf16>, vector<16x256xf32> -> vector<16x256xf32>
    %c0_33 = arith.constant 0 : index
    %c0_34 = arith.constant 0 : index
    %88 = vector.load %arg8[%c0_33, %c0_34] : memref<1x256xf32, #tpu.memory_space<vmem>>, vector<1x256xf32>
    %89 = vector.broadcast %88 : vector<1x256xf32> to vector<16x256xf32>
    %90 = arith.addf %87, %89 : vector<16x256xf32>
    %91 = vector.extract_strided_slice %90 {offsets = [0, 0], sizes = [16, 128], strides = [1, 1]} : vector<16x256xf32> to vector<16x128xf32>
    %92 = arith.negf %91 : vector<16x128xf32>
    %93 = math.exp %92 : vector<16x128xf32>
    %cst_35 = arith.constant 1.000000e+00 : f32
    %94 = vector.broadcast %cst_35 : f32 to vector<16x128xf32>
    %95 = arith.addf %94, %93 : vector<16x128xf32>
    %96 = arith.divf %94, %95 : vector<16x128xf32>
    %97 = vector.extract_strided_slice %90 {offsets = [0, 128], sizes = [16, 128], strides = [1, 1]} : vector<16x256xf32> to vector<16x128xf32>
    %98 = arith.negf %97 : vector<16x128xf32>
    %99 = math.exp %98 : vector<16x128xf32>
    %cst_36 = arith.constant 1.000000e+00 : f32
    %100 = vector.broadcast %cst_36 : f32 to vector<16x128xf32>
    %101 = arith.addf %100, %99 : vector<16x128xf32>
    %102 = arith.divf %100, %101 : vector<16x128xf32>
    %c0_37 = arith.constant 0 : index
    %c0_38 = arith.constant 0 : index
    %103 = vector.load %arg9[%c0_37, %c0_38] : memref<1x128xf32, #tpu.memory_space<vmem>>, vector<1x128xf32>
    %104 = vector.broadcast %103 : vector<1x128xf32> to vector<16x128xf32>
    %105 = arith.mulf %104, %96 : vector<16x128xf32>
    %106 = math.exp %105 : vector<16x128xf32>
    %107 = arith.mulf %106, %106 : vector<16x128xf32>
    %cst_39 = arith.constant 1.000000e+00 : f32
    %108 = vector.broadcast %cst_39 : f32 to vector<16x128xf32>
    %109 = arith.subf %108, %107 : vector<16x128xf32>
    %110 = math.sqrt %109 : vector<16x128xf32>
    %111 = arith.mulf %102, %82 : vector<16x128xf32>
    %112 = arith.mulf %110, %111 : vector<16x128xf32>
    %c1_i32_40 = arith.constant 1 : i32
    %113 = tpu.dynamic_rotate %106 by %c1_i32_40 dim 0 : vector<16x128xf32>, i32 -> vector<16x128xf32>
    %c1_i32_41 = arith.constant 1 : i32
    %114 = tpu.dynamic_rotate %112 by %c1_i32_41 dim 0 : vector<16x128xf32>, i32 -> vector<16x128xf32>
    %c1_i32_42 = arith.constant 1 : i32
    %115 = vector.broadcast %c1_i32_42 : i32 to vector<16x1xi32>
    %116 = arith.cmpi sge, %36, %115 : vector<16x1xi32>
    %117 = arith.mulf %106, %114 : vector<16x128xf32>
    %118 = arith.addf %112, %117 : vector<16x128xf32>
    %119 = vector.shape_cast %116 : vector<16x1xi1> to vector<16x1xi1>
    %120 = vector.broadcast %119 : vector<16x1xi1> to vector<16x128xi1>
    %121 = arith.select %120, %118, %112 : vector<16x128xi1>, vector<16x128xf32>
    %122 = arith.mulf %106, %113 : vector<16x128xf32>
    %123 = vector.shape_cast %116 : vector<16x1xi1> to vector<16x1xi1>
    %124 = vector.broadcast %123 : vector<16x1xi1> to vector<16x128xi1>
    %125 = arith.select %124, %122, %106 : vector<16x128xi1>, vector<16x128xf32>
    %c2_i32_43 = arith.constant 2 : i32
    %126 = tpu.dynamic_rotate %125 by %c2_i32_43 dim 0 : vector<16x128xf32>, i32 -> vector<16x128xf32>
    %c2_i32_44 = arith.constant 2 : i32
    %127 = tpu.dynamic_rotate %121 by %c2_i32_44 dim 0 : vector<16x128xf32>, i32 -> vector<16x128xf32>
    %c2_i32_45 = arith.constant 2 : i32
    %128 = vector.broadcast %c2_i32_45 : i32 to vector<16x1xi32>
    %129 = arith.cmpi sge, %36, %128 : vector<16x1xi32>
    %130 = arith.mulf %125, %127 : vector<16x128xf32>
    %131 = arith.addf %121, %130 : vector<16x128xf32>
    %132 = vector.shape_cast %129 : vector<16x1xi1> to vector<16x1xi1>
    %133 = vector.broadcast %132 : vector<16x1xi1> to vector<16x128xi1>
    %134 = arith.select %133, %131, %121 : vector<16x128xi1>, vector<16x128xf32>
    %135 = arith.mulf %125, %126 : vector<16x128xf32>
    %136 = vector.shape_cast %129 : vector<16x1xi1> to vector<16x1xi1>
    %137 = vector.broadcast %136 : vector<16x1xi1> to vector<16x128xi1>
    %138 = arith.select %137, %135, %125 : vector<16x128xi1>, vector<16x128xf32>
    %c4_i32 = arith.constant 4 : i32
    %139 = tpu.dynamic_rotate %138 by %c4_i32 dim 0 : vector<16x128xf32>, i32 -> vector<16x128xf32>
    %c4_i32_46 = arith.constant 4 : i32
    %140 = tpu.dynamic_rotate %134 by %c4_i32_46 dim 0 : vector<16x128xf32>, i32 -> vector<16x128xf32>
    %c4_i32_47 = arith.constant 4 : i32
    %141 = vector.broadcast %c4_i32_47 : i32 to vector<16x1xi32>
    %142 = arith.cmpi sge, %36, %141 : vector<16x1xi32>
    %143 = arith.mulf %138, %140 : vector<16x128xf32>
    %144 = arith.addf %134, %143 : vector<16x128xf32>
    %145 = vector.shape_cast %142 : vector<16x1xi1> to vector<16x1xi1>
    %146 = vector.broadcast %145 : vector<16x1xi1> to vector<16x128xi1>
    %147 = arith.select %146, %144, %134 : vector<16x128xi1>, vector<16x128xf32>
    %148 = arith.mulf %138, %139 : vector<16x128xf32>
    %149 = vector.shape_cast %142 : vector<16x1xi1> to vector<16x1xi1>
    %150 = vector.broadcast %149 : vector<16x1xi1> to vector<16x128xi1>
    %151 = arith.select %150, %148, %138 : vector<16x128xi1>, vector<16x128xf32>
    %c8_i32 = arith.constant 8 : i32
    %152 = tpu.dynamic_rotate %151 by %c8_i32 dim 0 : vector<16x128xf32>, i32 -> vector<16x128xf32>
    %c8_i32_48 = arith.constant 8 : i32
    %153 = tpu.dynamic_rotate %147 by %c8_i32_48 dim 0 : vector<16x128xf32>, i32 -> vector<16x128xf32>
    %c8_i32_49 = arith.constant 8 : i32
    %154 = vector.broadcast %c8_i32_49 : i32 to vector<16x1xi32>
    %155 = arith.cmpi sge, %36, %154 : vector<16x1xi32>
    %156 = arith.mulf %151, %153 : vector<16x128xf32>
    %157 = arith.addf %147, %156 : vector<16x128xf32>
    %158 = vector.shape_cast %155 : vector<16x1xi1> to vector<16x1xi1>
    %159 = vector.broadcast %158 : vector<16x1xi1> to vector<16x128xi1>
    %160 = arith.select %159, %157, %147 : vector<16x128xi1>, vector<16x128xf32>
    %161 = arith.mulf %151, %152 : vector<16x128xf32>
    %162 = vector.shape_cast %155 : vector<16x1xi1> to vector<16x1xi1>
    %163 = vector.broadcast %162 : vector<16x1xi1> to vector<16x128xi1>
    %164 = arith.select %163, %161, %151 : vector<16x128xi1>, vector<16x128xf32>
    %c0_50 = arith.constant 0 : index
    %c0_51 = arith.constant 0 : index
    %165 = vector.load %arg14[%c0_50, %c0_51] : memref<1x128xf32, #tpu.memory_space<vmem>>, vector<1x128xf32>
    %166 = vector.broadcast %165 : vector<1x128xf32> to vector<16x128xf32>
    %167 = arith.mulf %164, %166 : vector<16x128xf32>
    %168 = arith.addf %160, %167 : vector<16x128xf32>
    %169 = vector.extract_strided_slice %168 {offsets = [15, 0], sizes = [1, 128], strides = [1, 1]} : vector<16x128xf32> to vector<1x128xf32>
    %c0_52 = arith.constant 0 : index
    %c0_53 = arith.constant 0 : index
    %170 = vector.load %arg14[%c0_52, %c0_53] : memref<1x128xf32, #tpu.memory_space<vmem>>, vector<1x128xf32>
    tpu.vector_store %arg14[%c0_52, %c0_53], %169 {strides = array<i32>} : memref<1x128xf32, #tpu.memory_space<vmem>>, vector<1x128xf32>,
    %171 = arith.mulf %18, %168 : vector<16x128xf32>
    %172 = arith.truncf %171 : vector<16x128xf32> to vector<16x128xbf16>
    %c0_54 = arith.constant 0 : index
    %c0_55 = arith.constant 0 : index
    %173 = vector.load %arg10[%c0_54, %c0_55] : memref<128x128xbf16, #tpu.memory_space<vmem>>, vector<128x128xbf16>
    %cst_56 = arith.constant dense<0.000000e+00> : vector<16x128xf32>
    %174 = tpu.matmul %172, %173, %cst_56 {dimension_numbers = #tpu.dot_dimension_numbers<[1], [0], [0], [1], [0, 0, 1, 1], [], []>} : vector<16x128xbf16>, vector<128x128xbf16>, vector<16x128xf32> -> vector<16x128xf32>
    %c0_57 = arith.constant 0 : index
    %c0_58 = arith.constant 0 : index
    %175 = vector.load %arg11[%c0_57, %c0_58] : memref<1x128xf32, #tpu.memory_space<vmem>>, vector<1x128xf32>
    %176 = vector.broadcast %175 : vector<1x128xf32> to vector<16x128xf32>
    %177 = arith.addf %174, %176 : vector<16x128xf32>
    %c0_59 = arith.constant 0 : index
    %c0_60 = arith.constant 0 : index
    %c0_61 = arith.constant 0 : index
    %178 = vector.load %arg12[%c0_59, %c0_60, %c0_61] : memref<1x16x128xf32, #tpu.memory_space<vmem>>, vector<1x16x128xf32>
    %179 = vector.shape_cast %178 : vector<1x16x128xf32> to vector<16x128xf32>
    %180 = vector.shape_cast %177 : vector<16x128xf32> to vector<1x16x128xf32>
    tpu.vector_store %arg12[%c0_59, %c0_60, %c0_61], %180 {strides = array<i32>} : memref<1x16x128xf32, #tpu.memory_space<vmem>>, vector<1x16x128xf32>,
    return
  }
  func.func @transform_0(%arg0: i32, %arg1: i32) -> (i32, i32, i32) {
    %c0_i32 = arith.constant 0 : i32
    %c0_i32_0 = arith.constant 0 : i32
    return %arg0, %arg1, %c0_i32 : i32, i32, i32
  }
  func.func @transform_1(%arg0: i32, %arg1: i32) -> (i32, i32, i32) {
    %c1_i32 = arith.constant 1 : i32
    %0 = arith.addi %arg1, %c1_i32 : i32
    %c2_i32 = arith.constant 2 : i32
    %1 = arith.muli %0, %c2_i32 : i32
    %c3_i32 = arith.constant 3 : i32
    %2 = arith.minsi %1, %c3_i32 : i32
    %c0_i32 = arith.constant 0 : i32
    %c0_i32_0 = arith.constant 0 : i32
    return %arg0, %2, %c0_i32 : i32, i32, i32
  }
  func.func @transform_2(%arg0: i32, %arg1: i32) -> (i32, i32) {
    %c0_i32 = arith.constant 0 : i32
    %c0_i32_0 = arith.constant 0 : i32
    %c0_i32_1 = arith.constant 0 : i32
    return %c0_i32, %c0_i32_0 : i32, i32
  }
  func.func @transform_3(%arg0: i32, %arg1: i32) -> (i32, i32) {
    %c0_i32 = arith.constant 0 : i32
    %c0_i32_0 = arith.constant 0 : i32
    %c0_i32_1 = arith.constant 0 : i32
    return %c0_i32, %c0_i32_0 : i32, i32
  }
  func.func @transform_4(%arg0: i32, %arg1: i32) -> (i32, i32) {
    %c0_i32 = arith.constant 0 : i32
    %c0_i32_0 = arith.constant 0 : i32
    %c0_i32_1 = arith.constant 0 : i32
    return %c0_i32, %c0_i32_0 : i32, i32
  }
  func.func @transform_5(%arg0: i32, %arg1: i32) -> (i32, i32) {
    %c0_i32 = arith.constant 0 : i32
    %c0_i32_0 = arith.constant 0 : i32
    %c0_i32_1 = arith.constant 0 : i32
    return %c0_i32, %c0_i32_0 : i32, i32
  }
  func.func @transform_6(%arg0: i32, %arg1: i32) -> (i32, i32) {
    %c0_i32 = arith.constant 0 : i32
    %c0_i32_0 = arith.constant 0 : i32
    %c0_i32_1 = arith.constant 0 : i32
    return %c0_i32, %c0_i32_0 : i32, i32
  }
  func.func @transform_7(%arg0: i32, %arg1: i32) -> (i32, i32) {
    %c0_i32 = arith.constant 0 : i32
    %c0_i32_0 = arith.constant 0 : i32
    %c0_i32_1 = arith.constant 0 : i32
    return %c0_i32, %c0_i32_0 : i32, i32
  }
  func.func @transform_8(%arg0: i32, %arg1: i32) -> (i32, i32) {
    %c0_i32 = arith.constant 0 : i32
    %c0_i32_0 = arith.constant 0 : i32
    %c0_i32_1 = arith.constant 0 : i32
    return %c0_i32, %c0_i32_0 : i32, i32
  }
  func.func @transform_9(%arg0: i32, %arg1: i32) -> (i32, i32) {
    %c0_i32 = arith.constant 0 : i32
    %c0_i32_0 = arith.constant 0 : i32
    %c0_i32_1 = arith.constant 0 : i32
    return %c0_i32, %c0_i32_0 : i32, i32
  }
  func.func @transform_10(%arg0: i32, %arg1: i32) -> (i32, i32, i32) {
    %c0_i32 = arith.constant 0 : i32
    %c0_i32_0 = arith.constant 0 : i32
    return %arg0, %arg1, %c0_i32 : i32, i32, i32
  }
}

module attributes {stable_mosaic.version = 11 : i64} {
  func.func @recurrent_block_kernel(%arg0: i32, %arg1: i32, %arg2: memref<1x16x128xbf16, #tpu.memory_space<vmem>>, %arg3: memref<1x8x128xbf16, #tpu.memory_space<vmem>>, %arg4: memref<128x256xbf16, #tpu.memory_space<vmem>>, %arg5: memref<1x256xf32, #tpu.memory_space<vmem>>, %arg6: memref<4x128xf32, #tpu.memory_space<vmem>>, %arg7: memref<128x256xbf16, #tpu.memory_space<vmem>>, %arg8: memref<1x256xf32, #tpu.memory_space<vmem>>, %arg9: memref<1x128xf32, #tpu.memory_space<vmem>>, %arg10: memref<128x128xbf16, #tpu.memory_space<vmem>>, %arg11: memref<1x128xf32, #tpu.memory_space<vmem>>, %arg12: memref<1x16x128xf32, #tpu.memory_space<vmem>>, %arg13: memref<8x128xf32, #tpu.memory_space<vmem>>, %arg14: memref<1x128xf32, #tpu.memory_space<vmem>>) attributes {dimension_semantics = [#tpu.dimension_semantics<parallel>, #tpu.dimension_semantics<arbitrary>], iteration_bounds = array<i64: 2, 2>, scalar_prefetch = 0 : i64, scratch_operands = 2 : i64, tpu.core_type = #tpu.core_type<tc>, window_params = [{transform_indices = @transform_0, window_bounds = array<i64: 1, 16, 128>}, {transform_indices = @transform_1, window_bounds = array<i64: 1, 8, 128>}, {pipeline_mode = #tpu.pipeline_mode<synchronous>, transform_indices = @transform_2, window_bounds = array<i64: 128, 256>}, {pipeline_mode = #tpu.pipeline_mode<synchronous>, transform_indices = @transform_3, window_bounds = array<i64: 1, 256>}, {pipeline_mode = #tpu.pipeline_mode<synchronous>, transform_indices = @transform_4, window_bounds = array<i64: 4, 128>}, {pipeline_mode = #tpu.pipeline_mode<synchronous>, transform_indices = @transform_5, window_bounds = array<i64: 128, 256>}, {pipeline_mode = #tpu.pipeline_mode<synchronous>, transform_indices = @transform_6, window_bounds = array<i64: 1, 256>}, {pipeline_mode = #tpu.pipeline_mode<synchronous>, transform_indices = @transform_7, window_bounds = array<i64: 1, 128>}, {pipeline_mode = #tpu.pipeline_mode<synchronous>, transform_indices = @transform_8, window_bounds = array<i64: 128, 128>}, {pipeline_mode = #tpu.pipeline_mode<synchronous>, transform_indices = @transform_9, window_bounds = array<i64: 1, 128>}, {transform_indices = @transform_10, window_bounds = array<i64: 1, 16, 128>}]} {
    %c0_i32 = arith.constant 0 : i32
    %0 = arith.cmpi eq, %arg1, %c0_i32 : i32
    %1 = arith.extui %0 : i1 to i32
    %c0_i32_0 = arith.constant 0 : i32
    %2 = arith.cmpi ne, %1, %c0_i32_0 : i32
    scf.if %2 {
      %cst_62 = arith.constant 0.000000e+00 : f32
      %181 = vector.broadcast %cst_62 : f32 to vector<8x128xf32>
      %c0_63 = arith.constant 0 : index
      %c0_64 = arith.constant 0 : index
      %182 = vector.load %arg13[%c0_63, %c0_64] : memref<8x128xf32, #tpu.memory_space<vmem>>, vector<8x128xf32>
      tpu.vector_store %arg13[%c0_63, %c0_64], %181 {strides = array<i32>} : memref<8x128xf32, #tpu.memory_space<vmem>>, vector<8x128xf32>,
      %cst_65 = arith.constant 0.000000e+00 : f32
      %183 = vector.broadcast %cst_65 : f32 to vector<1x128xf32>
      %c0_66 = arith.constant 0 : index
      %c0_67 = arith.constant 0 : index
      %184 = vector.load %arg14[%c0_66, %c0_67] : memref<1x128xf32, #tpu.memory_space<vmem>>, vector<1x128xf32>
      tpu.vector_store %arg14[%c0_66, %c0_67], %183 {strides = array<i32>} : memref<1x128xf32, #tpu.memory_space<vmem>>, vector<1x128xf32>,
    } else {
    }
    %c0 = arith.constant 0 : index
    %c0_1 = arith.constant 0 : index
    %c0_2 = arith.constant 0 : index
    %3 = vector.load %arg2[%c0, %c0_1, %c0_2] : memref<1x16x128xbf16, #tpu.memory_space<vmem>>, vector<1x16x128xbf16>
    %4 = vector.shape_cast %3 : vector<1x16x128xbf16> to vector<16x128xbf16>
    %c0_3 = arith.constant 0 : index
    %c0_4 = arith.constant 0 : index
    %5 = vector.load %arg4[%c0_3, %c0_4] : memref<128x256xbf16, #tpu.memory_space<vmem>>, vector<128x256xbf16>
    %cst = arith.constant dense<0.000000e+00> : vector<16x256xf32>
    %6 = tpu.matmul %4, %5, %cst {dimension_numbers = #tpu.dot_dimension_numbers<[1], [0], [0], [1], [0, 0, 1, 1], [], []>} : vector<16x128xbf16>, vector<128x256xbf16>, vector<16x256xf32> -> vector<16x256xf32>
    %c0_5 = arith.constant 0 : index
    %c0_6 = arith.constant 0 : index
    %7 = vector.load %arg5[%c0_5, %c0_6] : memref<1x256xf32, #tpu.memory_space<vmem>>, vector<1x256xf32>
    %8 = vector.broadcast %7 : vector<1x256xf32> to vector<16x256xf32>
    %9 = arith.addf %6, %8 : vector<16x256xf32>
    %10 = vector.extract_strided_slice %9 {offsets = [0, 0], sizes = [16, 128], strides = [1, 1]} : vector<16x256xf32> to vector<16x128xf32>
    %cst_7 = arith.constant 5.000000e-01 : f32
    %11 = vector.broadcast %cst_7 : f32 to vector<16x128xf32>
    %12 = arith.mulf %11, %10 : vector<16x128xf32>
    %cst_8 = arith.constant 0.707106769 : f32
    %13 = vector.broadcast %cst_8 : f32 to vector<16x128xf32>
    %14 = arith.mulf %10, %13 : vector<16x128xf32>
    %15 = math.erf %14 : vector<16x128xf32>
    %cst_9 = arith.constant 1.000000e+00 : f32
    %16 = vector.broadcast %cst_9 : f32 to vector<16x128xf32>
    %17 = arith.addf %16, %15 : vector<16x128xf32>
    %18 = arith.mulf %12, %17 : vector<16x128xf32>
    %19 = vector.extract_strided_slice %9 {offsets = [0, 128], sizes = [16, 128], strides = [1, 1]} : vector<16x256xf32> to vector<16x128xf32>
    %c0_10 = arith.constant 0 : index
    %c0_11 = arith.constant 0 : index
    %c0_12 = arith.constant 0 : index
    %20 = vector.load %arg3[%c0_10, %c0_11, %c0_12] : memref<1x8x128xbf16, #tpu.memory_space<vmem>>, vector<1x1x128xbf16>
    %21 = vector.shape_cast %20 : vector<1x1x128xbf16> to vector<1x128xbf16>
    %c0_13 = arith.constant 0 : index
    %c0_14 = arith.constant 0 : index
    %22 = vector.load %arg4[%c0_13, %c0_14] : memref<128x256xbf16, #tpu.memory_space<vmem>>, vector<128x256xbf16>
    %cst_15 = arith.constant dense<0.000000e+00> : vector<1x256xf32>
    %23 = tpu.matmul %21, %22, %cst_15 {dimension_numbers = #tpu.dot_dimension_numbers<[1], [0], [0], [1], [0, 0, 1, 1], [], []>} : vector<1x128xbf16>, vector<128x256xbf16>, vector<1x256xf32> -> vector<1x256xf32>
    %c0_16 = arith.constant 0 : index
    %c0_17 = arith.constant 0 : index
    %24 = vector.load %arg5[%c0_16, %c0_17] : memref<1x256xf32, #tpu.memory_space<vmem>>, vector<1x256xf32>
    %25 = arith.addf %23, %24 : vector<1x256xf32>
    %c1_i32 = arith.constant 1 : i32
    %26 = arith.addi %arg1, %c1_i32 : i32
    %c2_i32 = arith.constant 2 : i32
    %27 = arith.cmpi slt, %26, %c2_i32 : i32
    %28 = arith.extui %27 : i1 to i32
    %29 = arith.sitofp %28 : i32 to f32
    %30 = vector.extract_strided_slice %25 {offsets = [0, 128], sizes = [1, 128], strides = [1, 1]} : vector<1x256xf32> to vector<1x128xf32>
    %31 = vector.broadcast %29 : f32 to vector<1x128xf32>
    %32 = arith.mulf %30, %31 : vector<1x128xf32>
    %c7 = arith.constant 7 : index
    %c0_18 = arith.constant 0 : index
    %33 = vector.load %arg13[%c7, %c0_18] : memref<8x128xf32, #tpu.memory_space<vmem>>, vector<1x128xf32>
    %c6 = arith.constant 6 : index
    %c0_19 = arith.constant 0 : index
    %34 = vector.load %arg13[%c6, %c0_19] : memref<8x128xf32, #tpu.memory_space<vmem>>, vector<1x128xf32>
    %c0_20 = arith.constant 0 : index
    %c0_21 = arith.constant 0 : index
    %35 = vector.load %arg6[%c0_20, %c0_21] : memref<4x128xf32, #tpu.memory_space<vmem>>, vector<4x128xf32>
    %36 = tpu.iota {dimensions = array<i32: 0>} : vector<16x1xi32>
    %c2_i32_22 = arith.constant 2 : i32
    %37 = vector.broadcast %c2_i32_22 : i32 to vector<16x1xi32>
    %38 = arith.cmpi sge, %36, %37 : vector<16x1xi32>
    %c2_i32_23 = arith.constant 2 : i32
    %39 = tpu.dynamic_rotate %19 by %c2_i32_23 dim 0 : vector<16x128xf32>, i32 -> vector<16x128xf32>
    %c0_i32_24 = arith.constant 0 : i32
    %40 = vector.broadcast %c0_i32_24 : i32 to vector<16x1xi32>
    %41 = arith.cmpi eq, %36, %40 : vector<16x1xi32>
    %42 = vector.shape_cast %41 : vector<16x1xi1> to vector<16x1xi1>
    %43 = vector.broadcast %42 : vector<16x1xi1> to vector<16x128xi1>
    %44 = vector.shape_cast %34 : vector<1x128xf32> to vector<1x128xf32>
    %45 = vector.broadcast %44 : vector<1x128xf32> to vector<16x128xf32>
    %46 = vector.shape_cast %33 : vector<1x128xf32> to vector<1x128xf32>
    %47 = vector.broadcast %46 : vector<1x128xf32> to vector<16x128xf32>
    %48 = arith.select %43, %45, %47 : vector<16x128xi1>, vector<16x128xf32>
    %49 = vector.shape_cast %38 : vector<16x1xi1> to vector<16x1xi1>
    %50 = vector.broadcast %49 : vector<16x1xi1> to vector<16x128xi1>
    %51 = arith.select %50, %39, %48 : vector<16x128xi1>, vector<16x128xf32>
    %c1_i32_25 = arith.constant 1 : i32
    %52 = vector.broadcast %c1_i32_25 : i32 to vector<16x1xi32>
    %53 = arith.cmpi sge, %36, %52 : vector<16x1xi32>
    %c1_i32_26 = arith.constant 1 : i32
    %54 = tpu.dynamic_rotate %19 by %c1_i32_26 dim 0 : vector<16x128xf32>, i32 -> vector<16x128xf32>
    %55 = vector.shape_cast %53 : vector<16x1xi1> to vector<16x1xi1>
    %56 = vector.broadcast %55 : vector<16x1xi1> to vector<16x128xi1>
    %57 = vector.shape_cast %33 : vector<1x128xf32> to vector<1x128xf32>
    %58 = vector.broadcast %57 : vector<1x128xf32> to vector<16x128xf32>
    %59 = arith.select %56, %54, %58 : vector<16x128xi1>, vector<16x128xf32>
    %c15_i32 = arith.constant 15 : i32
    %60 = vector.broadcast %c15_i32 : i32 to vector<16x1xi32>
    %61 = arith.cmpi slt, %36, %60 : vector<16x1xi32>
    %c15_i32_27 = arith.constant 15 : i32
    %62 = tpu.dynamic_rotate %19 by %c15_i32_27 dim 0 : vector<16x128xf32>, i32 -> vector<16x128xf32>
    %63 = vector.shape_cast %61 : vector<16x1xi1> to vector<16x1xi1>
    %64 = vector.broadcast %63 : vector<16x1xi1> to vector<16x128xi1>
    %65 = vector.shape_cast %32 : vector<1x128xf32> to vector<1x128xf32>
    %66 = vector.broadcast %65 : vector<1x128xf32> to vector<16x128xf32>
    %67 = arith.select %64, %62, %66 : vector<16x128xi1>, vector<16x128xf32>
    %68 = vector.extract_strided_slice %35 {offsets = [0, 0], sizes = [1, 128], strides = [1, 1]} : vector<4x128xf32> to vector<1x128xf32>
    %69 = vector.broadcast %68 : vector<1x128xf32> to vector<16x128xf32>
    %70 = arith.mulf %51, %69 : vector<16x128xf32>
    %71 = vector.extract_strided_slice %35 {offsets = [1, 0], sizes = [1, 128], strides = [1, 1]} : vector<4x128xf32> to vector<1x128xf32>
    %72 = vector.broadcast %71 : vector<1x128xf32> to vector<16x128xf32>
    %73 = arith.mulf %59, %72 : vector<16x128xf32>
    %74 = arith.addf %70, %73 : vector<16x128xf32>
    %75 = vector.extract_strided_slice %35 {offsets = [2, 0], sizes = [1, 128], strides = [1, 1]} : vector<4x128xf32> to vector<1x128xf32>
    %76 = vector.broadcast %75 : vector<1x128xf32> to vector<16x128xf32>
    %77 = arith.mulf %19, %76 : vector<16x128xf32>
    %78 = arith.addf %74, %77 : vector<16x128xf32>
    %79 = vector.extract_strided_slice %35 {offsets = [3, 0], sizes = [1, 128], strides = [1, 1]} : vector<4x128xf32> to vector<1x128xf32>
    %80 = vector.broadcast %79 : vector<1x128xf32> to vector<16x128xf32>
    %81 = arith.mulf %67, %80 : vector<16x128xf32>
    %82 = arith.addf %78, %81 : vector<16x128xf32>
    %83 = vector.extract_strided_slice %19 {offsets = [8, 0], sizes = [8, 128], strides = [1, 1]} : vector<16x128xf32> to vector<8x128xf32>
    %c0_28 = arith.constant 0 : index
    %c0_29 = arith.constant 0 : index
    %84 = vector.load %arg13[%c0_28, %c0_29] : memref<8x128xf32, #tpu.memory_space<vmem>>, vector<8x128xf32>
    tpu.vector_store %arg13[%c0_28, %c0_29], %83 {strides = array<i32>} : memref<8x128xf32, #tpu.memory_space<vmem>>, vector<8x128xf32>,
    %85 = arith.truncf %82 : vector<16x128xf32> to vector<16x128xbf16>
    %c0_30 = arith.constant 0 : index
    %c0_31 = arith.constant 0 : index
    %86 = vector.load %arg7[%c0_30, %c0_31] : memref<128x256xbf16, #tpu.memory_space<vmem>>, vector<128x256xbf16>
    %cst_32 = arith.constant dense<0.000000e+00> : vector<16x256xf32>
    %87 = tpu.matmul %85, %86, %cst_32 {dimension_numbers = #tpu.dot_dimension_numbers<[1], [0], [0], [1], [0, 0, 1, 1], [], []>} : vector<16x128xbf16>, vector<128x256xbf16>, vector<16x256xf32> -> vector<16x256xf32>
    %c0_33 = arith.constant 0 : index
    %c0_34 = arith.constant 0 : index
    %88 = vector.load %arg8[%c0_33, %c0_34] : memref<1x256xf32, #tpu.memory_space<vmem>>, vector<1x256xf32>
    %89 = vector.broadcast %88 : vector<1x256xf32> to vector<16x256xf32>
    %90 = arith.addf %87, %89 : vector<16x256xf32>
    %91 = vector.extract_strided_slice %90 {offsets = [0, 0], sizes = [16, 128], strides = [1, 1]} : vector<16x256xf32> to vector<16x128xf32>
    %92 = arith.negf %91 : vector<16x128xf32>
    %93 = math.exp %92 : vector<16x128xf32>
    %cst_35 = arith.constant 1.000000e+00 : f32
    %94 = vector.broadcast %cst_35 : f32 to vector<16x128xf32>
    %95 = arith.addf %94, %93 : vector<16x128xf32>
    %96 = arith.divf %94, %95 : vector<16x128xf32>
    %97 = vector.extract_strided_slice %90 {offsets = [0, 128], sizes = [16, 128], strides = [1, 1]} : vector<16x256xf32> to vector<16x128xf32>
    %98 = arith.negf %97 : vector<16x128xf32>
    %99 = math.exp %98 : vector<16x128xf32>
    %cst_36 = arith.constant 1.000000e+00 : f32
    %100 = vector.broadcast %cst_36 : f32 to vector<16x128xf32>
    %101 = arith.addf %100, %99 : vector<16x128xf32>
    %102 = arith.divf %100, %101 : vector<16x128xf32>
    %c0_37 = arith.constant 0 : index
    %c0_38 = arith.constant 0 : index
    %103 = vector.load %arg9[%c0_37, %c0_38] : memref<1x128xf32, #tpu.memory_space<vmem>>, vector<1x128xf32>
    %104 = vector.broadcast %103 : vector<1x128xf32> to vector<16x128xf32>
    %105 = arith.mulf %104, %96 : vector<16x128xf32>
    %106 = math.exp %105 : vector<16x128xf32>
    %107 = arith.mulf %106, %106 : vector<16x128xf32>
    %cst_39 = arith.constant 1.000000e+00 : f32
    %108 = vector.broadcast %cst_39 : f32 to vector<16x128xf32>
    %109 = arith.subf %108, %107 : vector<16x128xf32>
    %110 = math.sqrt %109 : vector<16x128xf32>
    %111 = arith.mulf %102, %82 : vector<16x128xf32>
    %112 = arith.mulf %110, %111 : vector<16x128xf32>
    %c1_i32_40 = arith.constant 1 : i32
    %113 = tpu.dynamic_rotate %106 by %c1_i32_40 dim 0 : vector<16x128xf32>, i32 -> vector<16x128xf32>
    %c1_i32_41 = arith.constant 1 : i32
    %114 = tpu.dynamic_rotate %112 by %c1_i32_41 dim 0 : vector<16x128xf32>, i32 -> vector<16x128xf32>
    %c1_i32_42 = arith.constant 1 : i32
    %115 = vector.broadcast %c1_i32_42 : i32 to vector<16x1xi32>
    %116 = arith.cmpi sge, %36, %115 : vector<16x1xi32>
    %117 = arith.mulf %106, %114 : vector<16x128xf32>
    %118 = arith.addf %112, %117 : vector<16x128xf32>
    %119 = vector.shape_cast %116 : vector<16x1xi1> to vector<16x1xi1>
    %120 = vector.broadcast %119 : vector<16x1xi1> to vector<16x128xi1>
    %121 = arith.select %120, %118, %112 : vector<16x128xi1>, vector<16x128xf32>
    %122 = arith.mulf %106, %113 : vector<16x128xf32>
    %123 = vector.shape_cast %116 : vector<16x1xi1> to vector<16x1xi1>
    %124 = vector.broadcast %123 : vector<16x1xi1> to vector<16x128xi1>
    %125 = arith.select %124, %122, %106 : vector<16x128xi1>, vector<16x128xf32>
    %c2_i32_43 = arith.constant 2 : i32
    %126 = tpu.dynamic_rotate %125 by %c2_i32_43 dim 0 : vector<16x128xf32>, i32 -> vector<16x128xf32>
    %c2_i32_44 = arith.constant 2 : i32
    %127 = tpu.dynamic_rotate %121 by %c2_i32_44 dim 0 : vector<16x128xf32>, i32 -> vector<16x128xf32>
    %c2_i32_45 = arith.constant 2 : i32
    %128 = vector.broadcast %c2_i32_45 : i32 to vector<16x1xi32>
    %129 = arith.cmpi sge, %36, %128 : vector<16x1xi32>
    %130 = arith.mulf %125, %127 : vector<16x128xf32>
    %131 = arith.addf %121, %130 : vector<16x128xf32>
    %132 = vector.shape_cast %129 : vector<16x1xi1> to vector<16x1xi1>
    %133 = vector.broadcast %132 : vector<16x1xi1> to vector<16x128xi1>
    %134 = arith.select %133, %131, %121 : vector<16x128xi1>, vector<16x128xf32>
    %135 = arith.mulf %125, %126 : vector<16x128xf32>
    %136 = vector.shape_cast %129 : vector<16x1xi1> to vector<16x1xi1>
    %137 = vector.broadcast %136 : vector<16x1xi1> to vector<16x128xi1>
    %138 = arith.select %137, %135, %125 : vector<16x128xi1>, vector<16x128xf32>
    %c4_i32 = arith.constant 4 : i32
    %139 = tpu.dynamic_rotate %138 by %c4_i32 dim 0 : vector<16x128xf32>, i32 -> vector<16x128xf32>
    %c4_i32_46 = arith.constant 4 : i32
    %140 = tpu.dynamic_rotate %134 by %c4_i32_46 dim 0 : vector<16x128xf32>, i32 -> vector<16x128xf32>
    %c4_i32_47 = arith.constant 4 : i32
    %141 = vector.broadcast %c4_i32_47 : i32 to vector<16x1xi32>
    %142 = arith.cmpi sge, %36, %141 : vector<16x1xi32>
    %143 = arith.mulf %138, %140 : vector<16x128xf32>
    %144 = arith.addf %134, %143 : vector<16x128xf32>
    %145 = vector.shape_cast %142 : vector<16x1xi1> to vector<16x1xi1>
    %146 = vector.broadcast %145 : vector<16x1xi1> to vector<16x128xi1>
    %147 = arith.select %146, %144, %134 : vector<16x128xi1>, vector<16x128xf32>
    %148 = arith.mulf %138, %139 : vector<16x128xf32>
    %149 = vector.shape_cast %142 : vector<16x1xi1> to vector<16x1xi1>
    %150 = vector.broadcast %149 : vector<16x1xi1> to vector<16x128xi1>
    %151 = arith.select %150, %148, %138 : vector<16x128xi1>, vector<16x128xf32>
    %c8_i32 = arith.constant 8 : i32
    %152 = tpu.dynamic_rotate %151 by %c8_i32 dim 0 : vector<16x128xf32>, i32 -> vector<16x128xf32>
    %c8_i32_48 = arith.constant 8 : i32
    %153 = tpu.dynamic_rotate %147 by %c8_i32_48 dim 0 : vector<16x128xf32>, i32 -> vector<16x128xf32>
    %c8_i32_49 = arith.constant 8 : i32
    %154 = vector.broadcast %c8_i32_49 : i32 to vector<16x1xi32>
    %155 = arith.cmpi sge, %36, %154 : vector<16x1xi32>
    %156 = arith.mulf %151, %153 : vector<16x128xf32>
    %157 = arith.addf %147, %156 : vector<16x128xf32>
    %158 = vector.shape_cast %155 : vector<16x1xi1> to vector<16x1xi1>
    %159 = vector.broadcast %158 : vector<16x1xi1> to vector<16x128xi1>
    %160 = arith.select %159, %157, %147 : vector<16x128xi1>, vector<16x128xf32>
    %161 = arith.mulf %151, %152 : vector<16x128xf32>
    %162 = vector.shape_cast %155 : vector<16x1xi1> to vector<16x1xi1>
    %163 = vector.broadcast %162 : vector<16x1xi1> to vector<16x128xi1>
    %164 = arith.select %163, %161, %151 : vector<16x128xi1>, vector<16x128xf32>
    %c0_50 = arith.constant 0 : index
    %c0_51 = arith.constant 0 : index
    %165 = vector.load %arg14[%c0_50, %c0_51] : memref<1x128xf32, #tpu.memory_space<vmem>>, vector<1x128xf32>
    %166 = vector.broadcast %165 : vector<1x128xf32> to vector<16x128xf32>
    %167 = arith.mulf %164, %166 : vector<16x128xf32>
    %168 = arith.addf %160, %167 : vector<16x128xf32>
    %169 = vector.extract_strided_slice %168 {offsets = [15, 0], sizes = [1, 128], strides = [1, 1]} : vector<16x128xf32> to vector<1x128xf32>
    %c0_52 = arith.constant 0 : index
    %c0_53 = arith.constant 0 : index
    %170 = vector.load %arg14[%c0_52, %c0_53] : memref<1x128xf32, #tpu.memory_space<vmem>>, vector<1x128xf32>
    tpu.vector_store %arg14[%c0_52, %c0_53], %169 {strides = array<i32>} : memref<1x128xf32, #tpu.memory_space<vmem>>, vector<1x128xf32>,
    %171 = arith.mulf %18, %168 : vector<16x128xf32>
    %172 = arith.truncf %171 : vector<16x128xf32> to vector<16x128xbf16>
    %c0_54 = arith.constant 0 : index
    %c0_55 = arith.constant 0 : index
    %173 = vector.load %arg10[%c0_54, %c0_55] : memref<128x128xbf16, #tpu.memory_space<vmem>>, vector<128x128xbf16>
    %cst_56 = arith.constant dense<0.000000e+00> : vector<16x128xf32>
    %174 = tpu.matmul %172, %173, %cst_56 {dimension_numbers = #tpu.dot_dimension_numbers<[1], [0], [0], [1], [0, 0, 1, 1], [], []>} : vector<16x128xbf16>, vector<128x128xbf16>, vector<16x128xf32> -> vector<16x128xf32>
    %c0_57 = arith.constant 0 : index
    %c0_58 = arith.constant 0 : index
    %175 = vector.load %arg11[%c0_57, %c0_58] : memref<1x128xf32, #tpu.memory_space<vmem>>, vector<1x128xf32>
    %176 = vector.broadcast %175 : vector<1x128xf32> to vector<16x128xf32>
    %177 = arith.addf %174, %176 : vector<16x128xf32>
    %c0_59 = arith.constant 0 : index
    %c0_60 = arith.constant 0 : index
    %c0_61 = arith.constant 0 : index
    %178 = vector.load %arg12[%c0_59, %c0_60, %c0_61] : memref<1x16x128xf32, #tpu.memory_space<vmem>>, vector<1x16x128xf32>
    %179 = vector.shape_cast %178 : vector<1x16x128xf32> to vector<16x128xf32>
    %180 = vector.shape_cast %177 : vector<16x128xf32> to vector<1x16x128xf32>
    tpu.vector_store %arg12[%c0_59, %c0_60, %c0_61], %180 {strides = array<i32>} : memref<1x16x128xf32, #tpu.memory_space<vmem>>, vector<1x16x128xf32>,
    return
  }
  func.func @transform_0(%arg0: i32, %arg1: i32) -> (i32, i32, i32) {
    %c0_i32 = arith.constant 0 : i32
    %c0_i32_0 = arith.constant 0 : i32
    return %arg0, %arg1, %c0_i32 : i32, i32, i32
  }
  func.func @transform_1(%arg0: i32, %arg1: i32) -> (i32, i32, i32) {
    %c1_i32 = arith.constant 1 : i32
    %0 = arith.addi %arg1, %c1_i32 : i32
    %c2_i32 = arith.constant 2 : i32
    %1 = arith.muli %0, %c2_i32 : i32
    %c3_i32 = arith.constant 3 : i32
    %2 = arith.minsi %1, %c3_i32 : i32
    %c0_i32 = arith.constant 0 : i32
    %c0_i32_0 = arith.constant 0 : i32
    return %arg0, %2, %c0_i32 : i32, i32, i32
  }
  func.func @transform_2(%arg0: i32, %arg1: i32) -> (i32, i32) {
    %c0_i32 = arith.constant 0 : i32
    %c0_i32_0 = arith.constant 0 : i32
    %c0_i32_1 = arith.constant 0 : i32
    return %c0_i32, %c0_i32_0 : i32, i32
  }
  func.func @transform_3(%arg0: i32, %arg1: i32) -> (i32, i32) {
    %c0_i32 = arith.constant 0 : i32
    %c0_i32_0 = arith.constant 0 : i32
    %c0_i32_1 = arith.constant 0 : i32
    return %c0_i32, %c0_i32_0 : i32, i32
  }
  func.func @transform_4(%arg0: i32, %arg1: i32) -> (i32, i32) {
    %c0_i32 = arith.constant 0 : i32
    %c0_i32_0 = arith.constant 0 : i32
    %c0_i32_1 = arith.constant 0 : i32
    return %c0_i32, %c0_i32_0 : i32, i32
  }
  func.func @transform_5(%arg0: i32, %arg1: i32) -> (i32, i32) {
    %c0_i32 = arith.constant 0 : i32
    %c0_i32_0 = arith.constant 0 : i32
    %c0_i32_1 = arith.constant 0 : i32
    return %c0_i32, %c0_i32_0 : i32, i32
  }
  func.func @transform_6(%arg0: i32, %arg1: i32) -> (i32, i32) {
    %c0_i32 = arith.constant 0 : i32
    %c0_i32_0 = arith.constant 0 : i32
    %c0_i32_1 = arith.constant 0 : i32
    return %c0_i32, %c0_i32_0 : i32, i32
  }
  func.func @transform_7(%arg0: i32, %arg1: i32) -> (i32, i32) {
    %c0_i32 = arith.constant 0 : i32
    %c0_i32_0 = arith.constant 0 : i32
    %c0_i32_1 = arith.constant 0 : i32
    return %c0_i32, %c0_i32_0 : i32, i32
  }
  func.func @transform_8(%arg0: i32, %arg1: i32) -> (i32, i32) {
    %c0_i32 = arith.constant 0 : i32
    %c0_i32_0 = arith.constant 0 : i32
    %c0_i32_1 = arith.constant 0 : i32
    return %c0_i32, %c0_i32_0 : i32, i32
  }
  func.func @transform_9(%arg0: i32, %arg1: i32) -> (i32, i32) {
    %c0_i32 = arith.constant 0 : i32
    %c0_i32_0 = arith.constant 0 : i32
    %c0_i32_1 = arith.constant 0 : i32
    return %c0_i32, %c0_i32_0 : i32, i32
  }
  func.func @transform_10(%arg0: i32, %arg1: i32) -> (i32, i32, i32) {
    %c0_i32 = arith.constant 0 : i32
    %c0_i32_0 = arith.constant 0 : i32
    return %arg0, %arg1, %c0_i32 : i32, i32, i32
  }
}

</mosaic_0001>

<llo_original>
// kernel: tpu_custom_call.1
$region0: #{tpu_custom_call.1}
  #allocation0 [shape = 'u32[]', space=smem, size = 0x4, offset = 0x4, fixed_abs, tag = 'smem constant byte address 0x4 - core index']
  #allocation1 [shape = 'u32[144,128]{1,0:T(1,128)}', space=vmem, size = 0x12000, scoped, tag = 'internal scratch']
  #allocation2 [shape = 'f32[8,128]{1,0:T(8,128)}', space=vmem, size = 0x1000, scoped, tag = 'scratch operand']
  #allocation3 [shape = 'f32[1,128]{1,0:T(1,128)}', space=vmem, size = 0x200, scoped, tag = 'scratch operand']
  %s0 = inlined_call_operand.hbm [shape: bf16[2,32,128], index: 0, kind: input, shape index: {}]
  %s1 = inlined_call_operand.hbm [shape: bf16[2,32,128], index: 1, kind: input, shape index: {}]
  %s2 = inlined_call_operand.hbm [shape: bf16[128,256], index: 2, kind: input, shape index: {}]
  %s3 = inlined_call_operand.vmem [shape: f32[1,256], index: 3, kind: input, shape index: {}]
  %s4 = inlined_call_operand.vmem [shape: f32[4,128], index: 4, kind: input, shape index: {}]
  %s5 = inlined_call_operand.hbm [shape: bf16[128,256], index: 5, kind: input, shape index: {}]
  %s6 = inlined_call_operand.vmem [shape: f32[1,256], index: 6, kind: input, shape index: {}]
  %s7 = inlined_call_operand.vmem [shape: f32[1,128], index: 7, kind: input, shape index: {}]
  %s8 = inlined_call_operand.hbm [shape: bf16[128,128], index: 8, kind: input, shape index: {}]
  %s9 = inlined_call_operand.vmem [shape: f32[1,128], index: 9, kind: input, shape index: {}]
  %s10 = inlined_call_operand.hbm [shape: f32[2,32,128], index: 10, kind: output, shape index: {}]
  %s11 = sld [smem:[#allocation0]]
  $region97: #{tpu_custom_call.1} parent=0
    _
  %s13 = ssub.s32 1, %s11
  %s14 = scalar_select 0, %s13, %s11
  $region1: #{tpu_custom_call.1} parent=0
    #allocation4 [shape = 'u8[8192]{0}', space=vmem, size = 0x2000, scoped, tag = 'input window, operand 0']
    #allocation5 [shape = 's32[2]{0}', space=sflag, size = 0x8, scoped, tag = 'scoped memory for tpu_custom_call.1']
    #allocation6 [shape = 's32[2]{0}', space=sflag, size = 0x8, scoped, tag = 'scoped memory for tpu_custom_call.1']
    #allocation7 [shape = 'u8[4096]{0}', space=vmem, size = 0x1000, scoped, tag = 'input window, operand 1']
    #allocation8 [shape = 's32[2]{0}', space=sflag, size = 0x8, scoped, tag = 'scoped memory for tpu_custom_call.1']
    #allocation9 [shape = 'u8[65536]{0}', space=vmem, size = 0x10000, scoped, tag = 'input window, operand 2, single buffered']
    #allocation10 [shape = 'u8[65536]{0}', space=vmem, size = 0x10000, scoped, tag = 'input window, operand 5, single buffered']
    #allocation11 [shape = 's32[1]{0}', space=sflag, size = 0x4, scoped, tag = 'scoped memory for tpu_custom_call.1']
    #allocation12 [shape = 'u8[32768]{0}', space=vmem, size = 0x8000, scoped, tag = 'input window, operand 8, single buffered']
    #allocation13 [shape = 'u8[16384]{0}', space=vmem, size = 0x4000, scoped, tag = 'output window, operand 0']
    %15 = vsyncpa [#allocation5], 0
    %s16 = scalar_lea.sflag [#allocation5], 1
    %17 = vsyncpa %s16, 0
    %18 = vsyncpa [#allocation8], 0
    %s19 = scalar_lea.sflag [#allocation8], 1
    %20 = vsyncpa %s19, 0
    %21 = vsyncpa [#allocation11], 0
    %22 = vsyncpa [#allocation6], 0
    %s23 = scalar_lea.sflag [#allocation6], 1
    %24 = vsyncpa %s23, 0
    loop: start=0, step=1, limit=6
    $region2: #{tpu_custom_call.1} parent=1 // loop_pre_header
      _
    $region3: #{tpu_custom_call.1} parent=1 // loop_header
      %s26 = sphi 0, %s30
      %p27 = scmp.ge.s32.totalorder %s26, 6
      %s33 = sphi 0, %s45
      %s34 = sphi 0, %s41
      %s35 = sphi 0, %s33
      %s36 = sphi 0, %s34
      %s37 = sphi 0, %s35
      %s38 = sphi 0, %s36
      %s50 = sphi 0, %s52
      %s53 = sphi 0, %s50
      %s54 = sphi 0, %s53
      %s70 = sphi 0, %s54
      %s86 = sphi 0, %s88
      %s89 = sphi 0, %s86
      %s90 = sphi 0, %s89
      %s106 = sphi 0, %s90
      %s110 = sphi 0, %s110
      %s112 = sphi 0, %s110
      %s113 = sphi 0, %s112
      %s127 = sphi 0, %s113
      %s131 = sphi 0, %s131
      %s133 = sphi 0, %s131
      %s134 = sphi 0, %s133
      %s148 = sphi 0, %s134
      %s152 = sphi 0, %s152
      %s154 = sphi 0, %s152
      %s155 = sphi 0, %s154
      %s169 = sphi 0, %s155
      %s173 = sphi 0, %s173
      %s175 = sphi 0, %s173
      %s176 = sphi 0, %s175
      %s190 = sphi 0, %s176
      %s194 = sphi 0, %s194
      %s196 = sphi 0, %s194
      %s197 = sphi 0, %s196
      %s211 = sphi 0, %s197
      %s215 = sphi 0, %s215
      %s217 = sphi 0, %s215
      %s218 = sphi 0, %s217
      %s232 = sphi 0, %s218
      %s236 = sphi 0, %s236
      %s238 = sphi 0, %s236
      %s239 = sphi 0, %s238
      %s253 = sphi 0, %s239
      %s257 = sphi 0, %s257
      %s259 = sphi 0, %s257
      %s260 = sphi 0, %s259
      %s274 = sphi 0, %s260
      %s282 = sphi 0, %s284
      %s285 = sphi 0, %s282
      %s286 = sphi 0, %s285
      %s302 = sphi 0, %s286
    $region4: #{tpu_custom_call.1} parent=1 // loop_header_branch
      %29 = sbr.rel (%p27) target = $region8
    $region5: #{tpu_custom_call.1} parent=1 // loop_body
      %s31 = ssub.s32 %s26, 1
      %s32 = ssub.s32 %s26, 2
      %s39 = sadd.s32 1, %s34
      %p40 = scmp.ge.s32.totalorder %s39, 2
      %s41 = scalar_select %p40, 0, %s39
      %s42 = sadd.s32 1, %s33
      %s43 = scalar_select %p40, %s42, %s33
      %p44 = scmp.ge.s32.totalorder %s43, 2
      %s45 = scalar_select %p44, 0, %s43
      %s46 = ssub.s32 %s33, %s45
      %s47 = ssub.s32 %s34, %s41
      %s48 = sor.u32 %s46, %s47
      %p49 = scmp.eq.s32.totalorder %s48, 0
      %s51 = sadd.s32 %s50, 1
      %s52 = scalar_select %p49, %s50, %s51
      %p55 = pneg %p49
      %p56 = scmp.eq.s32.totalorder %s26, 3
      %p57 = por %p55, %p56
      %p58 = scmp.ne.s32.totalorder %s50, %s53
      %p59 = scmp.eq.s32.totalorder %s26, 0
      %p60 = por %p58, %p59
      %p61 = scmp.ne.s32.totalorder %s50, %s53
      %p62 = scmp.eq.s32.totalorder %s31, 3
      %p63 = por %p61, %p62
      %p64 = scmp.ne.s32.totalorder %s53, %s54
      %p65 = scmp.eq.s32.totalorder %s31, 0
      %p66 = por %p64, %p65
      %p67 = scmp.ne.s32.totalorder %s53, %s54
      %p68 = scmp.eq.s32.totalorder %s32, 3
      %p69 = por %p67, %p68
      %p71 = scmp.ne.s32.totalorder %s54, %s70
      %p72 = scmp.eq.s32.totalorder %s32, 0
      %p73 = por %p71, %p72
      %s74 = sadd.s32 %s34, 1
      %s75 = smul.u32 %s74, 2
      %p76 = scmp.lt.s32.totalorder %s75, 3
      %s77 = scalar_select %p76, %s75, 3
      %s78 = sadd.s32 %s41, 1
      %s79 = smul.u32 %s78, 2
      %p80 = scmp.lt.s32.totalorder %s79, 3
      %s81 = scalar_select %p80, %s79, 3
      %s82 = ssub.s32 %s33, %s45
      %s83 = ssub.s32 %s77, %s81
      %s84 = sor.u32 %s82, %s83
      %p85 = scmp.eq.s32.totalorder %s84, 0
      %s87 = sadd.s32 %s86, 1
      %s88 = scalar_select %p85, %s86, %s87
      %p91 = pneg %p85
      %p92 = scmp.eq.s32.totalorder %s26, 3
      %p93 = por %p91, %p92
      %p94 = scmp.ne.s32.totalorder %s86, %s89
      %p95 = scmp.eq.s32.totalorder %s26, 0
      %p96 = por %p94, %p95
      %p97 = scmp.ne.s32.totalorder %s86, %s89
      %p98 = scmp.eq.s32.totalorder %s31, 3
      %p99 = por %p97, %p98
      %p100 = scmp.ne.s32.totalorder %s89, %s90
      %p101 = scmp.eq.s32.totalorder %s31, 0
      %p102 = por %p100, %p101
      %p103 = scmp.ne.s32.totalorder %s89, %s90
      %p104 = scmp.eq.s32.totalorder %s32, 3
      %p105 = por %p103, %p104
      %p107 = scmp.ne.s32.totalorder %s90, %s106
      %p108 = scmp.eq.s32.totalorder %s32, 0
      %p109 = por %p107, %p108
      %s111 = sadd.s32 %s110, 1
      %p114 = scmp.eq.s32.totalorder %s26, 3
      %p115 = scmp.ne.s32.totalorder %s110, %s112
      %p116 = scmp.eq.s32.totalorder %s26, 0
      %p117 = por %p115, %p116
      %p118 = scmp.ne.s32.totalorder %s110, %s112
      %p119 = scmp.eq.s32.totalorder %s31, 3
      %p120 = por %p118, %p119
      %p121 = scmp.ne.s32.totalorder %s112, %s113
      %p122 = scmp.eq.s32.totalorder %s31, 0
      %p123 = por %p121, %p122
      %p124 = scmp.ne.s32.totalorder %s112, %s113
      %p125 = scmp.eq.s32.totalorder %s32, 3
      %p126 = por %p124, %p125
      %p128 = scmp.ne.s32.totalorder %s113, %s127
      %p129 = scmp.eq.s32.totalorder %s32, 0
      %p130 = por %p128, %p129
      %s132 = sadd.s32 %s131, 1
      %p135 = scmp.eq.s32.totalorder %s26, 3
      %p136 = scmp.ne.s32.totalorder %s131, %s133
      %p137 = scmp.eq.s32.totalorder %s26, 0
      %p138 = por %p136, %p137
      %p139 = scmp.ne.s32.totalorder %s131, %s133
      %p140 = scmp.eq.s32.totalorder %s31, 3
      %p141 = por %p139, %p140
      %p142 = scmp.ne.s32.totalorder %s133, %s134
      %p143 = scmp.eq.s32.totalorder %s31, 0
      %p144 = por %p142, %p143
      %p145 = scmp.ne.s32.totalorder %s133, %s134
      %p146 = scmp.eq.s32.totalorder %s32, 3
      %p147 = por %p145, %p146
      %p149 = scmp.ne.s32.totalorder %s134, %s148
      %p150 = scmp.eq.s32.totalorder %s32, 0
      %p151 = por %p149, %p150
      %s153 = sadd.s32 %s152, 1
      %p156 = scmp.eq.s32.totalorder %s26, 3
      %p157 = scmp.ne.s32.totalorder %s152, %s154
      %p158 = scmp.eq.s32.totalorder %s26, 0
      %p159 = por %p157, %p158
      %p160 = scmp.ne.s32.totalorder %s152, %s154
      %p161 = scmp.eq.s32.totalorder %s31, 3
      %p162 = por %p160, %p161
      %p163 = scmp.ne.s32.totalorder %s154, %s155
      %p164 = scmp.eq.s32.totalorder %s31, 0
      %p165 = por %p163, %p164
      %p166 = scmp.ne.s32.totalorder %s154, %s155
      %p167 = scmp.eq.s32.totalorder %s32, 3
      %p168 = por %p166, %p167
      %p170 = scmp.ne.s32.totalorder %s155, %s169
      %p171 = scmp.eq.s32.totalorder %s32, 0
      %p172 = por %p170, %p171
      %s174 = sadd.s32 %s173, 1
      %p177 = scmp.eq.s32.totalorder %s26, 3
      %p178 = scmp.ne.s32.totalorder %s173, %s175
      %p179 = scmp.eq.s32.totalorder %s26, 0
      %p180 = por %p178, %p179
      %p181 = scmp.ne.s32.totalorder %s173, %s175
      %p182 = scmp.eq.s32.totalorder %s31, 3
      %p183 = por %p181, %p182
      %p184 = scmp.ne.s32.totalorder %s175, %s176
      %p185 = scmp.eq.s32.totalorder %s31, 0
      %p186 = por %p184, %p185
      %p187 = scmp.ne.s32.totalorder %s175, %s176
      %p188 = scmp.eq.s32.totalorder %s32, 3
      %p189 = por %p187, %p188
      %p191 = scmp.ne.s32.totalorder %s176, %s190
      %p192 = scmp.eq.s32.totalorder %s32, 0
      %p193 = por %p191, %p192
      %s195 = sadd.s32 %s194, 1
      %p198 = scmp.eq.s32.totalorder %s26, 3
      %p199 = scmp.ne.s32.totalorder %s194, %s196
      %p200 = scmp.eq.s32.totalorder %s26, 0
      %p201 = por %p199, %p200
      %p202 = scmp.ne.s32.totalorder %s194, %s196
      %p203 = scmp.eq.s32.totalorder %s31, 3
      %p204 = por %p202, %p203
      %p205 = scmp.ne.s32.totalorder %s196, %s197
      %p206 = scmp.eq.s32.totalorder %s31, 0
      %p207 = por %p205, %p206
      %p208 = scmp.ne.s32.totalorder %s196, %s197
      %p209 = scmp.eq.s32.totalorder %s32, 3
      %p210 = por %p208, %p209
      %p212 = scmp.ne.s32.totalorder %s197, %s211
      %p213 = scmp.eq.s32.totalorder %s32, 0
      %p214 = por %p212, %p213
      %s216 = sadd.s32 %s215, 1
      %p219 = scmp.eq.s32.totalorder %s26, 3
      %p220 = scmp.ne.s32.totalorder %s215, %s217
      %p221 = scmp.eq.s32.totalorder %s26, 0
      %p222 = por %p220, %p221
      %p223 = scmp.ne.s32.totalorder %s215, %s217
      %p224 = scmp.eq.s32.totalorder %s31, 3
      %p225 = por %p223, %p224
      %p226 = scmp.ne.s32.totalorder %s217, %s218
      %p227 = scmp.eq.s32.totalorder %s31, 0
      %p228 = por %p226, %p227
      %p229 = scmp.ne.s32.totalorder %s217, %s218
      %p230 = scmp.eq.s32.totalorder %s32, 3
      %p231 = por %p229, %p230
      %p233 = scmp.ne.s32.totalorder %s218, %s232
      %p234 = scmp.eq.s32.totalorder %s32, 0
      %p235 = por %p233, %p234
      %s237 = sadd.s32 %s236, 1
      %p240 = scmp.eq.s32.totalorder %s26, 3
      %p241 = scmp.ne.s32.totalorder %s236, %s238
      %p242 = scmp.eq.s32.totalorder %s26, 0
      %p243 = por %p241, %p242
      %p244 = scmp.ne.s32.totalorder %s236, %s238
      %p245 = scmp.eq.s32.totalorder %s31, 3
      %p246 = por %p244, %p245
      %p247 = scmp.ne.s32.totalorder %s238, %s239
      %p248 = scmp.eq.s32.totalorder %s31, 0
      %p249 = por %p247, %p248
      %p250 = scmp.ne.s32.totalorder %s238, %s239
      %p251 = scmp.eq.s32.totalorder %s32, 3
      %p252 = por %p250, %p251
      %p254 = scmp.ne.s32.totalorder %s239, %s253
      %p255 = scmp.eq.s32.totalorder %s32, 0
      %p256 = por %p254, %p255
      %s258 = sadd.s32 %s257, 1
      %p261 = scmp.eq.s32.totalorder %s26, 3
      %p262 = scmp.ne.s32.totalorder %s257, %s259
      %p263 = scmp.eq.s32.totalorder %s26, 0
      %p264 = por %p262, %p263
      %p265 = scmp.ne.s32.totalorder %s257, %s259
      %p266 = scmp.eq.s32.totalorder %s31, 3
      %p267 = por %p265, %p266
      %p268 = scmp.ne.s32.totalorder %s259, %s260
      %p269 = scmp.eq.s32.totalorder %s31, 0
      %p270 = por %p268, %p269
      %p271 = scmp.ne.s32.totalorder %s259, %s260
      %p272 = scmp.eq.s32.totalorder %s32, 3
      %p273 = por %p271, %p272
      %p275 = scmp.ne.s32.totalorder %s260, %s274
      %p276 = scmp.eq.s32.totalorder %s32, 0
      %p277 = por %p275, %p276
      %s278 = ssub.s32 %s33, %s45
      %s279 = ssub.s32 %s34, %s41
      %s280 = sor.u32 %s278, %s279
      %p281 = scmp.eq.s32.totalorder %s280, 0
      %s283 = sadd.s32 %s282, 1
      %s284 = scalar_select %p281, %s282, %s283
      %p287 = pneg %p281
      %p288 = scmp.eq.s32.totalorder %s26, 3
      %p289 = por %p287, %p288
      %p290 = scmp.ne.s32.totalorder %s282, %s285
      %p291 = scmp.eq.s32.totalorder %s26, 0
      %p292 = por %p290, %p291
      %p293 = scmp.ne.s32.totalorder %s282, %s285
      %p294 = scmp.eq.s32.totalorder %s31, 3
      %p295 = por %p293, %p294
      %p296 = scmp.ne.s32.totalorder %s285, %s286
      %p297 = scmp.eq.s32.totalorder %s31, 0
      %p298 = por %p296, %p297
      %p299 = scmp.ne.s32.totalorder %s285, %s286
      %p300 = scmp.eq.s32.totalorder %s32, 3
      %p301 = por %p299, %p300
      %p303 = scmp.ne.s32.totalorder %s286, %s302
      %p304 = scmp.eq.s32.totalorder %s32, 0
      %p305 = por %p303, %p304
      %p306 = scmp.le.s32.totalorder 1, %s26
      %p307 = scmp.lt.s32.totalorder %s26, 5
      %p308 = pnand %p306, %p307
      %p309 = pneg %p308
      // Predicated region
      $region9: #{tpu_custom_call.1} parent=5 // pred_check
        _
      $region10: #{tpu_custom_call.1} parent=5 // pred_check_branch
        %311 = sbr.rel (%p308) target = $region12
      $region11: #{tpu_custom_call.1} parent=5 // pred_region
        %s312 = ssub.s32 %s26, 1
        // Predicated region
        $region13: #{tpu_custom_call.1} parent=11 // pred_check
          %p313 = pneg %p123
        $region14: #{tpu_custom_call.1} parent=11 // pred_check_branch
          %315 = sbr.rel (%p313) target = $region16
        $region15: #{tpu_custom_call.1} parent=11 // pred_region
          %s317 = ssub.s32 2048, 2048
          %318 = vsyncadd [#allocation8], %s317
          %s319 = sshll.u32 [#allocation9], 4
          %s320 = int_to_ptr.vmem [resolvable:$true] %s319
          %325 = dma.hbm_to_vmem [thread:$0]  %s2, 2048, %s320, [#allocation8], 128, 128, 8
        $region16: #{tpu_custom_call.1} parent=11 // pred_fallthru
          _
        // Predicated region
        $region17: #{tpu_custom_call.1} parent=11 // pred_check
          %p326 = pneg %p144
        $region18: #{tpu_custom_call.1} parent=11 // pred_check_branch
          %328 = sbr.rel (%p326) target = $region20
        $region19: #{tpu_custom_call.1} parent=11 // pred_region
          _
        $region20: #{tpu_custom_call.1} parent=11 // pred_fallthru
          _
        // Predicated region
        $region21: #{tpu_custom_call.1} parent=11 // pred_check
          %p329 = pneg %p165
        $region22: #{tpu_custom_call.1} parent=11 // pred_check_branch
          %331 = sbr.rel (%p329) target = $region24
        $region23: #{tpu_custom_call.1} parent=11 // pred_region
          _
        $region24: #{tpu_custom_call.1} parent=11 // pred_fallthru
          _
        // Predicated region
        $region25: #{tpu_custom_call.1} parent=11 // pred_check
          %p332 = pneg %p186
        $region26: #{tpu_custom_call.1} parent=11 // pred_check_branch
          %334 = sbr.rel (%p332) target = $region28
        $region27: #{tpu_custom_call.1} parent=11 // pred_region
          %s336 = ssub.s32 2048, 2048
          %337 = vsyncadd [#allocation11], %s336
          %s338 = sshll.u32 [#allocation10], 4
          %s339 = int_to_ptr.vmem [resolvable:$true] %s338
          %344 = dma.hbm_to_vmem [thread:$0]  %s5, 2048, %s339, [#allocation11], 128, 128, 8
        $region28: #{tpu_custom_call.1} parent=11 // pred_fallthru
          _
        // Predicated region
        $region29: #{tpu_custom_call.1} parent=11 // pred_check
          %p345 = pneg %p207
        $region30: #{tpu_custom_call.1} parent=11 // pred_check_branch
          %347 = sbr.rel (%p345) target = $region32
        $region31: #{tpu_custom_call.1} parent=11 // pred_region
          _
        $region32: #{tpu_custom_call.1} parent=11 // pred_fallthru
          _
        // Predicated region
        $region33: #{tpu_custom_call.1} parent=11 // pred_check
          %p348 = pneg %p228
        $region34: #{tpu_custom_call.1} parent=11 // pred_check_branch
          %350 = sbr.rel (%p348) target = $region36
        $region35: #{tpu_custom_call.1} parent=11 // pred_region
          _
        $region36: #{tpu_custom_call.1} parent=11 // pred_fallthru
          _
        // Predicated region
        $region37: #{tpu_custom_call.1} parent=11 // pred_check
          %p351 = pneg %p249
        $region38: #{tpu_custom_call.1} parent=11 // pred_check_branch
          %353 = sbr.rel (%p351) target = $region40
        $region39: #{tpu_custom_call.1} parent=11 // pred_region
          %s355 = ssub.s32 1024, 1024
          %356 = vsyncadd [#allocation11], %s355
          %s357 = sshll.u32 [#allocation12], 4
          %s358 = int_to_ptr.vmem [resolvable:$true] %s357
          %363 = dma.hbm_to_vmem [thread:$0]  %s8, 1024, %s358, [#allocation11], 64, 64, 4
        $region40: #{tpu_custom_call.1} parent=11 // pred_fallthru
          _
        // Predicated region
        $region41: #{tpu_custom_call.1} parent=11 // pred_check
          %p364 = pneg %p270
        $region42: #{tpu_custom_call.1} parent=11 // pred_check_branch
          %366 = sbr.rel (%p364) target = $region44
        $region43: #{tpu_custom_call.1} parent=11 // pred_region
          _
        $region44: #{tpu_custom_call.1} parent=11 // pred_fallthru
          _
      $region12: #{tpu_custom_call.1} parent=5 // pred_fallthru
        _
      %p367 = scmp.lt.s32.totalorder %s26, 4
      // Predicated region
      $region45: #{tpu_custom_call.1} parent=5 // pred_check
        %p368 = pneg %p367
      $region46: #{tpu_custom_call.1} parent=5 // pred_check_branch
        %370 = sbr.rel (%p368) target = $region48
      $region47: #{tpu_custom_call.1} parent=5 // pred_region
        // Predicated region
        $region49: #{tpu_custom_call.1} parent=47 // pred_check
          %p371 = pneg %p60
        $region50: #{tpu_custom_call.1} parent=47 // pred_check_branch
          %373 = sbr.rel (%p371) target = $region52
        $region51: #{tpu_custom_call.1} parent=47 // pred_region
          %s374 = sand.u32 %s50, 1
          %s375 = scalar_lea.sflag [#allocation5], %s374
          %s376 = sand.u32 %s50, 1
          %s377 = smul.addr %s376, 8
          %s378 = scalar_lea.vmem [#allocation4], %s377
          %s379 = smul.u32 2, %s34
          %s381 = ssub.s32 128, 128
          %382 = vsyncadd %s375, %s381
          %s383 = smul.addr %s33, 4
          %s384 = sadd.s32 %s379, %s383
          %s385 = smul.addr %s384, 64
          %s386 = scalar_lea.hbm %s0, %s385
          %s387 = sshll.u32 %s378, 4
          %s388 = int_to_ptr.vmem [resolvable:$true] %s387
          %393 = dma.hbm_to_vmem [thread:$0]  %s386, 128, %s388, %s375, 64, 64, 4
        $region52: #{tpu_custom_call.1} parent=47 // pred_fallthru
          _
        // Predicated region
        $region53: #{tpu_custom_call.1} parent=47 // pred_check
          %p394 = pneg %p96
        $region54: #{tpu_custom_call.1} parent=47 // pred_check_branch
          %396 = sbr.rel (%p394) target = $region56
        $region55: #{tpu_custom_call.1} parent=47 // pred_region
          %s397 = sand.u32 %s26, 1
          %s398 = scalar_lea.sflag [#allocation8], %s397
          %s399 = sand.u32 %s86, 1
          %s400 = smul.addr %s399, 4
          %s401 = scalar_lea.vmem [#allocation7], %s400
          %s402 = sadd.s32 %s34, 1
          %s403 = smul.u32 %s402, 2
          %p404 = scmp.lt.s32.totalorder %s403, 3
          %s405 = scalar_select %p404, %s403, 3
          %s407 = ssub.s32 64, 64
          %408 = vsyncadd %s398, %s407
          %s409 = smul.addr %s33, 4
          %s410 = sadd.s32 %s405, %s409
          %s411 = smul.addr %s410, 64
          %s412 = scalar_lea.hbm %s1, %s411
          %s414 = sshll.u32 %s401, 4
          %s415 = int_to_ptr.vmem [resolvable:$true] %s414
          %417 = dma.hbm_to_vmem [thread:$0]  %s412, 64, %s415, %s398
        $region56: #{tpu_custom_call.1} parent=47 // pred_fallthru
          _
      $region48: #{tpu_custom_call.1} parent=5 // pred_fallthru
        _
      %p418 = scmp.le.s32.totalorder 1, %s26
      %p419 = scmp.lt.s32.totalorder %s26, 5
      %p420 = pnand %p418, %p419
      %p421 = pneg %p420
      // Predicated region
      $region57: #{tpu_custom_call.1} parent=5 // pred_check
        _
      $region58: #{tpu_custom_call.1} parent=5 // pred_check_branch
        %423 = sbr.rel (%p420) target = $region60
      $region59: #{tpu_custom_call.1} parent=5 // pred_region
        %s424 = ssub.s32 %s26, 1
        %s425 = sand.u32 %s53, 1
        %s426 = scalar_lea.sflag [#allocation5], %s425
        %s427 = sand.u32 %s53, 1
        %s428 = smul.addr %s427, 8
        %s429 = scalar_lea.vmem [#allocation4], %s428
        // Predicated region
        $region61: #{tpu_custom_call.1} parent=59 // pred_check
          %p430 = pneg %p66
        $region62: #{tpu_custom_call.1} parent=59 // pred_check_branch
          %432 = sbr.rel (%p430) target = $region64
        $region63: #{tpu_custom_call.1} parent=59 // pred_region
          %433 = dma.done %s426, 128
        $region64: #{tpu_custom_call.1} parent=59 // pred_fallthru
          _
        %s434 = sand.u32 %s31, 1
        %s435 = scalar_lea.sflag [#allocation8], %s434
        %s436 = sand.u32 %s89, 1
        %s437 = smul.addr %s436, 4
        %s438 = scalar_lea.vmem [#allocation7], %s437
        // Predicated region
        $region65: #{tpu_custom_call.1} parent=59 // pred_check
          %p439 = pneg %p102
        $region66: #{tpu_custom_call.1} parent=59 // pred_check_branch
          %441 = sbr.rel (%p439) target = $region68
        $region67: #{tpu_custom_call.1} parent=59 // pred_region
          %442 = dma.done %s435, 64
        $region68: #{tpu_custom_call.1} parent=59 // pred_fallthru
          _
        // Predicated region
        $region69: #{tpu_custom_call.1} parent=59 // pred_check
          %p443 = pneg %p123
        $region70: #{tpu_custom_call.1} parent=59 // pred_check_branch
          %445 = sbr.rel (%p443) target = $region72
        $region71: #{tpu_custom_call.1} parent=59 // pred_region
          %446 = dma.done [#allocation8], 2048
        $region72: #{tpu_custom_call.1} parent=59 // pred_fallthru
          _
        // Predicated region
        $region73: #{tpu_custom_call.1} parent=59 // pred_check
          %p447 = pneg %p186
        $region74: #{tpu_custom_call.1} parent=59 // pred_check_branch
          %449 = sbr.rel (%p447) target = $region76
        $region75: #{tpu_custom_call.1} parent=59 // pred_region
          %450 = dma.done [#allocation11], 2048
        $region76: #{tpu_custom_call.1} parent=59 // pred_fallthru
          _
        // Predicated region
        $region77: #{tpu_custom_call.1} parent=59 // pred_check
          %p451 = pneg %p249
        $region78: #{tpu_custom_call.1} parent=59 // pred_check_branch
          %453 = sbr.rel (%p451) target = $region80
        $region79: #{tpu_custom_call.1} parent=59 // pred_region
          %454 = dma.done [#allocation11], 1024
        $region80: #{tpu_custom_call.1} parent=59 // pred_fallthru
          _
        %s455 = sand.u32 %s53, 1
        %s456 = scalar_lea.sflag [#allocation5], %s455
        %s457 = sand.u32 %s53, 1
        %s458 = smul.addr %s457, 8
        %s459 = scalar_lea.vmem [#allocation4], %s458
        %p460 = pneg %p66
        %p461 = pneg %p63
        %s462 = sand.u32 %s31, 1
        %s463 = scalar_lea.sflag [#allocation8], %s462
        %s464 = sand.u32 %s89, 1
        %s465 = smul.addr %s464, 4
        %s466 = scalar_lea.vmem [#allocation7], %s465
        %p467 = pneg %p102
        %p468 = pneg %p99
        %p469 = pneg %p123
        %p470 = pneg %p120
        %p471 = pneg %p144
        %p472 = pneg %p141
        %p473 = pneg %p165
        %p474 = pneg %p162
        %p475 = pneg %p186
        %p476 = pneg %p183
        %p477 = pneg %p207
        %p478 = pneg %p204
        %p479 = pneg %p228
        %p480 = pneg %p225
        %p481 = pneg %p249
        %p482 = pneg %p246
        %p483 = pneg %p270
        %p484 = pneg %p267
        %p485 = pneg %p298
        %p486 = pneg %p295
        %s487 = sand.u32 %s285, 1
        %s488 = scalar_lea.sflag [#allocation6], %s487
        %s489 = sand.u32 %s285, 1
        %s490 = smul.addr %s489, 16
        %s491 = scalar_lea.vmem [#allocation13], %s490
        %s492 = smul.u32 2, %s36
        %s493 = sadd.s32 %s36, 1
        %s494 = smul.u32 %s493, 2
        %p495 = scmp.lt.s32.totalorder %s494, 3
        %s496 = scalar_select %p495, %s494, 3
        %s497 = smul.u32 2, %s36
        %p499 = scmp.eq.s32.totalorder %s36, 0
        // Predicated region
        $region81: #{tpu_custom_call.1} parent=59 // pred_check
          %p500 = pneg %p499
        $region82: #{tpu_custom_call.1} parent=59 // pred_check_branch
          %502 = sbr.rel (%p500) target = $region84
        $region83: #{tpu_custom_call.1} parent=59 // pred_region
          %503 = vst [vmem:[#allocation2] sm:$0xff] 0.0
          %504 = vst [vmem:[#allocation3] sm:$0x1] 0.0
        $region84: #{tpu_custom_call.1} parent=59 // pred_fallthru
          _
        %v505 = vld [vmem:[%s429] sm:$0xf]
        %v506 = vld [vmem:[%s429 + $0x4] sm:$0xf]
        %v507 = vld [vmem:[#allocation9] sm:$0xff]
        %v508 = vld [vmem:[#allocation9 + $0x8] sm:$0xff]
        %v509 = vld [vmem:[#allocation9 + $0x10] sm:$0xff]
        %v510 = vld [vmem:[#allocation9 + $0x18] sm:$0xff]
        %v511 = vld [vmem:[#allocation9 + $0x20] sm:$0xff]
        %v512 = vld [vmem:[#allocation9 + $0x28] sm:$0xff]
        %v513 = vld [vmem:[#allocation9 + $0x30] sm:$0xff]
        %v514 = vld [vmem:[#allocation9 + $0x38] sm:$0xff]
        %v515 = vld [vmem:[#allocation9 + $0x40] sm:$0xff]
        %v516 = vld [vmem:[#allocation9 + $0x48] sm:$0xff]
        %v517 = vld [vmem:[#allocation9 + $0x50] sm:$0xff]
        %v518 = vld [vmem:[#allocation9 + $0x58] sm:$0xff]
        %v519 = vld [vmem:[#allocation9 + $0x60] sm:$0xff]
        %v520 = vld [vmem:[#allocation9 + $0x68] sm:$0xff]
        %v521 = vld [vmem:[#allocation9 + $0x70] sm:$0xff]
        %v522 = vld [vmem:[#allocation9 + $0x78] sm:$0xff]
        %v523 = vld [vmem:[%s3] sm:$0x3]
        %v525 = vlaneseq
        %v526 = vshrl.u32 %v525, 7
        %v527 = vsub.s32 0, %v526
        %v528 = vrot.slane %v523, %v527
        %v529 = vlaneseq
        %v530 = vshrl.u32 %v529, 7
        %v531 = vsub.s32 1, %v530
        %v532 = vrot.slane %v523, %v531
        %v537 = vunpack.c.l.b16 %v505
        %v538 = vunpack.c.l.b16 %v506
        %v539 = vpack.c.b16 %v538, %v537
        %v557 = vunpack.c.l.b16 %v507
        %v558 = vunpack.c.h.b16 %v507
        %v559 = vunpack.c.l.b16 %v508
        %v560 = vunpack.c.h.b16 %v508
        %v561 = vunpack.c.l.b16 %v509
        %v562 = vunpack.c.h.b16 %v509
        %v563 = vunpack.c.l.b16 %v510
        %v564 = vunpack.c.h.b16 %v510
        %v565 = vunpack.c.l.b16 %v511
        %v566 = vunpack.c.h.b16 %v511
        %v567 = vunpack.c.l.b16 %v512
        %v568 = vunpack.c.h.b16 %v512
        %v569 = vunpack.c.l.b16 %v513
        %v570 = vunpack.c.h.b16 %v513
        %v571 = vunpack.c.l.b16 %v514
        %v572 = vunpack.c.h.b16 %v514
        %v573 = vunpack.c.l.b16 %v515
        %v574 = vunpack.c.h.b16 %v515
        %v575 = vunpack.c.l.b16 %v516
        %v576 = vunpack.c.h.b16 %v516
        %v577 = vunpack.c.l.b16 %v517
        %v578 = vunpack.c.h.b16 %v517
        %v579 = vunpack.c.l.b16 %v518
        %v580 = vunpack.c.h.b16 %v518
        %v581 = vunpack.c.l.b16 %v519
        %v582 = vunpack.c.h.b16 %v519
        %v583 = vunpack.c.l.b16 %v520
        %v584 = vunpack.c.h.b16 %v520
        %v585 = vunpack.c.l.b16 %v521
        %v586 = vunpack.c.h.b16 %v521
        %v587 = vunpack.c.l.b16 %v522
        %v588 = vunpack.c.h.b16 %v522
        %v589 = vpack.c.b16 %v559, %v557
        %v590 = vpack.c.b16 %v560, %v558
        %v591 = vpack.c.b16 %v563, %v561
        %v592 = vpack.c.b16 %v564, %v562
        %v593 = vpack.c.b16 %v567, %v565
        %v594 = vpack.c.b16 %v568, %v566
        %v595 = vpack.c.b16 %v571, %v569
        %v596 = vpack.c.b16 %v572, %v570
        %v597 = vpack.c.b16 %v575, %v573
        %v598 = vpack.c.b16 %v576, %v574
        %v599 = vpack.c.b16 %v579, %v577
        %v600 = vpack.c.b16 %v580, %v578
        %v601 = vpack.c.b16 %v583, %v581
        %v602 = vpack.c.b16 %v584, %v582
        %v603 = vpack.c.b16 %v587, %v585
        %v604 = vpack.c.b16 %v588, %v586
        %621 = vmatprep.subr.bf16.mxu0 %v604
        %622 = vmatpush1.bf16.msra.mxu0 %v603
        %623 = vmatprep.subr.bf16.mxu0 %v602
        %624 = vmatpush1.bf16.msra.mxu0 %v601
        %625 = vmatprep.subr.bf16.mxu0 %v600
        %626 = vmatpush1.bf16.msra.mxu0 %v599
        %627 = vmatprep.subr.bf16.mxu0 %v598
        %628 = vmatpush1.bf16.msra.mxu0 %v597
        %629 = vmatprep.subr.bf16.mxu0 %v596
        %630 = vmatpush1.bf16.msra.mxu0 %v595
        %631 = vmatprep.subr.bf16.mxu0 %v594
        %632 = vmatpush1.bf16.msra.mxu0 %v593
        %633 = vmatprep.subr.bf16.mxu0 %v592
        %634 = vmatpush1.bf16.msra.mxu0 %v591
        %635 = vmatprep.subr.bf16.mxu0 %v590
        %636 = vmatpush1.bf16.msra.mxu0 %v589
        %637 = vmatprep.subr.bf16.mxu0 0
        %638 = vmatpush2.bf16.msra.mxu0 0
        %639 = vmatprep.subr.bf16.mxu0 0
        %640 = vmatpush2.bf16.msra.mxu0 0
        %641 = vmatprep.subr.bf16.mxu0 0
        %642 = vmatpush2.bf16.msra.mxu0 0
        %643 = vmatprep.subr.bf16.mxu0 0
        %644 = vmatpush2.bf16.msra.mxu0 0
        %645 = vmatprep.subr.bf16.mxu0 0
        %646 = vmatpush2.bf16.msra.mxu0 0
        %647 = vmatprep.subr.bf16.mxu0 0
        %648 = vmatpush2.bf16.msra.mxu0 0
        %649 = vmatprep.subr.bf16.mxu0 0
        %650 = vmatpush2.bf16.msra.mxu0 0
        %651 = vmatprep.subr.bf16.mxu0 0
        %652 = vmatpush2.bf16.msra.mxu0 0
        %653 = vmatprep.mubr.bf16.mxu0 0
        %654 = vmatmul.mubr.bf16.gmra.mxu0 %v539
        %v655 = vpop.f32.mrf.mxu0
        %v656 = vadd.f32 %v528, %v655
        %v657 = vpop.f32.mrf.mxu0
        %v658 = vadd.f32 %v532, %v657
        %v659 = vpop.f32.mrf.mxu0
        %v660 = vadd.f32 %v528, %v659
        %v661 = vpop.f32.mrf.mxu0
        %v662 = vadd.f32 %v532, %v661
        %663 = vdwg.mxu0
        %v664 = vmul.f32 %v656, 0.5
        %v665 = vmul.f32 %v660, 0.5
        %v666 = vmul.f32 %v656, 0.70710677
        %v667 = vmul.f32 %v660, 0.70710677
        %v668 = verf.f32.pop %v666
        %v669 = verf.f32.pop %v667
        %v670 = vadd.f32 %v668, 1.0
        %v671 = vadd.f32 %v669, 1.0
        %v672 = vmul.f32 %v664, %v670
        %v673 = vmul.f32 %v665, %v671
        %v674 = vld [vmem:[%s438] sm:$0x1]
        %675 = vmatprep.subr.bf16.mxu0 %v604
        %676 = vmatpush1.bf16.msra.mxu0 %v603
        %677 = vmatprep.subr.bf16.mxu0 %v602
        %678 = vmatpush1.bf16.msra.mxu0 %v601
        %679 = vmatprep.subr.bf16.mxu0 %v600
        %680 = vmatpush1.bf16.msra.mxu0 %v599
        %681 = vmatprep.subr.bf16.mxu0 %v598
        %682 = vmatpush1.bf16.msra.mxu0 %v597
        %683 = vmatprep.subr.bf16.mxu0 %v596
        %684 = vmatpush1.bf16.msra.mxu0 %v595
        %685 = vmatprep.subr.bf16.mxu0 %v594
        %686 = vmatpush1.bf16.msra.mxu0 %v593
        %687 = vmatprep.subr.bf16.mxu0 %v592
        %688 = vmatpush1.bf16.msra.mxu0 %v591
        %689 = vmatprep.subr.bf16.mxu0 %v590
        %690 = vmatpush1.bf16.msra.mxu0 %v589
        %691 = vmatprep.subr.bf16.mxu0 0
        %692 = vmatpush2.bf16.msra.mxu0 0
        %693 = vmatprep.subr.bf16.mxu0 0
        %694 = vmatpush2.bf16.msra.mxu0 0
        %695 = vmatprep.subr.bf16.mxu0 0
        %696 = vmatpush2.bf16.msra.mxu0 0
        %697 = vmatprep.subr.bf16.mxu0 0
        %698 = vmatpush2.bf16.msra.mxu0 0
        %699 = vmatprep.subr.bf16.mxu0 0
        %700 = vmatpush2.bf16.msra.mxu0 0
        %701 = vmatprep.subr.bf16.mxu0 0
        %702 = vmatpush2.bf16.msra.mxu0 0
        %703 = vmatprep.subr.bf16.mxu0 0
        %704 = vmatpush2.bf16.msra.mxu0 0
        %705 = vmatprep.subr.bf16.mxu0 0
        %706 = vmatpush2.bf16.msra.mxu0 0
        %707 = vmatprep.mubr.bf16.mxu0 0
        %708 = vmatmul.mubr.bf16.gmra.mxu0 %v674
        %v709 = vpop.f32.mrf.mxu0
        %v710 = vpop.f32.mrf.mxu0
        %v711 = vadd.f32 %v532, %v710
        %v712 = vpop.f32.mrf.mxu0
        %v713 = vpop.f32.mrf.mxu0
        %714 = vdwg.mxu0
        %s715 = sadd.s32 %s36, 1
        %p716 = scmp.lt.s32.totalorder %s715, 2
        %s717 = scalar_select %p716, 1, 0
        %s718 = scvt.s32.f32 %s717
        %v719 = vstv %s718
        %v720 = vmul.f32 %v711, %v719
        %v721 = vld [vmem:[#allocation2 + $0x7] sm:$0x1]
        %v722 = vld [vmem:[#allocation2 + $0x6] sm:$0x1]
        %v723 = vld [vmem:[%s4] sm:$0xf]
        %v724 = vlaneseq
        %v725 = vshrl.u32 %v724, 7
        %v726 = vadd.s32 %v725, 8
        %vm727 = vcmp.ge.s32.totalorder %v725, 2
        %vm728 = vcmp.ge.s32.totalorder %v726, 2
        %v729 = vrot.slane %v658, 6
        %v730 = vrot.slane %v662, 6
        %vm731 = vcmp.lt.s32.totalorder %v725, 2
        %v732 = vsel %vm731, %v729, %v730
        %v733 = vsel %vm731, %v730, %v729
        %vm734 = vcmp.eq.s32.totalorder %v725, 0
        %vm735 = vcmp.eq.s32.totalorder %v726, 0
        %v736 = vsel %vm734, 1, 0
        %v737 = vsel %vm735, 1, 0
        %vm738 = vcmp.eq.s32.totalorder %v736, 1
        %vm739 = vcmp.eq.s32.totalorder %v737, 1
        %v740 = vlaneseq
        %v741 = vshrl.u32 %v740, 7
        %v742 = vsub.s32 0, %v741
        %v743 = vrot.slane %v722, %v742
        %v744 = vlaneseq
        %v745 = vshrl.u32 %v744, 7
        %v746 = vsub.s32 0, %v745
        %v747 = vrot.slane %v721, %v746
        %v748 = vsel %vm738, %v743, %v747
        %v749 = vsel %vm739, %v743, %v747
        %v750 = vsel %vm727, 1, 0
        %v751 = vsel %vm728, 1, 0
        %vm752 = vcmp.eq.s32.totalorder %v750, 1
        %vm753 = vcmp.eq.s32.totalorder %v751, 1
        %v754 = vsel %vm752, %v733, %v748
        %v755 = vsel %vm753, %v732, %v749
        %vm756 = vcmp.ge.s32.totalorder %v725, 1
        %vm757 = vcmp.ge.s32.totalorder %v726, 1
        %v758 = vrot.slane %v658, 7
        %v759 = vrot.slane %v662, 7
        %vm760 = vcmp.lt.s32.totalorder %v725, 1
        %v761 = vsel %vm760, %v758, %v759
        %v762 = vsel %vm760, %v759, %v758
        %v763 = vsel %vm756, 1, 0
        %v764 = vsel %vm757, 1, 0
        %vm765 = vcmp.eq.s32.totalorder %v763, 1
        %vm766 = vcmp.eq.s32.totalorder %v764, 1
        %v767 = vsel %vm765, %v762, %v747
        %v768 = vsel %vm766, %v761, %v747
        %vm769 = vcmp.lt.s32.totalorder %v725, 15
        %vm770 = vcmp.lt.s32.totalorder %v726, 15
        %v771 = vrot.slane %v658, 1
        %v772 = vrot.slane %v662, 1
        %vm773 = vcmp.lt.s32.totalorder %v725, 7
        %v774 = vsel %vm773, %v771, %v772
        %v775 = vsel %vm773, %v772, %v771
        %v776 = vsel %vm769, 1, 0
        %v777 = vsel %vm770, 1, 0
        %vm778 = vcmp.eq.s32.totalorder %v776, 1
        %vm779 = vcmp.eq.s32.totalorder %v777, 1
        %v780 = vlaneseq
        %v781 = vshrl.u32 %v780, 7
        %v782 = vsub.s32 0, %v781
        %v783 = vrot.slane %v720, %v782
        %v784 = vsel %vm778, %v774, %v783
        %v785 = vsel %vm779, %v775, %v783
        %v786 = vlaneseq
        %v787 = vshrl.u32 %v786, 7
        %v788 = vsub.s32 0, %v787
        %v789 = vrot.slane %v723, %v788
        %v790 = vmul.f32 %v754, %v789
        %v791 = vmul.f32 %v755, %v789
        %v792 = vlaneseq
        %v793 = vshrl.u32 %v792, 7
        %v794 = vsub.s32 1, %v793
        %v795 = vrot.slane %v723, %v794
        %v796 = vmul.f32 %v767, %v795
        %v797 = vmul.f32 %v768, %v795
        %v798 = vadd.f32 %v790, %v796
        %v799 = vadd.f32 %v791, %v797
        %v800 = vlaneseq
        %v801 = vshrl.u32 %v800, 7
        %v802 = vsub.s32 2, %v801
        %v803 = vrot.slane %v723, %v802
        %v804 = vmul.f32 %v658, %v803
        %v805 = vmul.f32 %v662, %v803
        %v806 = vadd.f32 %v798, %v804
        %v807 = vadd.f32 %v799, %v805
        %v808 = vlaneseq
        %v809 = vshrl.u32 %v808, 7
        %v810 = vsub.s32 3, %v809
        %v811 = vrot.slane %v723, %v810
        %v812 = vmul.f32 %v784, %v811
        %v813 = vmul.f32 %v785, %v811
        %v814 = vadd.f32 %v806, %v812
        %v815 = vadd.f32 %v807, %v813
        %816 = vst [vmem:[#allocation2] sm:$0xff] %v662
        %v817 = vpack.c.bf16 %v815, %v814
        %v818 = vld [vmem:[#allocation10] sm:$0xff]
        %v819 = vld [vmem:[#allocation10 + $0x8] sm:$0xff]
        %v820 = vld [vmem:[#allocation10 + $0x10] sm:$0xff]
        %v821 = vld [vmem:[#allocation10 + $0x18] sm:$0xff]
        %v822 = vld [vmem:[#allocation10 + $0x20] sm:$0xff]
        %v823 = vld [vmem:[#allocation10 + $0x28] sm:$0xff]
        %v824 = vld [vmem:[#allocation10 + $0x30] sm:$0xff]
        %v825 = vld [vmem:[#allocation10 + $0x38] sm:$0xff]
        %v826 = vld [vmem:[#allocation10 + $0x40] sm:$0xff]
        %v827 = vld [vmem:[#allocation10 + $0x48] sm:$0xff]
        %v828 = vld [vmem:[#allocation10 + $0x50] sm:$0xff]
        %v829 = vld [vmem:[#allocation10 + $0x58] sm:$0xff]
        %v830 = vld [vmem:[#allocation10 + $0x60] sm:$0xff]
        %v831 = vld [vmem:[#allocation10 + $0x68] sm:$0xff]
        %v832 = vld [vmem:[#allocation10 + $0x70] sm:$0xff]
        %v833 = vld [vmem:[#allocation10 + $0x78] sm:$0xff]
        %v834 = vld [vmem:[%s6] sm:$0x3]
        %v836 = vlaneseq
        %v837 = vshrl.u32 %v836, 7
        %v838 = vsub.s32 0, %v837
        %v839 = vrot.slane %v834, %v838
        %v840 = vlaneseq
        %v841 = vshrl.u32 %v840, 7
        %v842 = vsub.s32 1, %v841
        %v843 = vrot.slane %v834, %v842
        %v862 = vunpack.c.l.b16 %v818
        %v863 = vunpack.c.h.b16 %v818
        %v864 = vunpack.c.l.b16 %v819
        %v865 = vunpack.c.h.b16 %v819
        %v866 = vunpack.c.l.b16 %v820
        %v867 = vunpack.c.h.b16 %v820
        %v868 = vunpack.c.l.b16 %v821
        %v869 = vunpack.c.h.b16 %v821
        %v870 = vunpack.c.l.b16 %v822
        %v871 = vunpack.c.h.b16 %v822
        %v872 = vunpack.c.l.b16 %v823
        %v873 = vunpack.c.h.b16 %v823
        %v874 = vunpack.c.l.b16 %v824
        %v875 = vunpack.c.h.b16 %v824
        %v876 = vunpack.c.l.b16 %v825
        %v877 = vunpack.c.h.b16 %v825
        %v878 = vunpack.c.l.b16 %v826
        %v879 = vunpack.c.h.b16 %v826
        %v880 = vunpack.c.l.b16 %v827
        %v881 = vunpack.c.h.b16 %v827
        %v882 = vunpack.c.l.b16 %v828
        %v883 = vunpack.c.h.b16 %v828
        %v884 = vunpack.c.l.b16 %v829
        %v885 = vunpack.c.h.b16 %v829
        %v886 = vunpack.c.l.b16 %v830
        %v887 = vunpack.c.h.b16 %v830
        %v888 = vunpack.c.l.b16 %v831
        %v889 = vunpack.c.h.b16 %v831
        %v890 = vunpack.c.l.b16 %v832
        %v891 = vunpack.c.h.b16 %v832
        %v892 = vunpack.c.l.b16 %v833
        %v893 = vunpack.c.h.b16 %v833
        %v894 = vpack.c.b16 %v864, %v862
        %v895 = vpack.c.b16 %v865, %v863
        %v896 = vpack.c.b16 %v868, %v866
        %v897 = vpack.c.b16 %v869, %v867
        %v898 = vpack.c.b16 %v872, %v870
        %v899 = vpack.c.b16 %v873, %v871
        %v900 = vpack.c.b16 %v876, %v874
        %v901 = vpack.c.b16 %v877, %v875
        %v902 = vpack.c.b16 %v880, %v878
        %v903 = vpack.c.b16 %v881, %v879
        %v904 = vpack.c.b16 %v884, %v882
        %v905 = vpack.c.b16 %v885, %v883
        %v906 = vpack.c.b16 %v888, %v886
        %v907 = vpack.c.b16 %v889, %v887
        %v908 = vpack.c.b16 %v892, %v890
        %v909 = vpack.c.b16 %v893, %v891
        %926 = vmatprep.subr.bf16.mxu0 %v909
        %927 = vmatpush1.bf16.msra.mxu0 %v908
        %928 = vmatprep.subr.bf16.mxu0 %v907
        %929 = vmatpush1.bf16.msra.mxu0 %v906
        %930 = vmatprep.subr.bf16.mxu0 %v905
        %931 = vmatpush1.bf16.msra.mxu0 %v904
        %932 = vmatprep.subr.bf16.mxu0 %v903
        %933 = vmatpush1.bf16.msra.mxu0 %v902
        %934 = vmatprep.subr.bf16.mxu0 %v901
        %935 = vmatpush1.bf16.msra.mxu0 %v900
        %936 = vmatprep.subr.bf16.mxu0 %v899
        %937 = vmatpush1.bf16.msra.mxu0 %v898
        %938 = vmatprep.subr.bf16.mxu0 %v897
        %939 = vmatpush1.bf16.msra.mxu0 %v896
        %940 = vmatprep.subr.bf16.mxu0 %v895
        %941 = vmatpush1.bf16.msra.mxu0 %v894
        %942 = vmatprep.subr.bf16.mxu0 0
        %943 = vmatpush2.bf16.msra.mxu0 0
        %944 = vmatprep.subr.bf16.mxu0 0
        %945 = vmatpush2.bf16.msra.mxu0 0
        %946 = vmatprep.subr.bf16.mxu0 0
        %947 = vmatpush2.bf16.msra.mxu0 0
        %948 = vmatprep.subr.bf16.mxu0 0
        %949 = vmatpush2.bf16.msra.mxu0 0
        %950 = vmatprep.subr.bf16.mxu0 0
        %951 = vmatpush2.bf16.msra.mxu0 0
        %952 = vmatprep.subr.bf16.mxu0 0
        %953 = vmatpush2.bf16.msra.mxu0 0
        %954 = vmatprep.subr.bf16.mxu0 0
        %955 = vmatpush2.bf16.msra.mxu0 0
        %956 = vmatprep.subr.bf16.mxu0 0
        %957 = vmatpush2.bf16.msra.mxu0 0
        %958 = vmatprep.mubr.bf16.mxu0 0
        %959 = vmatmul.mubr.bf16.gmra.mxu0 %v817
        %v960 = vpop.f32.mrf.mxu0
        %v961 = vadd.f32 %v839, %v960
        %v962 = vpop.f32.mrf.mxu0
        %v963 = vadd.f32 %v843, %v962
        %v964 = vpop.f32.mrf.mxu0
        %v965 = vadd.f32 %v839, %v964
        %v966 = vpop.f32.mrf.mxu0
        %v967 = vadd.f32 %v843, %v966
        %968 = vdwg.mxu0
        %v969 = vxor.u32 %v961, 2147483648
        %v970 = vxor.u32 %v965, 2147483648
        %v971 = vmul.f32 %v969, 1.442695
        %v972 = vpow.pop %v971
        %v973 = vmul.f32 %v970, 1.442695
        %v974 = vpow.pop %v973
        %v975 = vadd.f32 %v972, 1.0
        %v976 = vadd.f32 %v974, 1.0
        %v977 = vrcp.pop %v975
        %v978 = vmul.f32 1.0, %v977
        %v979 = vrcp.pop %v976
        %v980 = vmul.f32 1.0, %v979
        %v981 = vxor.u32 %v963, 2147483648
        %v982 = vxor.u32 %v967, 2147483648
        %v983 = vmul.f32 %v981, 1.442695
        %v984 = vpow.pop %v983
        %v985 = vmul.f32 %v982, 1.442695
        %v986 = vpow.pop %v985
        %v987 = vadd.f32 %v984, 1.0
        %v988 = vadd.f32 %v986, 1.0
        %v989 = vrcp.pop %v987
        %v990 = vmul.f32 1.0, %v989
        %v991 = vrcp.pop %v988
        %v992 = vmul.f32 1.0, %v991
        %v993 = vld [vmem:[%s7] sm:$0x1]
        %v995 = vlaneseq
        %v996 = vshrl.u32 %v995, 7
        %v997 = vsub.s32 0, %v996
        %v998 = vrot.slane %v993, %v997
        %v1000 = vmul.f32 %v998, %v978
        %v1001 = vmul.f32 %v998, %v980
        %v1002 = vmul.f32 %v1000, 1.442695
        %v1003 = vpow.pop %v1002
        %v1004 = vmul.f32 %v1001, 1.442695
        %v1005 = vpow.pop %v1004
        %v1006 = vmul.f32 %v1003, %v1003
        %v1007 = vmul.f32 %v1005, %v1005
        %v1008 = vsub.f32 1.0, %v1006
        %v1009 = vsub.f32 1.0, %v1007
        %v1010 = vrsqrt.pop %v1008
        %v1011 = vmul.f32 %v1008, %v1010
        %vm1012 = vcmp.eq.f32.partialorder %v1008, inf
        %v1013 = vsel %vm1012, %v1008, %v1011
        %vm1014 = vcmp.eq.f32.partialorder %v1008, 0.0
        %v1015 = vand.u32 %v1008, 2147483648
        %v1016 = vsel %vm1014, %v1015, %v1013
        %v1017 = vrsqrt.pop %v1009
        %v1018 = vmul.f32 %v1009, %v1017
        %vm1019 = vcmp.eq.f32.partialorder %v1009, inf
        %v1020 = vsel %vm1019, %v1009, %v1018
        %vm1021 = vcmp.eq.f32.partialorder %v1009, 0.0
        %v1022 = vand.u32 %v1009, 2147483648
        %v1023 = vsel %vm1021, %v1022, %v1020
        %v1024 = vmul.f32 %v990, %v814
        %v1025 = vmul.f32 %v992, %v815
        %v1026 = vmul.f32 %v1016, %v1024
        %v1027 = vmul.f32 %v1023, %v1025
        %v1028 = vrot.slane %v1003, 7
        %v1029 = vrot.slane %v1005, 7
        %v1030 = vsel %vm760, %v1028, %v1029
        %v1031 = vsel %vm760, %v1029, %v1028
        %v1032 = vrot.slane %v1026, 7
        %v1033 = vrot.slane %v1027, 7
        %v1034 = vsel %vm760, %v1032, %v1033
        %v1035 = vsel %vm760, %v1033, %v1032
        %v1036 = vmul.f32 %v1003, %v1035
        %v1037 = vmul.f32 %v1005, %v1034
        %v1038 = vadd.f32 %v1026, %v1036
        %v1039 = vadd.f32 %v1027, %v1037
        %v1040 = vsel %vm765, %v1038, %v1026
        %v1041 = vsel %vm766, %v1039, %v1027
        %v1042 = vmul.f32 %v1003, %v1031
        %v1043 = vmul.f32 %v1005, %v1030
        %v1044 = vsel %vm765, %v1042, %v1003
        %v1045 = vsel %vm766, %v1043, %v1005
        %v1046 = vrot.slane %v1044, 6
        %v1047 = vrot.slane %v1045, 6
        %v1048 = vsel %vm731, %v1046, %v1047
        %v1049 = vsel %vm731, %v1047, %v1046
        %v1050 = vrot.slane %v1040, 6
        %v1051 = vrot.slane %v1041, 6
        %v1052 = vsel %vm731, %v1050, %v1051
        %v1053 = vsel %vm731, %v1051, %v1050
        %v1054 = vmul.f32 %v1044, %v1053
        %v1055 = vmul.f32 %v1045, %v1052
        %v1056 = vadd.f32 %v1040, %v1054
        %v1057 = vadd.f32 %v1041, %v1055
        %v1058 = vsel %vm752, %v1056, %v1040
        %v1059 = vsel %vm753, %v1057, %v1041
        %v1060 = vmul.f32 %v1044, %v1049
        %v1061 = vmul.f32 %v1045, %v1048
        %v1062 = vsel %vm752, %v1060, %v1044
        %v1063 = vsel %vm753, %v1061, %v1045
        %v1064 = vrot.slane %v1062, 4
        %v1065 = vrot.slane %v1063, 4
        %vm1066 = vcmp.lt.s32.totalorder %v725, 4
        %v1067 = vsel %vm1066, %v1064, %v1065
        %v1068 = vsel %vm1066, %v1065, %v1064
        %v1069 = vrot.slane %v1058, 4
        %v1070 = vrot.slane %v1059, 4
        %v1071 = vsel %vm1066, %v1069, %v1070
        %v1072 = vsel %vm1066, %v1070, %v1069
        %vm1073 = vcmp.ge.s32.totalorder %v725, 4
        %vm1074 = vcmp.ge.s32.totalorder %v726, 4
        %v1075 = vmul.f32 %v1062, %v1072
        %v1076 = vmul.f32 %v1063, %v1071
        %v1077 = vadd.f32 %v1058, %v1075
        %v1078 = vadd.f32 %v1059, %v1076
        %v1079 = vsel %vm1073, 1, 0
        %v1080 = vsel %vm1074, 1, 0
        %vm1081 = vcmp.eq.s32.totalorder %v1079, 1
        %vm1082 = vcmp.eq.s32.totalorder %v1080, 1
        %v1083 = vsel %vm1081, %v1077, %v1058
        %v1084 = vsel %vm1082, %v1078, %v1059
        %v1085 = vmul.f32 %v1062, %v1068
        %v1086 = vmul.f32 %v1063, %v1067
        %v1087 = vsel %vm1081, %v1085, %v1062
        %v1088 = vsel %vm1082, %v1086, %v1063
        %vm1089 = vcmp.ge.s32.totalorder %v725, 8
        %vm1090 = vcmp.ge.s32.totalorder %v726, 8
        %v1091 = vmul.f32 %v1087, %v1084
        %v1092 = vmul.f32 %v1088, %v1083
        %v1093 = vadd.f32 %v1083, %v1091
        %v1094 = vadd.f32 %v1084, %v1092
        %v1095 = vsel %vm1089, 1, 0
        %v1096 = vsel %vm1090, 1, 0
        %vm1097 = vcmp.eq.s32.totalorder %v1095, 1
        %vm1098 = vcmp.eq.s32.totalorder %v1096, 1
        %v1099 = vsel %vm1097, %v1093, %v1083
        %v1100 = vsel %vm1098, %v1094, %v1084
        %v1101 = vmul.f32 %v1087, %v1088
        %v1102 = vsel %vm1097, %v1101, %v1087
        %v1103 = vsel %vm1098, %v1101, %v1088
        %v1104 = vld [vmem:[#allocation3] sm:$0x1]
        %v1106 = vlaneseq
        %v1107 = vshrl.u32 %v1106, 7
        %v1108 = vsub.s32 0, %v1107
        %v1109 = vrot.slane %v1104, %v1108
        %v1111 = vmul.f32 %v1102, %v1109
        %v1112 = vmul.f32 %v1103, %v1109
        %v1113 = vadd.f32 %v1099, %v1111
        %v1114 = vadd.f32 %v1100, %v1112
        %1115 = vst [vmem:[#allocation3 - $0x7] sm:$0x80] %v1114
        %v1116 = vmul.f32 %v672, %v1113
        %v1117 = vmul.f32 %v673, %v1114
        %v1118 = vpack.c.bf16 %v1117, %v1116
        %v1119 = vld [vmem:[#allocation12] sm:$0xf]
        %v1120 = vld [vmem:[#allocation12 + $0x4] sm:$0xf]
        %v1121 = vld [vmem:[#allocation12 + $0x8] sm:$0xf]
        %v1122 = vld [vmem:[#allocation12 + $0xc] sm:$0xf]
        %v1123 = vld [vmem:[#allocation12 + $0x10] sm:$0xf]
        %v1124 = vld [vmem:[#allocation12 + $0x14] sm:$0xf]
        %v1125 = vld [vmem:[#allocation12 + $0x18] sm:$0xf]
        %v1126 = vld [vmem:[#allocation12 + $0x1c] sm:$0xf]
        %v1127 = vld [vmem:[#allocation12 + $0x20] sm:$0xf]
        %v1128 = vld [vmem:[#allocation12 + $0x24] sm:$0xf]
        %v1129 = vld [vmem:[#allocation12 + $0x28] sm:$0xf]
        %v1130 = vld [vmem:[#allocation12 + $0x2c] sm:$0xf]
        %v1131 = vld [vmem:[#allocation12 + $0x30] sm:$0xf]
        %v1132 = vld [vmem:[#allocation12 + $0x34] sm:$0xf]
        %v1133 = vld [vmem:[#allocation12 + $0x38] sm:$0xf]
        %v1134 = vld [vmem:[#allocation12 + $0x3c] sm:$0xf]
        %v1135 = vld [vmem:[%s9] sm:$0x1]
        %v1137 = vlaneseq
        %v1138 = vshrl.u32 %v1137, 7
        %v1139 = vsub.s32 0, %v1138
        %v1140 = vrot.slane %v1135, %v1139
        %v1158 = vunpack.c.l.b16 %v1119
        %v1159 = vunpack.c.l.b16 %v1120
        %v1160 = vunpack.c.l.b16 %v1121
        %v1161 = vunpack.c.l.b16 %v1122
        %v1162 = vunpack.c.l.b16 %v1123
        %v1163 = vunpack.c.l.b16 %v1124
        %v1164 = vunpack.c.l.b16 %v1125
        %v1165 = vunpack.c.l.b16 %v1126
        %v1166 = vunpack.c.l.b16 %v1127
        %v1167 = vunpack.c.l.b16 %v1128
        %v1168 = vunpack.c.l.b16 %v1129
        %v1169 = vunpack.c.l.b16 %v1130
        %v1170 = vunpack.c.l.b16 %v1131
        %v1171 = vunpack.c.l.b16 %v1132
        %v1172 = vunpack.c.l.b16 %v1133
        %v1173 = vunpack.c.l.b16 %v1134
        %v1174 = vpack.c.b16 %v1159, %v1158
        %v1175 = vpack.c.b16 %v1161, %v1160
        %v1176 = vpack.c.b16 %v1163, %v1162
        %v1177 = vpack.c.b16 %v1165, %v1164
        %v1178 = vpack.c.b16 %v1167, %v1166
        %v1179 = vpack.c.b16 %v1169, %v1168
        %v1180 = vpack.c.b16 %v1171, %v1170
        %v1181 = vpack.c.b16 %v1173, %v1172
        %1190 = vmatprep.subr.bf16.mxu0 0
        %1191 = vmatpush1.bf16.msra.mxu0 %v1181
        %1192 = vmatprep.subr.bf16.mxu0 0
        %1193 = vmatpush1.bf16.msra.mxu0 %v1180
        %1194 = vmatprep.subr.bf16.mxu0 0
        %1195 = vmatpush1.bf16.msra.mxu0 %v1179
        %1196 = vmatprep.subr.bf16.mxu0 0
        %1197 = vmatpush1.bf16.msra.mxu0 %v1178
        %1198 = vmatprep.subr.bf16.mxu0 0
        %1199 = vmatpush1.bf16.msra.mxu0 %v1177
        %1200 = vmatprep.subr.bf16.mxu0 0
        %1201 = vmatpush1.bf16.msra.mxu0 %v1176
        %1202 = vmatprep.subr.bf16.mxu0 0
        %1203 = vmatpush1.bf16.msra.mxu0 %v1175
        %1204 = vmatprep.subr.bf16.mxu0 0
        %1205 = vmatpush1.bf16.msra.mxu0 %v1174
        %1206 = vmatprep.subr.bf16.mxu0 0
        %1207 = vmatpush2.bf16.msra.mxu0 0
        %1208 = vmatprep.subr.bf16.mxu0 0
        %1209 = vmatpush2.bf16.msra.mxu0 0
        %1210 = vmatprep.subr.bf16.mxu0 0
        %1211 = vmatpush2.bf16.msra.mxu0 0
        %1212 = vmatprep.subr.bf16.mxu0 0
        %1213 = vmatpush2.bf16.msra.mxu0 0
        %1214 = vmatprep.subr.bf16.mxu0 0
        %1215 = vmatpush2.bf16.msra.mxu0 0
        %1216 = vmatprep.subr.bf16.mxu0 0
        %1217 = vmatpush2.bf16.msra.mxu0 0
        %1218 = vmatprep.subr.bf16.mxu0 0
        %1219 = vmatpush2.bf16.msra.mxu0 0
        %1220 = vmatprep.subr.bf16.mxu0 0
        %1221 = vmatpush2.bf16.msra.mxu0 0
        %1222 = vmatprep.mubr.bf16.mxu0 0
        %1223 = vmatmul.mubr.bf16.gmra.mxu0 %v1118
        %v1224 = vpop.f32.mrf.mxu0
        %v1225 = vadd.f32 %v1140, %v1224
        %v1226 = vpop.f32.mrf.mxu0
        %v1227 = vpop.f32.mrf.mxu0
        %v1228 = vadd.f32 %v1140, %v1227
        %v1229 = vpop.f32.mrf.mxu0
        %1230 = vdwg.mxu0
        %1231 = vst [vmem:[%s491] sm:$0xff] %v1225
        %1232 = vst [vmem:[%s491 + $0x8] sm:$0xff] %v1228
        %s1233 = sand.u32 %s285, 1
        %s1234 = scalar_lea.sflag [#allocation6], %s1233
        %s1235 = sand.u32 %s285, 1
        %s1236 = smul.addr %s1235, 16
        %s1237 = scalar_lea.vmem [#allocation13], %s1236
        // Predicated region
        $region85: #{tpu_custom_call.1} parent=59 // pred_check
          %p1238 = pneg %p295
        $region86: #{tpu_custom_call.1} parent=59 // pred_check_branch
          %1240 = sbr.rel (%p1238) target = $region88
        $region87: #{tpu_custom_call.1} parent=59 // pred_region
          %s1241 = smul.u32 2, %s36
          %s1243 = ssub.s32 256, 256
          %1244 = vsyncadd %s1234, %s1243
          %s1245 = smul.addr %s35, 4
          %s1246 = sadd.s32 %s1241, %s1245
          %s1247 = smul.addr %s1246, 128
          %s1248 = scalar_lea.hbm %s10, %s1247
          %s1249 = sshll.u32 %s1237, 4
          %s1250 = int_to_ptr.vmem [resolvable:$true] %s1249
          %1255 = dma.vmem_to_hbm [thread:$0]  %s1250, 256, %s1248, %s1234, 128, 128, 8
        $region88: #{tpu_custom_call.1} parent=59 // pred_fallthru
          _
      $region60: #{tpu_custom_call.1} parent=5 // pred_fallthru
        _
      %p1256 = scmp.le.s32.totalorder 2, %s26
      // Predicated region
      $region89: #{tpu_custom_call.1} parent=5 // pred_check
        %p1257 = pneg %p1256
      $region90: #{tpu_custom_call.1} parent=5 // pred_check_branch
        %1259 = sbr.rel (%p1257) target = $region92
      $region91: #{tpu_custom_call.1} parent=5 // pred_region
        %s1260 = ssub.s32 %s26, 2
        // Predicated region
        $region93: #{tpu_custom_call.1} parent=91 // pred_check
          %p1261 = pneg %p301
        $region94: #{tpu_custom_call.1} parent=91 // pred_check_branch
          %1263 = sbr.rel (%p1261) target = $region96
        $region95: #{tpu_custom_call.1} parent=91 // pred_region
          %s1264 = sand.u32 %s286, 1
          %s1265 = scalar_lea.sflag [#allocation6], %s1264
          %s1266 = sand.u32 %s286, 1
          %s1267 = smul.addr %s1266, 16
          %s1268 = scalar_lea.vmem [#allocation13], %s1267
          %1269 = dma.done %s1265, 256
        $region96: #{tpu_custom_call.1} parent=91 // pred_fallthru
          _
      $region92: #{tpu_custom_call.1} parent=5 // pred_fallthru
        _
    $region6: #{tpu_custom_call.1} parent=1 // loop_footer
      %s30 = sadd.s32 1, %s26
    $region7: #{tpu_custom_call.1} parent=1 // loop_footer_branch
      %25 = sbr.rel target = $region3
    $region8: #{tpu_custom_call.1} parent=1 // loop_exit
      _
    %1270 = vsyncpa [#allocation5], 1
    %s1271 = scalar_lea.sflag [#allocation5], 1
    %1272 = vsyncpa %s1271, 1
    %1273 = vsyncpa [#allocation8], 1
    %s1274 = scalar_lea.sflag [#allocation8], 1
    %1275 = vsyncpa %s1274, 1
    %1276 = vsyncpa [#allocation11], 1
    %1277 = vsyncpa [#allocation6], 1
    %s1278 = scalar_lea.sflag [#allocation6], 1
    %1279 = vsyncpa %s1278, 1

// kernel: tpu_custom_call.1
$region0: #{tpu_custom_call.1}
  #allocation0 [shape = 'u32[]', space=smem, size = 0x4, offset = 0x4, fixed_abs, tag = 'smem constant byte address 0x4 - core index']
  #allocation1 [shape = 'u32[144,128]{1,0:T(1,128)}', space=vmem, size = 0x12000, scoped, tag = 'internal scratch']
  #allocation2 [shape = 'f32[8,128]{1,0:T(8,128)}', space=vmem, size = 0x1000, scoped, tag = 'scratch operand']
  #allocation3 [shape = 'f32[1,128]{1,0:T(1,128)}', space=vmem, size = 0x200, scoped, tag = 'scratch operand']
  %s0 = inlined_call_operand.hbm [shape: bf16[2,32,128], index: 0, kind: input, shape index: {}]
  %s1 = inlined_call_operand.hbm [shape: bf16[2,32,128], index: 1, kind: input, shape index: {}]
  %s2 = inlined_call_operand.hbm [shape: bf16[128,256], index: 2, kind: input, shape index: {}]
  %s3 = inlined_call_operand.vmem [shape: f32[1,256], index: 3, kind: input, shape index: {}]
  %s4 = inlined_call_operand.vmem [shape: f32[4,128], index: 4, kind: input, shape index: {}]
  %s5 = inlined_call_operand.hbm [shape: bf16[128,256], index: 5, kind: input, shape index: {}]
  %s6 = inlined_call_operand.vmem [shape: f32[1,256], index: 6, kind: input, shape index: {}]
  %s7 = inlined_call_operand.vmem [shape: f32[1,128], index: 7, kind: input, shape index: {}]
  %s8 = inlined_call_operand.hbm [shape: bf16[128,128], index: 8, kind: input, shape index: {}]
  %s9 = inlined_call_operand.vmem [shape: f32[1,128], index: 9, kind: input, shape index: {}]
  %s10 = inlined_call_operand.hbm [shape: f32[2,32,128], index: 10, kind: output, shape index: {}]
  %s11 = sld [smem:[#allocation0]]
  $region97: #{tpu_custom_call.1} parent=0
    _
  %s13 = ssub.s32 1, %s11
  %s14 = scalar_select 0, %s13, %s11
  $region1: #{tpu_custom_call.1} parent=0
    #allocation4 [shape = 'u8[8192]{0}', space=vmem, size = 0x2000, scoped, tag = 'input window, operand 0']
    #allocation5 [shape = 's32[2]{0}', space=sflag, size = 0x8, scoped, tag = 'scoped memory for tpu_custom_call.1']
    #allocation6 [shape = 's32[2]{0}', space=sflag, size = 0x8, scoped, tag = 'scoped memory for tpu_custom_call.1']
    #allocation7 [shape = 'u8[4096]{0}', space=vmem, size = 0x1000, scoped, tag = 'input window, operand 1']
    #allocation8 [shape = 's32[2]{0}', space=sflag, size = 0x8, scoped, tag = 'scoped memory for tpu_custom_call.1']
    #allocation9 [shape = 'u8[65536]{0}', space=vmem, size = 0x10000, scoped, tag = 'input window, operand 2, single buffered']
    #allocation10 [shape = 'u8[65536]{0}', space=vmem, size = 0x10000, scoped, tag = 'input window, operand 5, single buffered']
    #allocation11 [shape = 's32[1]{0}', space=sflag, size = 0x4, scoped, tag = 'scoped memory for tpu_custom_call.1']
    #allocation12 [shape = 'u8[32768]{0}', space=vmem, size = 0x8000, scoped, tag = 'input window, operand 8, single buffered']
    #allocation13 [shape = 'u8[16384]{0}', space=vmem, size = 0x4000, scoped, tag = 'output window, operand 0']
    %15 = vsyncpa [#allocation5], 0
    %s16 = scalar_lea.sflag [#allocation5], 1
    %17 = vsyncpa %s16, 0
    %18 = vsyncpa [#allocation8], 0
    %s19 = scalar_lea.sflag [#allocation8], 1
    %20 = vsyncpa %s19, 0
    %21 = vsyncpa [#allocation11], 0
    %22 = vsyncpa [#allocation6], 0
    %s23 = scalar_lea.sflag [#allocation6], 1
    %24 = vsyncpa %s23, 0
    loop: start=0, step=1, limit=6
    $region2: #{tpu_custom_call.1} parent=1 // loop_pre_header
      _
    $region3: #{tpu_custom_call.1} parent=1 // loop_header
      %s26 = sphi 0, %s30
      %p27 = scmp.ge.s32.totalorder %s26, 6
      %s33 = sphi 0, %s45
      %s34 = sphi 0, %s41
      %s35 = sphi 0, %s33
      %s36 = sphi 0, %s34
      %s37 = sphi 0, %s35
      %s38 = sphi 0, %s36
      %s50 = sphi 0, %s52
      %s53 = sphi 0, %s50
      %s54 = sphi 0, %s53
      %s70 = sphi 0, %s54
      %s86 = sphi 0, %s88
      %s89 = sphi 0, %s86
      %s90 = sphi 0, %s89
      %s106 = sphi 0, %s90
      %s110 = sphi 0, %s110
      %s112 = sphi 0, %s110
      %s113 = sphi 0, %s112
      %s127 = sphi 0, %s113
      %s131 = sphi 0, %s131
      %s133 = sphi 0, %s131
      %s134 = sphi 0, %s133
      %s148 = sphi 0, %s134
      %s152 = sphi 0, %s152
      %s154 = sphi 0, %s152
      %s155 = sphi 0, %s154
      %s169 = sphi 0, %s155
      %s173 = sphi 0, %s173
      %s175 = sphi 0, %s173
      %s176 = sphi 0, %s175
      %s190 = sphi 0, %s176
      %s194 = sphi 0, %s194
      %s196 = sphi 0, %s194
      %s197 = sphi 0, %s196
      %s211 = sphi 0, %s197
      %s215 = sphi 0, %s215
      %s217 = sphi 0, %s215
      %s218 = sphi 0, %s217
      %s232 = sphi 0, %s218
      %s236 = sphi 0, %s236
      %s238 = sphi 0, %s236
      %s239 = sphi 0, %s238
      %s253 = sphi 0, %s239
      %s257 = sphi 0, %s257
      %s259 = sphi 0, %s257
      %s260 = sphi 0, %s259
      %s274 = sphi 0, %s260
      %s282 = sphi 0, %s284
      %s285 = sphi 0, %s282
      %s286 = sphi 0, %s285
      %s302 = sphi 0, %s286
    $region4: #{tpu_custom_call.1} parent=1 // loop_header_branch
      %29 = sbr.rel (%p27) target = $region8
    $region5: #{tpu_custom_call.1} parent=1 // loop_body
      %s31 = ssub.s32 %s26, 1
      %s32 = ssub.s32 %s26, 2
      %s39 = sadd.s32 1, %s34
      %p40 = scmp.ge.s32.totalorder %s39, 2
      %s41 = scalar_select %p40, 0, %s39
      %s42 = sadd.s32 1, %s33
      %s43 = scalar_select %p40, %s42, %s33
      %p44 = scmp.ge.s32.totalorder %s43, 2
      %s45 = scalar_select %p44, 0, %s43
      %s46 = ssub.s32 %s33, %s45
      %s47 = ssub.s32 %s34, %s41
      %s48 = sor.u32 %s46, %s47
      %p49 = scmp.eq.s32.totalorder %s48, 0
      %s51 = sadd.s32 %s50, 1
      %s52 = scalar_select %p49, %s50, %s51
      %p55 = pneg %p49
      %p56 = scmp.eq.s32.totalorder %s26, 3
      %p57 = por %p55, %p56
      %p58 = scmp.ne.s32.totalorder %s50, %s53
      %p59 = scmp.eq.s32.totalorder %s26, 0
      %p60 = por %p58, %p59
      %p61 = scmp.ne.s32.totalorder %s50, %s53
      %p62 = scmp.eq.s32.totalorder %s31, 3
      %p63 = por %p61, %p62
      %p64 = scmp.ne.s32.totalorder %s53, %s54
      %p65 = scmp.eq.s32.totalorder %s31, 0
      %p66 = por %p64, %p65
      %p67 = scmp.ne.s32.totalorder %s53, %s54
      %p68 = scmp.eq.s32.totalorder %s32, 3
      %p69 = por %p67, %p68
      %p71 = scmp.ne.s32.totalorder %s54, %s70
      %p72 = scmp.eq.s32.totalorder %s32, 0
      %p73 = por %p71, %p72
      %s74 = sadd.s32 %s34, 1
      %s75 = smul.u32 %s74, 2
      %p76 = scmp.lt.s32.totalorder %s75, 3
      %s77 = scalar_select %p76, %s75, 3
      %s78 = sadd.s32 %s41, 1
      %s79 = smul.u32 %s78, 2
      %p80 = scmp.lt.s32.totalorder %s79, 3
      %s81 = scalar_select %p80, %s79, 3
      %s82 = ssub.s32 %s33, %s45
      %s83 = ssub.s32 %s77, %s81
      %s84 = sor.u32 %s82, %s83
      %p85 = scmp.eq.s32.totalorder %s84, 0
      %s87 = sadd.s32 %s86, 1
      %s88 = scalar_select %p85, %s86, %s87
      %p91 = pneg %p85
      %p92 = scmp.eq.s32.totalorder %s26, 3
      %p93 = por %p91, %p92
      %p94 = scmp.ne.s32.totalorder %s86, %s89
      %p95 = scmp.eq.s32.totalorder %s26, 0
      %p96 = por %p94, %p95
      %p97 = scmp.ne.s32.totalorder %s86, %s89
      %p98 = scmp.eq.s32.totalorder %s31, 3
      %p99 = por %p97, %p98
      %p100 = scmp.ne.s32.totalorder %s89, %s90
      %p101 = scmp.eq.s32.totalorder %s31, 0
      %p102 = por %p100, %p101
      %p103 = scmp.ne.s32.totalorder %s89, %s90
      %p104 = scmp.eq.s32.totalorder %s32, 3
      %p105 = por %p103, %p104
      %p107 = scmp.ne.s32.totalorder %s90, %s106
      %p108 = scmp.eq.s32.totalorder %s32, 0
      %p109 = por %p107, %p108
      %s111 = sadd.s32 %s110, 1
      %p114 = scmp.eq.s32.totalorder %s26, 3
      %p115 = scmp.ne.s32.totalorder %s110, %s112
      %p116 = scmp.eq.s32.totalorder %s26, 0
      %p117 = por %p115, %p116
      %p118 = scmp.ne.s32.totalorder %s110, %s112
      %p119 = scmp.eq.s32.totalorder %s31, 3
      %p120 = por %p118, %p119
      %p121 = scmp.ne.s32.totalorder %s112, %s113
      %p122 = scmp.eq.s32.totalorder %s31, 0
      %p123 = por %p121, %p122
      %p124 = scmp.ne.s32.totalorder %s112, %s113
      %p125 = scmp.eq.s32.totalorder %s32, 3
      %p126 = por %p124, %p125
      %p128 = scmp.ne.s32.totalorder %s113, %s127
      %p129 = scmp.eq.s32.totalorder %s32, 0
      %p130 = por %p128, %p129
      %s132 = sadd.s32 %s131, 1
      %p135 = scmp.eq.s32.totalorder %s26, 3
      %p136 = scmp.ne.s32.totalorder %s131, %s133
      %p137 = scmp.eq.s32.totalorder %s26, 0
      %p138 = por %p136, %p137
      %p139 = scmp.ne.s32.totalorder %s131, %s133
      %p140 = scmp.eq.s32.totalorder %s31, 3
      %p141 = por %p139, %p140
      %p142 = scmp.ne.s32.totalorder %s133, %s134
      %p143 = scmp.eq.s32.totalorder %s31, 0
      %p144 = por %p142, %p143
      %p145 = scmp.ne.s32.totalorder %s133, %s134
      %p146 = scmp.eq.s32.totalorder %s32, 3
      %p147 = por %p145, %p146
      %p149 = scmp.ne.s32.totalorder %s134, %s148
      %p150 = scmp.eq.s32.totalorder %s32, 0
      %p151 = por %p149, %p150
      %s153 = sadd.s32 %s152, 1
      %p156 = scmp.eq.s32.totalorder %s26, 3
      %p157 = scmp.ne.s32.totalorder %s152, %s154
      %p158 = scmp.eq.s32.totalorder %s26, 0
      %p159 = por %p157, %p158
      %p160 = scmp.ne.s32.totalorder %s152, %s154
      %p161 = scmp.eq.s32.totalorder %s31, 3
      %p162 = por %p160, %p161
      %p163 = scmp.ne.s32.totalorder %s154, %s155
      %p164 = scmp.eq.s32.totalorder %s31, 0
      %p165 = por %p163, %p164
      %p166 = scmp.ne.s32.totalorder %s154, %s155
      %p167 = scmp.eq.s32.totalorder %s32, 3
      %p168 = por %p166, %p167
      %p170 = scmp.ne.s32.totalorder %s155, %s169
      %p171 = scmp.eq.s32.totalorder %s32, 0
      %p172 = por %p170, %p171
      %s174 = sadd.s32 %s173, 1
      %p177 = scmp.eq.s32.totalorder %s26, 3
      %p178 = scmp.ne.s32.totalorder %s173, %s175
      %p179 = scmp.eq.s32.totalorder %s26, 0
      %p180 = por %p178, %p179
      %p181 = scmp.ne.s32.totalorder %s173, %s175
      %p182 = scmp.eq.s32.totalorder %s31, 3
      %p183 = por %p181, %p182
      %p184 = scmp.ne.s32.totalorder %s175, %s176
      %p185 = scmp.eq.s32.totalorder %s31, 0
      %p186 = por %p184, %p185
      %p187 = scmp.ne.s32.totalorder %s175, %s176
      %p188 = scmp.eq.s32.totalorder %s32, 3
      %p189 = por %p187, %p188
      %p191 = scmp.ne.s32.totalorder %s176, %s190
      %p192 = scmp.eq.s32.totalorder %s32, 0
      %p193 = por %p191, %p192
      %s195 = sadd.s32 %s194, 1
      %p198 = scmp.eq.s32.totalorder %s26, 3
      %p199 = scmp.ne.s32.totalorder %s194, %s196
      %p200 = scmp.eq.s32.totalorder %s26, 0
      %p201 = por %p199, %p200
      %p202 = scmp.ne.s32.totalorder %s194, %s196
      %p203 = scmp.eq.s32.totalorder %s31, 3
      %p204 = por %p202, %p203
      %p205 = scmp.ne.s32.totalorder %s196, %s197
      %p206 = scmp.eq.s32.totalorder %s31, 0
      %p207 = por %p205, %p206
      %p208 = scmp.ne.s32.totalorder %s196, %s197
      %p209 = scmp.eq.s32.totalorder %s32, 3
      %p210 = por %p208, %p209
      %p212 = scmp.ne.s32.totalorder %s197, %s211
      %p213 = scmp.eq.s32.totalorder %s32, 0
      %p214 = por %p212, %p213
      %s216 = sadd.s32 %s215, 1
      %p219 = scmp.eq.s32.totalorder %s26, 3
      %p220 = scmp.ne.s32.totalorder %s215, %s217
      %p221 = scmp.eq.s32.totalorder %s26, 0
      %p222 = por %p220, %p221
      %p223 = scmp.ne.s32.totalorder %s215, %s217
      %p224 = scmp.eq.s32.totalorder %s31, 3
      %p225 = por %p223, %p224
      %p226 = scmp.ne.s32.totalorder %s217, %s218
      %p227 = scmp.eq.s32.totalorder %s31, 0
      %p228 = por %p226, %p227
      %p229 = scmp.ne.s32.totalorder %s217, %s218
      %p230 = scmp.eq.s32.totalorder %s32, 3
      %p231 = por %p229, %p230
      %p233 = scmp.ne.s32.totalorder %s218, %s232
      %p234 = scmp.eq.s32.totalorder %s32, 0
      %p235 = por %p233, %p234
      %s237 = sadd.s32 %s236, 1
      %p240 = scmp.eq.s32.totalorder %s26, 3
      %p241 = scmp.ne.s32.totalorder %s236, %s238
      %p242 = scmp.eq.s32.totalorder %s26, 0
      %p243 = por %p241, %p242
      %p244 = scmp.ne.s32.totalorder %s236, %s238
      %p245 = scmp.eq.s32.totalorder %s31, 3
      %p246 = por %p244, %p245
      %p247 = scmp.ne.s32.totalorder %s238, %s239
      %p248 = scmp.eq.s32.totalorder %s31, 0
      %p249 = por %p247, %p248
      %p250 = scmp.ne.s32.totalorder %s238, %s239
      %p251 = scmp.eq.s32.totalorder %s32, 3
      %p252 = por %p250, %p251
      %p254 = scmp.ne.s32.totalorder %s239, %s253
      %p255 = scmp.eq.s32.totalorder %s32, 0
      %p256 = por %p254, %p255
      %s258 = sadd.s32 %s257, 1
      %p261 = scmp.eq.s32.totalorder %s26, 3
      %p262 = scmp.ne.s32.totalorder %s257, %s259
      %p263 = scmp.eq.s32.totalorder %s26, 0
      %p264 = por %p262, %p263
      %p265 = scmp.ne.s32.totalorder %s257, %s259
      %p266 = scmp.eq.s32.totalorder %s31, 3
      %p267 = por %p265, %p266
      %p268 = scmp.ne.s32.totalorder %s259, %s260
      %p269 = scmp.eq.s32.totalorder %s31, 0
      %p270 = por %p268, %p269
      %p271 = scmp.ne.s32.totalorder %s259, %s260
      %p272 = scmp.eq.s32.totalorder %s32, 3
      %p273 = por %p271, %p272
      %p275 = scmp.ne.s32.totalorder %s260, %s274
      %p276 = scmp.eq.s32.totalorder %s32, 0
      %p277 = por %p275, %p276
      %s278 = ssub.s32 %s33, %s45
      %s279 = ssub.s32 %s34, %s41
      %s280 = sor.u32 %s278, %s279
      %p281 = scmp.eq.s32.totalorder %s280, 0
      %s283 = sadd.s32 %s282, 1
      %s284 = scalar_select %p281, %s282, %s283
      %p287 = pneg %p281
      %p288 = scmp.eq.s32.totalorder %s26, 3
      %p289 = por %p287, %p288
      %p290 = scmp.ne.s32.totalorder %s282, %s285
      %p291 = scmp.eq.s32.totalorder %s26, 0
      %p292 = por %p290, %p291
      %p293 = scmp.ne.s32.totalorder %s282, %s285
      %p294 = scmp.eq.s32.totalorder %s31, 3
      %p295 = por %p293, %p294
      %p296 = scmp.ne.s32.totalorder %s285, %s286
      %p297 = scmp.eq.s32.totalorder %s31, 0
      %p298 = por %p296, %p297
      %p299 = scmp.ne.s32.totalorder %s285, %s286
      %p300 = scmp.eq.s32.totalorder %s32, 3
      %p301 = por %p299, %p300
      %p303 = scmp.ne.s32.totalorder %s286, %s302
      %p304 = scmp.eq.s32.totalorder %s32, 0
      %p305 = por %p303, %p304
      %p306 = scmp.le.s32.totalorder 1, %s26
      %p307 = scmp.lt.s32.totalorder %s26, 5
      %p308 = pnand %p306, %p307
      %p309 = pneg %p308
      // Predicated region
      $region9: #{tpu_custom_call.1} parent=5 // pred_check
        _
      $region10: #{tpu_custom_call.1} parent=5 // pred_check_branch
        %311 = sbr.rel (%p308) target = $region12
      $region11: #{tpu_custom_call.1} parent=5 // pred_region
        %s312 = ssub.s32 %s26, 1
        // Predicated region
        $region13: #{tpu_custom_call.1} parent=11 // pred_check
          %p313 = pneg %p123
        $region14: #{tpu_custom_call.1} parent=11 // pred_check_branch
          %315 = sbr.rel (%p313) target = $region16
        $region15: #{tpu_custom_call.1} parent=11 // pred_region
          %s317 = ssub.s32 2048, 2048
          %318 = vsyncadd [#allocation8], %s317
          %s319 = sshll.u32 [#allocation9], 4
          %s320 = int_to_ptr.vmem [resolvable:$true] %s319
          %325 = dma.hbm_to_vmem [thread:$0]  %s2, 2048, %s320, [#allocation8], 128, 128, 8
        $region16: #{tpu_custom_call.1} parent=11 // pred_fallthru
          _
        // Predicated region
        $region17: #{tpu_custom_call.1} parent=11 // pred_check
          %p326 = pneg %p144
        $region18: #{tpu_custom_call.1} parent=11 // pred_check_branch
          %328 = sbr.rel (%p326) target = $region20
        $region19: #{tpu_custom_call.1} parent=11 // pred_region
          _
        $region20: #{tpu_custom_call.1} parent=11 // pred_fallthru
          _
        // Predicated region
        $region21: #{tpu_custom_call.1} parent=11 // pred_check
          %p329 = pneg %p165
        $region22: #{tpu_custom_call.1} parent=11 // pred_check_branch
          %331 = sbr.rel (%p329) target = $region24
        $region23: #{tpu_custom_call.1} parent=11 // pred_region
          _
        $region24: #{tpu_custom_call.1} parent=11 // pred_fallthru
          _
        // Predicated region
        $region25: #{tpu_custom_call.1} parent=11 // pred_check
          %p332 = pneg %p186
        $region26: #{tpu_custom_call.1} parent=11 // pred_check_branch
          %334 = sbr.rel (%p332) target = $region28
        $region27: #{tpu_custom_call.1} parent=11 // pred_region
          %s336 = ssub.s32 2048, 2048
          %337 = vsyncadd [#allocation11], %s336
          %s338 = sshll.u32 [#allocation10], 4
          %s339 = int_to_ptr.vmem [resolvable:$true] %s338
          %344 = dma.hbm_to_vmem [thread:$0]  %s5, 2048, %s339, [#allocation11], 128, 128, 8
        $region28: #{tpu_custom_call.1} parent=11 // pred_fallthru
          _
        // Predicated region
        $region29: #{tpu_custom_call.1} parent=11 // pred_check
          %p345 = pneg %p207
        $region30: #{tpu_custom_call.1} parent=11 // pred_check_branch
          %347 = sbr.rel (%p345) target = $region32
        $region31: #{tpu_custom_call.1} parent=11 // pred_region
          _
        $region32: #{tpu_custom_call.1} parent=11 // pred_fallthru
          _
        // Predicated region
        $region33: #{tpu_custom_call.1} parent=11 // pred_check
          %p348 = pneg %p228
        $region34: #{tpu_custom_call.1} parent=11 // pred_check_branch
          %350 = sbr.rel (%p348) target = $region36
        $region35: #{tpu_custom_call.1} parent=11 // pred_region
          _
        $region36: #{tpu_custom_call.1} parent=11 // pred_fallthru
          _
        // Predicated region
        $region37: #{tpu_custom_call.1} parent=11 // pred_check
          %p351 = pneg %p249
        $region38: #{tpu_custom_call.1} parent=11 // pred_check_branch
          %353 = sbr.rel (%p351) target = $region40
        $region39: #{tpu_custom_call.1} parent=11 // pred_region
          %s355 = ssub.s32 1024, 1024
          %356 = vsyncadd [#allocation11], %s355
          %s357 = sshll.u32 [#allocation12], 4
          %s358 = int_to_ptr.vmem [resolvable:$true] %s357
          %363 = dma.hbm_to_vmem [thread:$0]  %s8, 1024, %s358, [#allocation11], 64, 64, 4
        $region40: #{tpu_custom_call.1} parent=11 // pred_fallthru
          _
        // Predicated region
        $region41: #{tpu_custom_call.1} parent=11 // pred_check
          %p364 = pneg %p270
        $region42: #{tpu_custom_call.1} parent=11 // pred_check_branch
          %366 = sbr.rel (%p364) target = $region44
        $region43: #{tpu_custom_call.1} parent=11 // pred_region
          _
        $region44: #{tpu_custom_call.1} parent=11 // pred_fallthru
          _
      $region12: #{tpu_custom_call.1} parent=5 // pred_fallthru
        _
      %p367 = scmp.lt.s32.totalorder %s26, 4
      // Predicated region
      $region45: #{tpu_custom_call.1} parent=5 // pred_check
        %p368 = pneg %p367
      $region46: #{tpu_custom_call.1} parent=5 // pred_check_branch
        %370 = sbr.rel (%p368) target = $region48
      $region47: #{tpu_custom_call.1} parent=5 // pred_region
        // Predicated region
        $region49: #{tpu_custom_call.1} parent=47 // pred_check
          %p371 = pneg %p60
        $region50: #{tpu_custom_call.1} parent=47 // pred_check_branch
          %373 = sbr.rel (%p371) target = $region52
        $region51: #{tpu_custom_call.1} parent=47 // pred_region
          %s374 = sand.u32 %s50, 1
          %s375 = scalar_lea.sflag [#allocation5], %s374
          %s376 = sand.u32 %s50, 1
          %s377 = smul.addr %s376, 8
          %s378 = scalar_lea.vmem [#allocation4], %s377
          %s379 = smul.u32 2, %s34
          %s381 = ssub.s32 128, 128
          %382 = vsyncadd %s375, %s381
          %s383 = smul.addr %s33, 4
          %s384 = sadd.s32 %s379, %s383
          %s385 = smul.addr %s384, 64
          %s386 = scalar_lea.hbm %s0, %s385
          %s387 = sshll.u32 %s378, 4
          %s388 = int_to_ptr.vmem [resolvable:$true] %s387
          %393 = dma.hbm_to_vmem [thread:$0]  %s386, 128, %s388, %s375, 64, 64, 4
        $region52: #{tpu_custom_call.1} parent=47 // pred_fallthru
          _
        // Predicated region
        $region53: #{tpu_custom_call.1} parent=47 // pred_check
          %p394 = pneg %p96
        $region54: #{tpu_custom_call.1} parent=47 // pred_check_branch
          %396 = sbr.rel (%p394) target = $region56
        $region55: #{tpu_custom_call.1} parent=47 // pred_region
          %s397 = sand.u32 %s26, 1
          %s398 = scalar_lea.sflag [#allocation8], %s397
          %s399 = sand.u32 %s86, 1
          %s400 = smul.addr %s399, 4
          %s401 = scalar_lea.vmem [#allocation7], %s400
          %s402 = sadd.s32 %s34, 1
          %s403 = smul.u32 %s402, 2
          %p404 = scmp.lt.s32.totalorder %s403, 3
          %s405 = scalar_select %p404, %s403, 3
          %s407 = ssub.s32 64, 64
          %408 = vsyncadd %s398, %s407
          %s409 = smul.addr %s33, 4
          %s410 = sadd.s32 %s405, %s409
          %s411 = smul.addr %s410, 64
          %s412 = scalar_lea.hbm %s1, %s411
          %s414 = sshll.u32 %s401, 4
          %s415 = int_to_ptr.vmem [resolvable:$true] %s414
          %417 = dma.hbm_to_vmem [thread:$0]  %s412, 64, %s415, %s398
        $region56: #{tpu_custom_call.1} parent=47 // pred_fallthru
          _
      $region48: #{tpu_custom_call.1} parent=5 // pred_fallthru
        _
      %p418 = scmp.le.s32.totalorder 1, %s26
      %p419 = scmp.lt.s32.totalorder %s26, 5
      %p420 = pnand %p418, %p419
      %p421 = pneg %p420
      // Predicated region
      $region57: #{tpu_custom_call.1} parent=5 // pred_check
        _
      $region58: #{tpu_custom_call.1} parent=5 // pred_check_branch
        %423 = sbr.rel (%p420) target = $region60
      $region59: #{tpu_custom_call.1} parent=5 // pred_region
        %s424 = ssub.s32 %s26, 1
        %s425 = sand.u32 %s53, 1
        %s426 = scalar_lea.sflag [#allocation5], %s425
        %s427 = sand.u32 %s53, 1
        %s428 = smul.addr %s427, 8
        %s429 = scalar_lea.vmem [#allocation4], %s428
        // Predicated region
        $region61: #{tpu_custom_call.1} parent=59 // pred_check
          %p430 = pneg %p66
        $region62: #{tpu_custom_call.1} parent=59 // pred_check_branch
          %432 = sbr.rel (%p430) target = $region64
        $region63: #{tpu_custom_call.1} parent=59 // pred_region
          %433 = dma.done %s426, 128
        $region64: #{tpu_custom_call.1} parent=59 // pred_fallthru
          _
        %s434 = sand.u32 %s31, 1
        %s435 = scalar_lea.sflag [#allocation8], %s434
        %s436 = sand.u32 %s89, 1
        %s437 = smul.addr %s436, 4
        %s438 = scalar_lea.vmem [#allocation7], %s437
        // Predicated region
        $region65: #{tpu_custom_call.1} parent=59 // pred_check
          %p439 = pneg %p102
        $region66: #{tpu_custom_call.1} parent=59 // pred_check_branch
          %441 = sbr.rel (%p439) target = $region68
        $region67: #{tpu_custom_call.1} parent=59 // pred_region
          %442 = dma.done %s435, 64
        $region68: #{tpu_custom_call.1} parent=59 // pred_fallthru
          _
        // Predicated region
        $region69: #{tpu_custom_call.1} parent=59 // pred_check
          %p443 = pneg %p123
        $region70: #{tpu_custom_call.1} parent=59 // pred_check_branch
          %445 = sbr.rel (%p443) target = $region72
        $region71: #{tpu_custom_call.1} parent=59 // pred_region
          %446 = dma.done [#allocation8], 2048
        $region72: #{tpu_custom_call.1} parent=59 // pred_fallthru
          _
        // Predicated region
        $region73: #{tpu_custom_call.1} parent=59 // pred_check
          %p447 = pneg %p186
        $region74: #{tpu_custom_call.1} parent=59 // pred_check_branch
          %449 = sbr.rel (%p447) target = $region76
        $region75: #{tpu_custom_call.1} parent=59 // pred_region
          %450 = dma.done [#allocation11], 2048
        $region76: #{tpu_custom_call.1} parent=59 // pred_fallthru
          _
        // Predicated region
        $region77: #{tpu_custom_call.1} parent=59 // pred_check
          %p451 = pneg %p249
        $region78: #{tpu_custom_call.1} parent=59 // pred_check_branch
          %453 = sbr.rel (%p451) target = $region80
        $region79: #{tpu_custom_call.1} parent=59 // pred_region
          %454 = dma.done [#allocation11], 1024
        $region80: #{tpu_custom_call.1} parent=59 // pred_fallthru
          _
        %s455 = sand.u32 %s53, 1
        %s456 = scalar_lea.sflag [#allocation5], %s455
        %s457 = sand.u32 %s53, 1
        %s458 = smul.addr %s457, 8
        %s459 = scalar_lea.vmem [#allocation4], %s458
        %p460 = pneg %p66
        %p461 = pneg %p63
        %s462 = sand.u32 %s31, 1
        %s463 = scalar_lea.sflag [#allocation8], %s462
        %s464 = sand.u32 %s89, 1
        %s465 = smul.addr %s464, 4
        %s466 = scalar_lea.vmem [#allocation7], %s465
        %p467 = pneg %p102
        %p468 = pneg %p99
        %p469 = pneg %p123
        %p470 = pneg %p120
        %p471 = pneg %p144
        %p472 = pneg %p141
        %p473 = pneg %p165
        %p474 = pneg %p162
        %p475 = pneg %p186
        %p476 = pneg %p183
        %p477 = pneg %p207
        %p478 = pneg %p204
        %p479 = pneg %p228
        %p480 = pneg %p225
        %p481 = pneg %p249
        %p482 = pneg %p246
        %p483 = pneg %p270
        %p484 = pneg %p267
        %p485 = pneg %p298
        %p486 = pneg %p295
        %s487 = sand.u32 %s285, 1
        %s488 = scalar_lea.sflag [#allocation6], %s487
        %s489 = sand.u32 %s285, 1
        %s490 = smul.addr %s489, 16
        %s491 = scalar_lea.vmem [#allocation13], %s490
        %s492 = smul.u32 2, %s36
        %s493 = sadd.s32 %s36, 1
        %s494 = smul.u32 %s493, 2
        %p495 = scmp.lt.s32.totalorder %s494, 3
        %s496 = scalar_select %p495, %s494, 3
        %s497 = smul.u32 2, %s36
        %p499 = scmp.eq.s32.totalorder %s36, 0
        // Predicated region
        $region81: #{tpu_custom_call.1} parent=59 // pred_check
          %p500 = pneg %p499
        $region82: #{tpu_custom_call.1} parent=59 // pred_check_branch
          %502 = sbr.rel (%p500) target = $region84
        $region83: #{tpu_custom_call.1} parent=59 // pred_region
          %503 = vst [vmem:[#allocation2] sm:$0xff] 0.0
          %504 = vst [vmem:[#allocation3] sm:$0x1] 0.0
        $region84: #{tpu_custom_call.1} parent=59 // pred_fallthru
          _
        %v505 = vld [vmem:[%s429] sm:$0xf]
        %v506 = vld [vmem:[%s429 + $0x4] sm:$0xf]
        %v507 = vld [vmem:[#allocation9] sm:$0xff]
        %v508 = vld [vmem:[#allocation9 + $0x8] sm:$0xff]
        %v509 = vld [vmem:[#allocation9 + $0x10] sm:$0xff]
        %v510 = vld [vmem:[#allocation9 + $0x18] sm:$0xff]
        %v511 = vld [vmem:[#allocation9 + $0x20] sm:$0xff]
        %v512 = vld [vmem:[#allocation9 + $0x28] sm:$0xff]
        %v513 = vld [vmem:[#allocation9 + $0x30] sm:$0xff]
        %v514 = vld [vmem:[#allocation9 + $0x38] sm:$0xff]
        %v515 = vld [vmem:[#allocation9 + $0x40] sm:$0xff]
        %v516 = vld [vmem:[#allocation9 + $0x48] sm:$0xff]
        %v517 = vld [vmem:[#allocation9 + $0x50] sm:$0xff]
        %v518 = vld [vmem:[#allocation9 + $0x58] sm:$0xff]
        %v519 = vld [vmem:[#allocation9 + $0x60] sm:$0xff]
        %v520 = vld [vmem:[#allocation9 + $0x68] sm:$0xff]
        %v521 = vld [vmem:[#allocation9 + $0x70] sm:$0xff]
        %v522 = vld [vmem:[#allocation9 + $0x78] sm:$0xff]
        %v523 = vld [vmem:[%s3] sm:$0x3]
        %v525 = vlaneseq
        %v526 = vshrl.u32 %v525, 7
        %v527 = vsub.s32 0, %v526
        %v528 = vrot.slane %v523, %v527
        %v529 = vlaneseq
        %v530 = vshrl.u32 %v529, 7
        %v531 = vsub.s32 1, %v530
        %v532 = vrot.slane %v523, %v531
        %v537 = vunpack.c.l.b16 %v505
        %v538 = vunpack.c.l.b16 %v506
        %v539 = vpack.c.b16 %v538, %v537
        %v557 = vunpack.c.l.b16 %v507
        %v558 = vunpack.c.h.b16 %v507
        %v559 = vunpack.c.l.b16 %v508
        %v560 = vunpack.c.h.b16 %v508
        %v561 = vunpack.c.l.b16 %v509
        %v562 = vunpack.c.h.b16 %v509
        %v563 = vunpack.c.l.b16 %v510
        %v564 = vunpack.c.h.b16 %v510
        %v565 = vunpack.c.l.b16 %v511
        %v566 = vunpack.c.h.b16 %v511
        %v567 = vunpack.c.l.b16 %v512
        %v568 = vunpack.c.h.b16 %v512
        %v569 = vunpack.c.l.b16 %v513
        %v570 = vunpack.c.h.b16 %v513
        %v571 = vunpack.c.l.b16 %v514
        %v572 = vunpack.c.h.b16 %v514
        %v573 = vunpack.c.l.b16 %v515
        %v574 = vunpack.c.h.b16 %v515
        %v575 = vunpack.c.l.b16 %v516
        %v576 = vunpack.c.h.b16 %v516
        %v577 = vunpack.c.l.b16 %v517
        %v578 = vunpack.c.h.b16 %v517
        %v579 = vunpack.c.l.b16 %v518
        %v580 = vunpack.c.h.b16 %v518
        %v581 = vunpack.c.l.b16 %v519
        %v582 = vunpack.c.h.b16 %v519
        %v583 = vunpack.c.l.b16 %v520
        %v584 = vunpack.c.h.b16 %v520
        %v585 = vunpack.c.l.b16 %v521
        %v586 = vunpack.c.h.b16 %v521
        %v587 = vunpack.c.l.b16 %v522
        %v588 = vunpack.c.h.b16 %v522
        %v589 = vpack.c.b16 %v559, %v557
        %v590 = vpack.c.b16 %v560, %v558
        %v591 = vpack.c.b16 %v563, %v561
        %v592 = vpack.c.b16 %v564, %v562
        %v593 = vpack.c.b16 %v567, %v565
        %v594 = vpack.c.b16 %v568, %v566
        %v595 = vpack.c.b16 %v571, %v569
        %v596 = vpack.c.b16 %v572, %v570
        %v597 = vpack.c.b16 %v575, %v573
        %v598 = vpack.c.b16 %v576, %v574
        %v599 = vpack.c.b16 %v579, %v577
        %v600 = vpack.c.b16 %v580, %v578
        %v601 = vpack.c.b16 %v583, %v581
        %v602 = vpack.c.b16 %v584, %v582
        %v603 = vpack.c.b16 %v587, %v585
        %v604 = vpack.c.b16 %v588, %v586
        %621 = vmatprep.subr.bf16.mxu0 %v604
        %622 = vmatpush1.bf16.msra.mxu0 %v603
        %623 = vmatprep.subr.bf16.mxu0 %v602
        %624 = vmatpush1.bf16.msra.mxu0 %v601
        %625 = vmatprep.subr.bf16.mxu0 %v600
        %626 = vmatpush1.bf16.msra.mxu0 %v599
        %627 = vmatprep.subr.bf16.mxu0 %v598
        %628 = vmatpush1.bf16.msra.mxu0 %v597
        %629 = vmatprep.subr.bf16.mxu0 %v596
        %630 = vmatpush1.bf16.msra.mxu0 %v595
        %631 = vmatprep.subr.bf16.mxu0 %v594
        %632 = vmatpush1.bf16.msra.mxu0 %v593
        %633 = vmatprep.subr.bf16.mxu0 %v592
        %634 = vmatpush1.bf16.msra.mxu0 %v591
        %635 = vmatprep.subr.bf16.mxu0 %v590
        %636 = vmatpush1.bf16.msra.mxu0 %v589
        %637 = vmatprep.subr.bf16.mxu0 0
        %638 = vmatpush2.bf16.msra.mxu0 0
        %639 = vmatprep.subr.bf16.mxu0 0
        %640 = vmatpush2.bf16.msra.mxu0 0
        %641 = vmatprep.subr.bf16.mxu0 0
        %642 = vmatpush2.bf16.msra.mxu0 0
        %643 = vmatprep.subr.bf16.mxu0 0
        %644 = vmatpush2.bf16.msra.mxu0 0
        %645 = vmatprep.subr.bf16.mxu0 0
        %646 = vmatpush2.bf16.msra.mxu0 0
        %647 = vmatprep.subr.bf16.mxu0 0
        %648 = vmatpush2.bf16.msra.mxu0 0
        %649 = vmatprep.subr.bf16.mxu0 0
        %650 = vmatpush2.bf16.msra.mxu0 0
        %651 = vmatprep.subr.bf16.mxu0 0
        %652 = vmatpush2.bf16.msra.mxu0 0
        %653 = vmatprep.mubr.bf16.mxu0 0
        %654 = vmatmul.mubr.bf16.gmra.mxu0 %v539
        %v655 = vpop.f32.mrf.mxu0
        %v656 = vadd.f32 %v528, %v655
        %v657 = vpop.f32.mrf.mxu0
        %v658 = vadd.f32 %v532, %v657
        %v659 = vpop.f32.mrf.mxu0
        %v660 = vadd.f32 %v528, %v659
        %v661 = vpop.f32.mrf.mxu0
        %v662 = vadd.f32 %v532, %v661
        %663 = vdwg.mxu0
        %v664 = vmul.f32 %v656, 0.5
        %v665 = vmul.f32 %v660, 0.5
        %v666 = vmul.f32 %v656, 0.70710677
        %v667 = vmul.f32 %v660, 0.70710677
        %v668 = verf.f32.pop %v666
        %v669 = verf.f32.pop %v667
        %v670 = vadd.f32 %v668, 1.0
        %v671 = vadd.f32 %v669, 1.0
        %v672 = vmul.f32 %v664, %v670
        %v673 = vmul.f32 %v665, %v671
        %v674 = vld [vmem:[%s438] sm:$0x1]
        %675 = vmatprep.subr.bf16.mxu0 %v604
        %676 = vmatpush1.bf16.msra.mxu0 %v603
        %677 = vmatprep.subr.bf16.mxu0 %v602
        %678 = vmatpush1.bf16.msra.mxu0 %v601
        %679 = vmatprep.subr.bf16.mxu0 %v600
        %680 = vmatpush1.bf16.msra.mxu0 %v599
        %681 = vmatprep.subr.bf16.mxu0 %v598
        %682 = vmatpush1.bf16.msra.mxu0 %v597
        %683 = vmatprep.subr.bf16.mxu0 %v596
        %684 = vmatpush1.bf16.msra.mxu0 %v595
        %685 = vmatprep.subr.bf16.mxu0 %v594
        %686 = vmatpush1.bf16.msra.mxu0 %v593
        %687 = vmatprep.subr.bf16.mxu0 %v592
        %688 = vmatpush1.bf16.msra.mxu0 %v591
        %689 = vmatprep.subr.bf16.mxu0 %v590
        %690 = vmatpush1.bf16.msra.mxu0 %v589
        %691 = vmatprep.subr.bf16.mxu0 0
        %692 = vmatpush2.bf16.msra.mxu0 0
        %693 = vmatprep.subr.bf16.mxu0 0
        %694 = vmatpush2.bf16.msra.mxu0 0
        %695 = vmatprep.subr.bf16.mxu0 0
        %696 = vmatpush2.bf16.msra.mxu0 0
        %697 = vmatprep.subr.bf16.mxu0 0
        %698 = vmatpush2.bf16.msra.mxu0 0
        %699 = vmatprep.subr.bf16.mxu0 0
        %700 = vmatpush2.bf16.msra.mxu0 0
        %701 = vmatprep.subr.bf16.mxu0 0
        %702 = vmatpush2.bf16.msra.mxu0 0
        %703 = vmatprep.subr.bf16.mxu0 0
        %704 = vmatpush2.bf16.msra.mxu0 0
        %705 = vmatprep.subr.bf16.mxu0 0
        %706 = vmatpush2.bf16.msra.mxu0 0
        %707 = vmatprep.mubr.bf16.mxu0 0
        %708 = vmatmul.mubr.bf16.gmra.mxu0 %v674
        %v709 = vpop.f32.mrf.mxu0
        %v710 = vpop.f32.mrf.mxu0
        %v711 = vadd.f32 %v532, %v710
        %v712 = vpop.f32.mrf.mxu0
        %v713 = vpop.f32.mrf.mxu0
        %714 = vdwg.mxu0
        %s715 = sadd.s32 %s36, 1
        %p716 = scmp.lt.s32.totalorder %s715, 2
        %s717 = scalar_select %p716, 1, 0
        %s718 = scvt.s32.f32 %s717
        %v719 = vstv %s718
        %v720 = vmul.f32 %v711, %v719
        %v721 = vld [vmem:[#allocation2 + $0x7] sm:$0x1]
        %v722 = vld [vmem:[#allocation2 + $0x6] sm:$0x1]
        %v723 = vld [vmem:[%s4] sm:$0xf]
        %v724 = vlaneseq
        %v725 = vshrl.u32 %v724, 7
        %v726 = vadd.s32 %v725, 8
        %vm727 = vcmp.ge.s32.totalorder %v725, 2
        %vm728 = vcmp.ge.s32.totalorder %v726, 2
        %v729 = vrot.slane %v658, 6
        %v730 = vrot.slane %v662, 6
        %vm731 = vcmp.lt.s32.totalorder %v725, 2
        %v732 = vsel %vm731, %v729, %v730
        %v733 = vsel %vm731, %v730, %v729
        %vm734 = vcmp.eq.s32.totalorder %v725, 0
        %vm735 = vcmp.eq.s32.totalorder %v726, 0
        %v736 = vsel %vm734, 1, 0
        %v737 = vsel %vm735, 1, 0
        %vm738 = vcmp.eq.s32.totalorder %v736, 1
        %vm739 = vcmp.eq.s32.totalorder %v737, 1
        %v740 = vlaneseq
        %v741 = vshrl.u32 %v740, 7
        %v742 = vsub.s32 0, %v741
        %v743 = vrot.slane %v722, %v742
        %v744 = vlaneseq
        %v745 = vshrl.u32 %v744, 7
        %v746 = vsub.s32 0, %v745
        %v747 = vrot.slane %v721, %v746
        %v748 = vsel %vm738, %v743, %v747
        %v749 = vsel %vm739, %v743, %v747
        %v750 = vsel %vm727, 1, 0
        %v751 = vsel %vm728, 1, 0
        %vm752 = vcmp.eq.s32.totalorder %v750, 1
        %vm753 = vcmp.eq.s32.totalorder %v751, 1
        %v754 = vsel %vm752, %v733, %v748
        %v755 = vsel %vm753, %v732, %v749
        %vm756 = vcmp.ge.s32.totalorder %v725, 1
        %vm757 = vcmp.ge.s32.totalorder %v726, 1
        %v758 = vrot.slane %v658, 7
        %v759 = vrot.slane %v662, 7
        %vm760 = vcmp.lt.s32.totalorder %v725, 1
        %v761 = vsel %vm760, %v758, %v759
        %v762 = vsel %vm760, %v759, %v758
        %v763 = vsel %vm756, 1, 0
        %v764 = vsel %vm757, 1, 0
        %vm765 = vcmp.eq.s32.totalorder %v763, 1
        %vm766 = vcmp.eq.s32.totalorder %v764, 1
        %v767 = vsel %vm765, %v762, %v747
        %v768 = vsel %vm766, %v761, %v747
        %vm769 = vcmp.lt.s32.totalorder %v725, 15
        %vm770 = vcmp.lt.s32.totalorder %v726, 15
        %v771 = vrot.slane %v658, 1
        %v772 = vrot.slane %v662, 1
        %vm773 = vcmp.lt.s32.totalorder %v725, 7
        %v774 = vsel %vm773, %v771, %v772
        %v775 = vsel %vm773, %v772, %v771
        %v776 = vsel %vm769, 1, 0
        %v777 = vsel %vm770, 1, 0
        %vm778 = vcmp.eq.s32.totalorder %v776, 1
        %vm779 = vcmp.eq.s32.totalorder %v777, 1
        %v780 = vlaneseq
        %v781 = vshrl.u32 %v780, 7
        %v782 = vsub.s32 0, %v781
        %v783 = vrot.slane %v720, %v782
        %v784 = vsel %vm778, %v774, %v783
        %v785 = vsel %vm779, %v775, %v783
        %v786 = vlaneseq
        %v787 = vshrl.u32 %v786, 7
        %v788 = vsub.s32 0, %v787
        %v789 = vrot.slane %v723, %v788
        %v790 = vmul.f32 %v754, %v789
        %v791 = vmul.f32 %v755, %v789
        %v792 = vlaneseq
        %v793 = vshrl.u32 %v792, 7
        %v794 = vsub.s32 1, %v793
        %v795 = vrot.slane %v723, %v794
        %v796 = vmul.f32 %v767, %v795
        %v797 = vmul.f32 %v768, %v795
        %v798 = vadd.f32 %v790, %v796
        %v799 = vadd.f32 %v791, %v797
        %v800 = vlaneseq
        %v801 = vshrl.u32 %v800, 7
        %v802 = vsub.s32 2, %v801
        %v803 = vrot.slane %v723, %v802
        %v804 = vmul.f32 %v658, %v803
        %v805 = vmul.f32 %v662, %v803
        %v806 = vadd.f32 %v798, %v804
        %v807 = vadd.f32 %v799, %v805
        %v808 = vlaneseq
        %v809 = vshrl.u32 %v808, 7
        %v810 = vsub.s32 3, %v809
        %v811 = vrot.slane %v723, %v810
        %v812 = vmul.f32 %v784, %v811
        %v813 = vmul.f32 %v785, %v811
        %v814 = vadd.f32 %v806, %v812
        %v815 = vadd.f32 %v807, %v813
        %816 = vst [vmem:[#allocation2] sm:$0xff] %v662
        %v817 = vpack.c.bf16 %v815, %v814
        %v818 = vld [vmem:[#allocation10] sm:$0xff]
        %v819 = vld [vmem:[#allocation10 + $0x8] sm:$0xff]
        %v820 = vld [vmem:[#allocation10 + $0x10] sm:$0xff]
        %v821 = vld [vmem:[#allocation10 + $0x18] sm:$0xff]
        %v822 = vld [vmem:[#allocation10 + $0x20] sm:$0xff]
        %v823 = vld [vmem:[#allocation10 + $0x28] sm:$0xff]
        %v824 = vld [vmem:[#allocation10 + $0x30] sm:$0xff]
        %v825 = vld [vmem:[#allocation10 + $0x38] sm:$0xff]
        %v826 = vld [vmem:[#allocation10 + $0x40] sm:$0xff]
        %v827 = vld [vmem:[#allocation10 + $0x48] sm:$0xff]
        %v828 = vld [vmem:[#allocation10 + $0x50] sm:$0xff]
        %v829 = vld [vmem:[#allocation10 + $0x58] sm:$0xff]
        %v830 = vld [vmem:[#allocation10 + $0x60] sm:$0xff]
        %v831 = vld [vmem:[#allocation10 + $0x68] sm:$0xff]
        %v832 = vld [vmem:[#allocation10 + $0x70] sm:$0xff]
        %v833 = vld [vmem:[#allocation10 + $0x78] sm:$0xff]
        %v834 = vld [vmem:[%s6] sm:$0x3]
        %v836 = vlaneseq
        %v837 = vshrl.u32 %v836, 7
        %v838 = vsub.s32 0, %v837
        %v839 = vrot.slane %v834, %v838
        %v840 = vlaneseq
        %v841 = vshrl.u32 %v840, 7
        %v842 = vsub.s32 1, %v841
        %v843 = vrot.slane %v834, %v842
        %v862 = vunpack.c.l.b16 %v818
        %v863 = vunpack.c.h.b16 %v818
        %v864 = vunpack.c.l.b16 %v819
        %v865 = vunpack.c.h.b16 %v819
        %v866 = vunpack.c.l.b16 %v820
        %v867 = vunpack.c.h.b16 %v820
        %v868 = vunpack.c.l.b16 %v821
        %v869 = vunpack.c.h.b16 %v821
        %v870 = vunpack.c.l.b16 %v822
        %v871 = vunpack.c.h.b16 %v822
        %v872 = vunpack.c.l.b16 %v823
        %v873 = vunpack.c.h.b16 %v823
        %v874 = vunpack.c.l.b16 %v824
        %v875 = vunpack.c.h.b16 %v824
        %v876 = vunpack.c.l.b16 %v825
        %v877 = vunpack.c.h.b16 %v825
        %v878 = vunpack.c.l.b16 %v826
        %v879 = vunpack.c.h.b16 %v826
        %v880 = vunpack.c.l.b16 %v827
        %v881 = vunpack.c.h.b16 %v827
        %v882 = vunpack.c.l.b16 %v828
        %v883 = vunpack.c.h.b16 %v828
        %v884 = vunpack.c.l.b16 %v829
        %v885 = vunpack.c.h.b16 %v829
        %v886 = vunpack.c.l.b16 %v830
        %v887 = vunpack.c.h.b16 %v830
        %v888 = vunpack.c.l.b16 %v831
        %v889 = vunpack.c.h.b16 %v831
        %v890 = vunpack.c.l.b16 %v832
        %v891 = vunpack.c.h.b16 %v832
        %v892 = vunpack.c.l.b16 %v833
        %v893 = vunpack.c.h.b16 %v833
        %v894 = vpack.c.b16 %v864, %v862
        %v895 = vpack.c.b16 %v865, %v863
        %v896 = vpack.c.b16 %v868, %v866
        %v897 = vpack.c.b16 %v869, %v867
        %v898 = vpack.c.b16 %v872, %v870
        %v899 = vpack.c.b16 %v873, %v871
        %v900 = vpack.c.b16 %v876, %v874
        %v901 = vpack.c.b16 %v877, %v875
        %v902 = vpack.c.b16 %v880, %v878
        %v903 = vpack.c.b16 %v881, %v879
        %v904 = vpack.c.b16 %v884, %v882
        %v905 = vpack.c.b16 %v885, %v883
        %v906 = vpack.c.b16 %v888, %v886
        %v907 = vpack.c.b16 %v889, %v887
        %v908 = vpack.c.b16 %v892, %v890
        %v909 = vpack.c.b16 %v893, %v891
        %926 = vmatprep.subr.bf16.mxu0 %v909
        %927 = vmatpush1.bf16.msra.mxu0 %v908
        %928 = vmatprep.subr.bf16.mxu0 %v907
        %929 = vmatpush1.bf16.msra.mxu0 %v906
        %930 = vmatprep.subr.bf16.mxu0 %v905
        %931 = vmatpush1.bf16.msra.mxu0 %v904
        %932 = vmatprep.subr.bf16.mxu0 %v903
        %933 = vmatpush1.bf16.msra.mxu0 %v902
        %934 = vmatprep.subr.bf16.mxu0 %v901
        %935 = vmatpush1.bf16.msra.mxu0 %v900
        %936 = vmatprep.subr.bf16.mxu0 %v899
        %937 = vmatpush1.bf16.msra.mxu0 %v898
        %938 = vmatprep.subr.bf16.mxu0 %v897
        %939 = vmatpush1.bf16.msra.mxu0 %v896
        %940 = vmatprep.subr.bf16.mxu0 %v895
        %941 = vmatpush1.bf16.msra.mxu0 %v894
        %942 = vmatprep.subr.bf16.mxu0 0
        %943 = vmatpush2.bf16.msra.mxu0 0
        %944 = vmatprep.subr.bf16.mxu0 0
        %945 = vmatpush2.bf16.msra.mxu0 0
        %946 = vmatprep.subr.bf16.mxu0 0
        %947 = vmatpush2.bf16.msra.mxu0 0
        %948 = vmatprep.subr.bf16.mxu0 0
        %949 = vmatpush2.bf16.msra.mxu0 0
        %950 = vmatprep.subr.bf16.mxu0 0
        %951 = vmatpush2.bf16.msra.mxu0 0
        %952 = vmatprep.subr.bf16.mxu0 0
        %953 = vmatpush2.bf16.msra.mxu0 0
        %954 = vmatprep.subr.bf16.mxu0 0
        %955 = vmatpush2.bf16.msra.mxu0 0
        %956 = vmatprep.subr.bf16.mxu0 0
        %957 = vmatpush2.bf16.msra.mxu0 0
        %958 = vmatprep.mubr.bf16.mxu0 0
        %959 = vmatmul.mubr.bf16.gmra.mxu0 %v817
        %v960 = vpop.f32.mrf.mxu0
        %v961 = vadd.f32 %v839, %v960
        %v962 = vpop.f32.mrf.mxu0
        %v963 = vadd.f32 %v843, %v962
        %v964 = vpop.f32.mrf.mxu0
        %v965 = vadd.f32 %v839, %v964
        %v966 = vpop.f32.mrf.mxu0
        %v967 = vadd.f32 %v843, %v966
        %968 = vdwg.mxu0
        %v969 = vxor.u32 %v961, 2147483648
        %v970 = vxor.u32 %v965, 2147483648
        %v971 = vmul.f32 %v969, 1.442695
        %v972 = vpow.pop %v971
        %v973 = vmul.f32 %v970, 1.442695
        %v974 = vpow.pop %v973
        %v975 = vadd.f32 %v972, 1.0
        %v976 = vadd.f32 %v974, 1.0
        %v977 = vrcp.pop %v975
        %v978 = vmul.f32 1.0, %v977
        %v979 = vrcp.pop %v976
        %v980 = vmul.f32 1.0, %v979
        %v981 = vxor.u32 %v963, 2147483648
        %v982 = vxor.u32 %v967, 2147483648
        %v983 = vmul.f32 %v981, 1.442695
        %v984 = vpow.pop %v983
        %v985 = vmul.f32 %v982, 1.442695
        %v986 = vpow.pop %v985
        %v987 = vadd.f32 %v984, 1.0
        %v988 = vadd.f32 %v986, 1.0
        %v989 = vrcp.pop %v987
        %v990 = vmul.f32 1.0, %v989
        %v991 = vrcp.pop %v988
        %v992 = vmul.f32 1.0, %v991
        %v993 = vld [vmem:[%s7] sm:$0x1]
        %v995 = vlaneseq
        %v996 = vshrl.u32 %v995, 7
        %v997 = vsub.s32 0, %v996
        %v998 = vrot.slane %v993, %v997
        %v1000 = vmul.f32 %v998, %v978
        %v1001 = vmul.f32 %v998, %v980
        %v1002 = vmul.f32 %v1000, 1.442695
        %v1003 = vpow.pop %v1002
        %v1004 = vmul.f32 %v1001, 1.442695
        %v1005 = vpow.pop %v1004
        %v1006 = vmul.f32 %v1003, %v1003
        %v1007 = vmul.f32 %v1005, %v1005
        %v1008 = vsub.f32 1.0, %v1006
        %v1009 = vsub.f32 1.0, %v1007
        %v1010 = vrsqrt.pop %v1008
        %v1011 = vmul.f32 %v1008, %v1010
        %vm1012 = vcmp.eq.f32.partialorder %v1008, inf
        %v1013 = vsel %vm1012, %v1008, %v1011
        %vm1014 = vcmp.eq.f32.partialorder %v1008, 0.0
        %v1015 = vand.u32 %v1008, 2147483648
        %v1016 = vsel %vm1014, %v1015, %v1013
        %v1017 = vrsqrt.pop %v1009
        %v1018 = vmul.f32 %v1009, %v1017
        %vm1019 = vcmp.eq.f32.partialorder %v1009, inf
        %v1020 = vsel %vm1019, %v1009, %v1018
        %vm1021 = vcmp.eq.f32.partialorder %v1009, 0.0
        %v1022 = vand.u32 %v1009, 2147483648
        %v1023 = vsel %vm1021, %v1022, %v1020
        %v1024 = vmul.f32 %v990, %v814
        %v1025 = vmul.f32 %v992, %v815
        %v1026 = vmul.f32 %v1016, %v1024
        %v1027 = vmul.f32 %v1023, %v1025
        %v1028 = vrot.slane %v1003, 7
        %v1029 = vrot.slane %v1005, 7
        %v1030 = vsel %vm760, %v1028, %v1029
        %v1031 = vsel %vm760, %v1029, %v1028
        %v1032 = vrot.slane %v1026, 7
        %v1033 = vrot.slane %v1027, 7
        %v1034 = vsel %vm760, %v1032, %v1033
        %v1035 = vsel %vm760, %v1033, %v1032
        %v1036 = vmul.f32 %v1003, %v1035
        %v1037 = vmul.f32 %v1005, %v1034
        %v1038 = vadd.f32 %v1026, %v1036
        %v1039 = vadd.f32 %v1027, %v1037
        %v1040 = vsel %vm765, %v1038, %v1026
        %v1041 = vsel %vm766, %v1039, %v1027
        %v1042 = vmul.f32 %v1003, %v1031
        %v1043 = vmul.f32 %v1005, %v1030
        %v1044 = vsel %vm765, %v1042, %v1003
        %v1045 = vsel %vm766, %v1043, %v1005
        %v1046 = vrot.slane %v1044, 6
        %v1047 = vrot.slane %v1045, 6
        %v1048 = vsel %vm731, %v1046, %v1047
        %v1049 = vsel %vm731, %v1047, %v1046
        %v1050 = vrot.slane %v1040, 6
        %v1051 = vrot.slane %v1041, 6
        %v1052 = vsel %vm731, %v1050, %v1051
        %v1053 = vsel %vm731, %v1051, %v1050
        %v1054 = vmul.f32 %v1044, %v1053
        %v1055 = vmul.f32 %v1045, %v1052
        %v1056 = vadd.f32 %v1040, %v1054
        %v1057 = vadd.f32 %v1041, %v1055
        %v1058 = vsel %vm752, %v1056, %v1040
        %v1059 = vsel %vm753, %v1057, %v1041
        %v1060 = vmul.f32 %v1044, %v1049
        %v1061 = vmul.f32 %v1045, %v1048
        %v1062 = vsel %vm752, %v1060, %v1044
        %v1063 = vsel %vm753, %v1061, %v1045
        %v1064 = vrot.slane %v1062, 4
        %v1065 = vrot.slane %v1063, 4
        %vm1066 = vcmp.lt.s32.totalorder %v725, 4
        %v1067 = vsel %vm1066, %v1064, %v1065
        %v1068 = vsel %vm1066, %v1065, %v1064
        %v1069 = vrot.slane %v1058, 4
        %v1070 = vrot.slane %v1059, 4
        %v1071 = vsel %vm1066, %v1069, %v1070
        %v1072 = vsel %vm1066, %v1070, %v1069
        %vm1073 = vcmp.ge.s32.totalorder %v725, 4
        %vm1074 = vcmp.ge.s32.totalorder %v726, 4
        %v1075 = vmul.f32 %v1062, %v1072
        %v1076 = vmul.f32 %v1063, %v1071
        %v1077 = vadd.f32 %v1058, %v1075
        %v1078 = vadd.f32 %v1059, %v1076
        %v1079 = vsel %vm1073, 1, 0
        %v1080 = vsel %vm1074, 1, 0
        %vm1081 = vcmp.eq.s32.totalorder %v1079, 1
        %vm1082 = vcmp.eq.s32.totalorder %v1080, 1
        %v1083 = vsel %vm1081, %v1077, %v1058
        %v1084 = vsel %vm1082, %v1078, %v1059
        %v1085 = vmul.f32 %v1062, %v1068
        %v1086 = vmul.f32 %v1063, %v1067
        %v1087 = vsel %vm1081, %v1085, %v1062
        %v1088 = vsel %vm1082, %v1086, %v1063
        %vm1089 = vcmp.ge.s32.totalorder %v725, 8
        %vm1090 = vcmp.ge.s32.totalorder %v726, 8
        %v1091 = vmul.f32 %v1087, %v1084
        %v1092 = vmul.f32 %v1088, %v1083
        %v1093 = vadd.f32 %v1083, %v1091
        %v1094 = vadd.f32 %v1084, %v1092
        %v1095 = vsel %vm1089, 1, 0
        %v1096 = vsel %vm1090, 1, 0
        %vm1097 = vcmp.eq.s32.totalorder %v1095, 1
        %vm1098 = vcmp.eq.s32.totalorder %v1096, 1
        %v1099 = vsel %vm1097, %v1093, %v1083
        %v1100 = vsel %vm1098, %v1094, %v1084
        %v1101 = vmul.f32 %v1087, %v1088
        %v1102 = vsel %vm1097, %v1101, %v1087
        %v1103 = vsel %vm1098, %v1101, %v1088
        %v1104 = vld [vmem:[#allocation3] sm:$0x1]
        %v1106 = vlaneseq
        %v1107 = vshrl.u32 %v1106, 7
        %v1108 = vsub.s32 0, %v1107
        %v1109 = vrot.slane %v1104, %v1108
        %v1111 = vmul.f32 %v1102, %v1109
        %v1112 = vmul.f32 %v1103, %v1109
        %v1113 = vadd.f32 %v1099, %v1111
        %v1114 = vadd.f32 %v1100, %v1112
        %1115 = vst [vmem:[#allocation3 - $0x7] sm:$0x80] %v1114
        %v1116 = vmul.f32 %v672, %v1113
        %v1117 = vmul.f32 %v673, %v1114
        %v1118 = vpack.c.bf16 %v1117, %v1116
        %v1119 = vld [vmem:[#allocation12] sm:$0xf]
        %v1120 = vld [vmem:[#allocation12 + $0x4] sm:$0xf]
        %v1121 = vld [vmem:[#allocation12 + $0x8] sm:$0xf]
        %v1122 = vld [vmem:[#allocation12 + $0xc] sm:$0xf]
        %v1123 = vld [vmem:[#allocation12 + $0x10] sm:$0xf]
        %v1124 = vld [vmem:[#allocation12 + $0x14] sm:$0xf]
        %v1125 = vld [vmem:[#allocation12 + $0x18] sm:$0xf]
        %v1126 = vld [vmem:[#allocation12 + $0x1c] sm:$0xf]
        %v1127 = vld [vmem:[#allocation12 + $0x20] sm:$0xf]
        %v1128 = vld [vmem:[#allocation12 + $0x24] sm:$0xf]
        %v1129 = vld [vmem:[#allocation12 + $0x28] sm:$0xf]
        %v1130 = vld [vmem:[#allocation12 + $0x2c] sm:$0xf]
        %v1131 = vld [vmem:[#allocation12 + $0x30] sm:$0xf]
        %v1132 = vld [vmem:[#allocation12 + $0x34] sm:$0xf]
        %v1133 = vld [vmem:[#allocation12 + $0x38] sm:$0xf]
        %v1134 = vld [vmem:[#allocation12 + $0x3c] sm:$0xf]
        %v1135 = vld [vmem:[%s9] sm:$0x1]
        %v1137 = vlaneseq
        %v1138 = vshrl.u32 %v1137, 7
        %v1139 = vsub.s32 0, %v1138
        %v1140 = vrot.slane %v1135, %v1139
        %v1158 = vunpack.c.l.b16 %v1119
        %v1159 = vunpack.c.l.b16 %v1120
        %v1160 = vunpack.c.l.b16 %v1121
        %v1161 = vunpack.c.l.b16 %v1122
        %v1162 = vunpack.c.l.b16 %v1123
        %v1163 = vunpack.c.l.b16 %v1124
        %v1164 = vunpack.c.l.b16 %v1125
        %v1165 = vunpack.c.l.b16 %v1126
        %v1166 = vunpack.c.l.b16 %v1127
        %v1167 = vunpack.c.l.b16 %v1128
        %v1168 = vunpack.c.l.b16 %v1129
        %v1169 = vunpack.c.l.b16 %v1130
        %v1170 = vunpack.c.l.b16 %v1131
        %v1171 = vunpack.c.l.b16 %v1132
        %v1172 = vunpack.c.l.b16 %v1133
        %v1173 = vunpack.c.l.b16 %v1134
        %v1174 = vpack.c.b16 %v1159, %v1158
        %v1175 = vpack.c.b16 %v1161, %v1160
        %v1176 = vpack.c.b16 %v1163, %v1162
        %v1177 = vpack.c.b16 %v1165, %v1164
        %v1178 = vpack.c.b16 %v1167, %v1166
        %v1179 = vpack.c.b16 %v1169, %v1168
        %v1180 = vpack.c.b16 %v1171, %v1170
        %v1181 = vpack.c.b16 %v1173, %v1172
        %1190 = vmatprep.subr.bf16.mxu0 0
        %1191 = vmatpush1.bf16.msra.mxu0 %v1181
        %1192 = vmatprep.subr.bf16.mxu0 0
        %1193 = vmatpush1.bf16.msra.mxu0 %v1180
        %1194 = vmatprep.subr.bf16.mxu0 0
        %1195 = vmatpush1.bf16.msra.mxu0 %v1179
        %1196 = vmatprep.subr.bf16.mxu0 0
        %1197 = vmatpush1.bf16.msra.mxu0 %v1178
        %1198 = vmatprep.subr.bf16.mxu0 0
        %1199 = vmatpush1.bf16.msra.mxu0 %v1177
        %1200 = vmatprep.subr.bf16.mxu0 0
        %1201 = vmatpush1.bf16.msra.mxu0 %v1176
        %1202 = vmatprep.subr.bf16.mxu0 0
        %1203 = vmatpush1.bf16.msra.mxu0 %v1175
        %1204 = vmatprep.subr.bf16.mxu0 0
        %1205 = vmatpush1.bf16.msra.mxu0 %v1174
        %1206 = vmatprep.subr.bf16.mxu0 0
        %1207 = vmatpush2.bf16.msra.mxu0 0
        %1208 = vmatprep.subr.bf16.mxu0 0
        %1209 = vmatpush2.bf16.msra.mxu0 0
        %1210 = vmatprep.subr.bf16.mxu0 0
        %1211 = vmatpush2.bf16.msra.mxu0 0
        %1212 = vmatprep.subr.bf16.mxu0 0
        %1213 = vmatpush2.bf16.msra.mxu0 0
        %1214 = vmatprep.subr.bf16.mxu0 0
        %1215 = vmatpush2.bf16.msra.mxu0 0
        %1216 = vmatprep.subr.bf16.mxu0 0
        %1217 = vmatpush2.bf16.msra.mxu0 0
        %1218 = vmatprep.subr.bf16.mxu0 0
        %1219 = vmatpush2.bf16.msra.mxu0 0
        %1220 = vmatprep.subr.bf16.mxu0 0
        %1221 = vmatpush2.bf16.msra.mxu0 0
        %1222 = vmatprep.mubr.bf16.mxu0 0
        %1223 = vmatmul.mubr.bf16.gmra.mxu0 %v1118
        %v1224 = vpop.f32.mrf.mxu0
        %v1225 = vadd.f32 %v1140, %v1224
        %v1226 = vpop.f32.mrf.mxu0
        %v1227 = vpop.f32.mrf.mxu0
        %v1228 = vadd.f32 %v1140, %v1227
        %v1229 = vpop.f32.mrf.mxu0
        %1230 = vdwg.mxu0
        %1231 = vst [vmem:[%s491] sm:$0xff] %v1225
        %1232 = vst [vmem:[%s491 + $0x8] sm:$0xff] %v1228
        %s1233 = sand.u32 %s285, 1
        %s1234 = scalar_lea.sflag [#allocation6], %s1233
        %s1235 = sand.u32 %s285, 1
        %s1236 = smul.addr %s1235, 16
        %s1237 = scalar_lea.vmem [#allocation13], %s1236
        // Predicated region
        $region85: #{tpu_custom_call.1} parent=59 // pred_check
          %p1238 = pneg %p295
        $region86: #{tpu_custom_call.1} parent=59 // pred_check_branch
          %1240 = sbr.rel (%p1238) target = $region88
        $region87: #{tpu_custom_call.1} parent=59 // pred_region
          %s1241 = smul.u32 2, %s36
          %s1243 = ssub.s32 256, 256
          %1244 = vsyncadd %s1234, %s1243
          %s1245 = smul.addr %s35, 4
          %s1246 = sadd.s32 %s1241, %s1245
          %s1247 = smul.addr %s1246, 128
          %s1248 = scalar_lea.hbm %s10, %s1247
          %s1249 = sshll.u32 %s1237, 4
          %s1250 = int_to_ptr.vmem [resolvable:$true] %s1249
          %1255 = dma.vmem_to_hbm [thread:$0]  %s1250, 256, %s1248, %s1234, 128, 128, 8
        $region88: #{tpu_custom_call.1} parent=59 // pred_fallthru
          _
      $region60: #{tpu_custom_call.1} parent=5 // pred_fallthru
        _
      %p1256 = scmp.le.s32.totalorder 2, %s26
      // Predicated region
      $region89: #{tpu_custom_call.1} parent=5 // pred_check
        %p1257 = pneg %p1256
      $region90: #{tpu_custom_call.1} parent=5 // pred_check_branch
        %1259 = sbr.rel (%p1257) target = $region92
      $region91: #{tpu_custom_call.1} parent=5 // pred_region
        %s1260 = ssub.s32 %s26, 2
        // Predicated region
        $region93: #{tpu_custom_call.1} parent=91 // pred_check
          %p1261 = pneg %p301
        $region94: #{tpu_custom_call.1} parent=91 // pred_check_branch
          %1263 = sbr.rel (%p1261) target = $region96
        $region95: #{tpu_custom_call.1} parent=91 // pred_region
          %s1264 = sand.u32 %s286, 1
          %s1265 = scalar_lea.sflag [#allocation6], %s1264
          %s1266 = sand.u32 %s286, 1
          %s1267 = smul.addr %s1266, 16
          %s1268 = scalar_lea.vmem [#allocation13], %s1267
          %1269 = dma.done %s1265, 256
        $region96: #{tpu_custom_call.1} parent=91 // pred_fallthru
          _
      $region92: #{tpu_custom_call.1} parent=5 // pred_fallthru
        _
    $region6: #{tpu_custom_call.1} parent=1 // loop_footer
      %s30 = sadd.s32 1, %s26
    $region7: #{tpu_custom_call.1} parent=1 // loop_footer_branch
      %25 = sbr.rel target = $region3
    $region8: #{tpu_custom_call.1} parent=1 // loop_exit
      _
    %1270 = vsyncpa [#allocation5], 1
    %s1271 = scalar_lea.sflag [#allocation5], 1
    %1272 = vsyncpa %s1271, 1
    %1273 = vsyncpa [#allocation8], 1
    %s1274 = scalar_lea.sflag [#allocation8], 1
    %1275 = vsyncpa %s1274, 1
    %1276 = vsyncpa [#allocation11], 1
    %1277 = vsyncpa [#allocation6], 1
    %s1278 = scalar_lea.sflag [#allocation6], 1
    %1279 = vsyncpa %s1278, 1

</llo_original>
